<compile_context>
chip_gen: v7x
topology: tpu7x:2x2x1
jax: 0.10.0
libtpu: 0.0.40
codegen_flags: <defaults>
</compile_context>

<pallas_src>
import jax
import jax.numpy as jnp
from jax import lax
from jax.experimental import pallas as pl
from jax.experimental.pallas import tpu as pltpu

EPS = 1e-5
CHUNK = 8          # selective-scan chunk length (sublane aligned); T is padded to a multiple


def _round_up(n, m):
    return ((n + m - 1) // m) * m


def _silu(v):
    # divide moved to the EUP reciprocal slot
    return v * pl.reciprocal(1.0 + jnp.exp(-v), approx=True)


def _softplus(v):
    return jnp.where(v > 20.0, v, jnp.log1p(jnp.exp(v)))


# ---------------------------------------------------------------------------
# Pallas kernels
# ---------------------------------------------------------------------------
def fused_mamba_kernel(hid_in_ref, normw_ref, win_ref, convw_ref, convb_ref,
                       wxp_ref, wdt_ref, bdt_ref, alogt_ref, dpar_ref, wout_ref,
                       out_ref,
                       hid_s, res_s, xpad_s, xc_s, dt_s, z_s, b_s, c_s, y_s, hk_s):
    """All Mamba layers for one batch block of Bb sequences: grid = (B//Bb, layer)."""
    l = pl.program_id(1)
    n_layer = pl.num_programs(1)
    Bb, Tp, D = hid_in_ref.shape
    M = Bb * Tp
    d_conv, d_inner = convw_ref.shape[1], convw_ref.shape[2]
    d_state = alogt_ref.shape[1]
    seg0 = wdt_ref.shape[1]                       # padded dt segment (multiple of 128)
    segbc = (wxp_ref.shape[2] - seg0) // 2        # padded B / C segments (multiple of 128)
    n_chunks = Tp // CHUNK

    # Layer 0: load hidden into resident VMEM state, zero residual + conv pad rows.
    @pl.when(l == 0)
    def _():
        hid_s[...] = hid_in_ref[...].reshape(M, D)
        res_s[...] = jnp.zeros_like(res_s)
        xpad_s[...] = jnp.zeros_like(xpad_s)

    # add-residual + RMSNorm (kept in f32 for stability)
    residual = hid_s[...] + res_s[...]
    res_s[...] = residual
    var = jnp.mean(residual * residual, axis=-1, keepdims=True)
    xn = residual * lax.rsqrt(var + EPS) * normw_ref[0]

    # in_proj : (M, D) @ (D, 2*d_inner)  -- bf16 MXU, f32 accumulate
    xz = jnp.dot(xn.astype(jnp.bfloat16), win_ref[0],
                 preferred_element_type=jnp.float32)
    z_s[...] = xz[:, d_inner:].astype(jnp.bfloat16)          # gate, stored bf16

    # causal depthwise conv1d for all Bb sequences at once (zero-padded scratch)
    xpad_s[:, pl.ds(d_conv - 1, Tp), :] = xz[:, :d_inner].reshape(Bb, Tp, d_inner)
    conv_w = convw_ref[0]                                    # (d_conv, d_inner)
    acc = jnp.zeros((Bb, Tp, d_inner), jnp.float32)
    for k in range(d_conv):                                  # tiny static unroll (d_conv=4)
        acc = acc + xpad_s[:, pl.ds(k, Tp), :] * conv_w[k][None, None, :]
    x_conv = _silu(acc.reshape(M, d_inner) + convb_ref[0])
    xc_s[...] = x_conv

    # x_proj -> (dt_low | B | C); all segments are 128-lane aligned via weight padding
    dbc = jnp.dot(x_conv.astype(jnp.bfloat16), wxp_ref[0],
                  preferred_element_type=jnp.float32)
    b_s[...] = dbc[:, seg0:seg0 + d_state]                   # (M, d_state)
    c_s[...] = dbc[:, seg0 + segbc:seg0 + segbc + d_state]   # (M, d_state)
    dt_s[...] = _softplus(jnp.dot(dbc[:, :seg0].astype(jnp.bfloat16), wdt_ref[0],
                                  preferred_element_type=jnp.float32) + bdt_ref[0])

    # Selective scan, chunked: exp / dB*u / C-contraction hoisted off the serial chain.
    # State stored (d_state, d_inner) so d_inner is lane-dense.
    A = -jnp.exp(alogt_ref[0])                               # (d_state, d_inner)
    h0 = jnp.zeros((d_state, d_inner), jnp.float32)
    for b in range(Bb):                                      # per sequence (state resets)
        def chunk_body(ci, h, _b=b):
            base = pl.multiple_of(_b * Tp + ci * CHUNK, CHUNK)
            dt_c = dt_s[pl.ds(base, CHUNK), :]               # (CHUNK, d_inner)
            du_c = dt_c * xc_s[pl.ds(base, CHUNK), :]        # (CHUNK, d_inner)
            b_c = b_s[pl.ds(base, CHUNK), :]                 # (CHUNK, d_state)
            c_c = c_s[pl.ds(base, CHUNK), :]                 # (CHUNK, d_state)
            dA_c = jnp.exp(dt_c[:, None, :] * A[None, :, :])     # (CHUNK, d_state, d_inner)
            dBu_c = b_c[:, :, None] * du_c[:, None, :]           # (CHUNK, d_state, d_inner)
            for t in range(CHUNK):                           # only this FMA chain is serial
                h = dA_c[t] * h + dBu_c[t]
                hk_s[t] = h
            # y[t, d] = sum_s C[t, s] * h_t[s, d]   (vectorized, once per chunk)
            y_s[pl.ds(base, CHUNK), :] = jnp.sum(c_c[:, :, None] * hk_s[...], axis=1)
            return h
        lax.fori_loop(0, n_chunks, chunk_body, h0)

    # skip term + gate + out_proj (bf16 MXU)
    y = (y_s[...] + xc_s[...] * dpar_ref[0]) * _silu(z_s[...].astype(jnp.float32))
    hid_s[...] = jnp.dot(y.astype(jnp.bfloat16), wout_ref[0],
                         preferred_element_type=jnp.float32)   # (M, D)

    # Only write HBM at the last layer, as a single pre-added bf16 tensor.
    @pl.when(l == n_layer - 1)
    def _():
        out_ref[...] = (hid_s[...] + res_s[...]).reshape(Bb, Tp, D).astype(out_ref.dtype)


def head_kernel(hid_ref, normw_ref, lmw_ref, out_ref):
    """Final RMSNorm -> LM head matmul for one (rows, vocab) tile."""
    x = hid_ref[...].astype(jnp.float32)                     # (TM, D)
    var = jnp.mean(x * x, axis=-1, keepdims=True)
    xn = x * lax.rsqrt(var + EPS) * normw_ref[...]
    out_ref[...] = jnp.dot(xn.astype(jnp.bfloat16), lmw_ref[...],
                           preferred_element_type=jnp.float32)


# ---------------------------------------------------------------------------
# Wrappers (glue)
# ---------------------------------------------------------------------------
def _pick_bb(B, cap=4):
    """Largest divisor of B <= cap, keeping >= 2 batch blocks (megacore) when B > 1."""
    limit = min(cap, max(1, B // 2))
    bb = 1
    for d in range(1, limit + 1):
        if B % d == 0:
            bb = d
    return bb


def mamba_backbone(hidden, st):
    B, Tp, D = hidden.shape
    n_layer, d_conv, d_inner = st['conv_w'].shape
    d_state = st['A_log_t'].shape[1]
    Bb = _pick_bb(B)
    M = Bb * Tp

    def layer_spec(arr):
        nd = arr.ndim
        return pl.BlockSpec((1,) + arr.shape[1:],
                            lambda b, l, _nd=nd: (l,) + (0,) * (_nd - 1))

    operands = (hidden, st['norm_w'], st['w_in'], st['conv_w'], st['conv_b'],
                st['w_xp'], st['w_dt'], st['b_dt'], st['A_log_t'], st['D'],
                st['w_out'])
    return pl.pallas_call(
        fused_mamba_kernel,
        out_shape=jax.ShapeDtypeStruct((B, Tp, D), jnp.bfloat16),
        grid=(B // Bb, n_layer),
        in_specs=[pl.BlockSpec((Bb, Tp, D), lambda b, l: (b, 0, 0))]
                + [layer_spec(a) for a in operands[1:]],
        out_specs=pl.BlockSpec((Bb, Tp, D), lambda b, l: (b, 0, 0)),
        scratch_shapes=[
            pltpu.VMEM((M, D), jnp.float32),                            # hid_s
            pltpu.VMEM((M, D), jnp.float32),                            # res_s
            pltpu.VMEM((Bb, Tp + d_conv - 1, d_inner), jnp.float32),    # xpad_s
            pltpu.VMEM((M, d_inner), jnp.float32),                      # xc_s
            pltpu.VMEM((M, d_inner), jnp.float32),                      # dt_s
            pltpu.VMEM((M, d_inner), jnp.bfloat16),                     # z_s (gate)
            pltpu.VMEM((M, d_state), jnp.float32),                      # b_s
            pltpu.VMEM((M, d_state), jnp.float32),                      # c_s
            pltpu.VMEM((M, d_inner), jnp.float32),                      # y_s
            pltpu.VMEM((CHUNK, d_state, d_inner), jnp.float32),         # hk_s (chunk states)
        ],
        compiler_params=pltpu.CompilerParams(
            dimension_semantics=("parallel", "arbitrary"),
            vmem_limit_bytes=64 * 1024 * 1024),
    )(*operands)


def lm_head(combined, norm_w, lm_w_t):
    """combined: (B, Tp, D) bf16 pre-added hidden+residual."""
    B, Tp, D = combined.shape
    V = lm_w_t.shape[1]
    BT = B * Tp
    TM = 256 if BT >= 256 else _round_up(BT, 8)
    Mpad = _round_up(BT, TM)
    Vpad = _round_up(V, 128)
    TV = next(p for p in (2048, 1024, 512, 256, 128) if Vpad % p == 0)

    hid2 = combined.reshape(BT, D)
    if Mpad != BT:
        hid2 = jnp.pad(hid2, ((0, Mpad - BT), (0, 0)))
    lmw = lm_w_t if Vpad == V else jnp.pad(lm_w_t, ((0, 0), (0, Vpad - V)))

    logits = pl.pallas_call(
        head_kernel,
        out_shape=jax.ShapeDtypeStruct((Mpad, Vpad), jnp.float32),
        grid=(Mpad // TM, Vpad // TV),
        in_specs=[pl.BlockSpec((TM, D), lambda i, j: (i, 0)),
                  pl.BlockSpec((1, D), lambda i, j: (0, 0)),
                  pl.BlockSpec((D, TV), lambda i, j: (0, j))],
        out_specs=pl.BlockSpec((TM, TV), lambda i, j: (i, j)),
        compiler_params=pltpu.CompilerParams(
            dimension_semantics=("parallel", "parallel"),
            vmem_limit_bytes=64 * 1024 * 1024),
    )(hid2, norm_w, lmw)
    return logits[:BT, :V].reshape(B, Tp, V)


def aim_forward(x, c, params):
    """AiM.forward: returns (logits, target)."""
    if x.ndim == 4:
        # TODO(synk): image branch needs the frozen VQ-VAE encoder (encode_to_z).
        raise NotImplementedError("VQ-VAE encode path not implemented")
    code = jnp.squeeze(x, axis=1)                      # (B, L) int32
    cond = c.reshape(-1, 1).astype(jnp.int32)          # encode_to_c -> (B, 1)
    target = code

    tok_emb = jnp.take(params['wte'], code[:, :-1], axis=0)     # (B, L-1, D)
    cond_emb = jnp.take(params['cls_emb'], cond, axis=0)        # (B, 1, D)
    hidden = jnp.concatenate([cond_emb, tok_emb], axis=1).astype(jnp.float32)
    B, T, D = hidden.shape

    # Pad the sequence so the chunked scan / reshapes stay sublane aligned.
    Tp = _round_up(T, CHUNK)
    if Tp != T:
        hidden = jnp.pad(hidden, ((0, 0), (0, Tp - T), (0, 0)))

    combined = mamba_backbone(hidden, params['stacked'])        # (B, Tp, D) bf16
    logits = lm_head(combined, params['norm_f'], params['lm_head_t'])
    logits = logits[:, :T]
    logits = logits[:, cond.shape[1] - 1:]                      # (B, L, V)
    return logits, target


# ---------------------------------------------------------------------------
# Deterministic parameter init (synthetic; no checkpoint loading)
# ---------------------------------------------------------------------------
def init_params(key, vocab_size, num_classes, d_model, n_layer,
                d_state=16, d_conv=4, expand=2):
    d_inner = expand * d_model
    dt_rank = (d_model + 15) // 16
    seg0 = _round_up(dt_rank, 128)            # lane-aligned dt segment
    segbc = _round_up(d_state, 128)           # lane-aligned B / C segments
    keys = jax.random.split(key, 2 + n_layer)

    def nrm(k, shape, scale=0.02):
        return (scale * jax.random.normal(k, shape)).astype(jnp.float32)

    wte = nrm(keys[0], (vocab_size, d_model))
    params = {
        'wte': wte,
        'cls_emb': nrm(keys[1], (num_classes + 1, d_model)),
        'norm_f': jnp.ones((1, d_model), jnp.float32),
        'lm_head_t': wte.T.astype(jnp.bfloat16),       # tied embeddings, (D, V)
    }

    per_layer = []
    for i in range(n_layer):
        lk = jax.random.split(keys[2 + i], 9)
        w_xp_dt = nrm(lk[3], (d_inner, dt_rank))
        w_xp_b = nrm(lk[4], (d_inner, d_state))
        w_xp_c = nrm(lk[5], (d_inner, d_state))
        # x_proj weight with each output segment zero-padded to a 128-lane boundary
        w_xp_pad = jnp.concatenate(
            [jnp.pad(w_xp_dt, ((0, 0), (0, seg0 - dt_rank))),
             jnp.pad(w_xp_b, ((0, 0), (0, segbc - d_state))),
             jnp.pad(w_xp_c, ((0, 0), (0, segbc - d_state)))],
            axis=1).astype(jnp.bfloat16)
        w_dt = nrm(lk[6], (dt_rank, d_inner), 0.1)
        w_dt_pad = jnp.pad(w_dt, ((0, seg0 - dt_rank), (0, 0))).astype(jnp.bfloat16)
        per_layer.append({
            'norm_w': jnp.ones((1, d_model), jnp.float32),
            'w_in': nrm(lk[0], (d_model, 2 * d_inner)).astype(jnp.bfloat16),
            'conv_w': nrm(lk[1], (d_conv, d_inner), 0.2),
            'conv_b': nrm(lk[2], (1, d_inner), 0.1),
            'w_xp': w_xp_pad,
            'w_dt': w_dt_pad,
            'b_dt': nrm(lk[7], (1, d_inner), 0.1),
            # stored already transposed: (d_state, d_inner)
            'A_log_t': jnp.log(jnp.broadcast_to(
                jnp.arange(1, d_state + 1, dtype=jnp.float32)[:, None],
                (d_state, d_inner))),
            'D': jnp.ones((1, d_inner), jnp.float32),
            'w_out': nrm(lk[8], (d_inner, d_model)).astype(jnp.bfloat16),
        })
    # Stack per-layer weights on a leading n_layer axis so the whole backbone is a
    # single pallas_call streaming weights once per batch block across the layer axis.
    params['stacked'] = {k: jnp.stack([p[k] for p in per_layer], axis=0)
                         for k in per_layer[0]}
    return params


if __name__ == "__main__":
    B, L = 4, 18              # batch, num code tokens (num_tokens)
    vocab = 300               # VQ codebook size
    num_classes = 10
    d_model = 32
    n_layer = 2

    key = jax.random.PRNGKey(0)
    k_p, k_x, k_c = jax.random.split(key, 3)
    params = init_params(k_p, vocab, num_classes, d_model, n_layer)

    # Pre-tokenized codes: x shape (B, 1, L) -> forward takes the squeeze(1) branch.
    x = jax.random.randint(k_x, (B, 1, L), 0, vocab, dtype=jnp.int32)
    c = jax.random.randint(k_c, (B, 1), 0, num_classes, dtype=jnp.int32)

    logits, target = jax.jit(aim_forward)(x, c, params)
    jax.block_until_ready(logits)
    jax.block_until_ready(target)

    assert logits.shape == (B, L, vocab), logits.shape
    assert target.shape == (B, L), target.shape
    assert bool(jnp.all(jnp.isfinite(logits)))
    print("KERNEL_OK")
</pallas_src>

<mosaic_0001>
module attributes {stable_mosaic.version = 11 : i64} {
  func.func @head_kernel(%arg0: i32, %arg1: i32, %arg2: memref<96x32xbf16, #tpu.memory_space<vmem>>, %arg3: memref<1x32xf32, #tpu.memory_space<vmem>>, %arg4: memref<32x128xbf16, #tpu.memory_space<vmem>>, %arg5: memref<96x128xf32, #tpu.memory_space<vmem>>) attributes {dimension_semantics = [#tpu.dimension_semantics<parallel>, #tpu.dimension_semantics<parallel>], iteration_bounds = array<i64: 1, 3>, scalar_prefetch = 0 : i64, scratch_operands = 0 : i64, tpu.core_type = #tpu.core_type<tc>, window_params = [{transform_indices = @transform_0, window_bounds = array<i64: 96, 32>}, {pipeline_mode = #tpu.pipeline_mode<synchronous>, transform_indices = @transform_1, window_bounds = array<i64: 1, 32>}, {transform_indices = @transform_2, window_bounds = array<i64: 32, 128>}, {transform_indices = @transform_3, window_bounds = array<i64: 96, 128>}]} {
    %c0 = arith.constant 0 : index
    %c0_0 = arith.constant 0 : index
    %0 = vector.load %arg2[%c0, %c0_0] : memref<96x32xbf16, #tpu.memory_space<vmem>>, vector<96x32xbf16>
    %1 = arith.extf %0 : vector<96x32xbf16> to vector<96x32xf32>
    %2 = arith.mulf %1, %1 : vector<96x32xf32>
    %cst = arith.constant dense<0.000000e+00> : vector<96xf32>
    %3 = vector.multi_reduction <add>, %2, %cst [1] : vector<96x32xf32> to vector<96xf32>
    %4 = vector.shape_cast %3 : vector<96xf32> to vector<96x1xf32>
    %cst_1 = arith.constant 3.200000e+01 : f32
    %5 = vector.broadcast %cst_1 : f32 to vector<96x1xf32>
    %6 = arith.divf %4, %5 : vector<96x1xf32>
    %cst_2 = arith.constant 9.99999974E-6 : f32
    %7 = vector.broadcast %cst_2 : f32 to vector<96x1xf32>
    %8 = arith.addf %6, %7 : vector<96x1xf32>
    %9 = math.rsqrt %8 : vector<96x1xf32>
    %10 = vector.broadcast %9 : vector<96x1xf32> to vector<96x32xf32>
    %11 = arith.mulf %1, %10 : vector<96x32xf32>
    %c0_3 = arith.constant 0 : index
    %c0_4 = arith.constant 0 : index
    %12 = vector.load %arg3[%c0_3, %c0_4] : memref<1x32xf32, #tpu.memory_space<vmem>>, vector<1x32xf32>
    %13 = vector.broadcast %12 : vector<1x32xf32> to vector<96x32xf32>
    %14 = arith.mulf %11, %13 : vector<96x32xf32>
    %15 = arith.truncf %14 : vector<96x32xf32> to vector<96x32xbf16>
    %c0_5 = arith.constant 0 : index
    %c0_6 = arith.constant 0 : index
    %16 = vector.load %arg4[%c0_5, %c0_6] : memref<32x128xbf16, #tpu.memory_space<vmem>>, vector<32x128xbf16>
    %cst_7 = arith.constant dense<0.000000e+00> : vector<96x128xf32>
    %17 = tpu.matmul %15, %16, %cst_7 {dimension_numbers = #tpu.dot_dimension_numbers<[1], [0], [0], [1], [0, 0, 1, 1], [], []>} : vector<96x32xbf16>, vector<32x128xbf16>, vector<96x128xf32> -> vector<96x128xf32>
    %c0_8 = arith.constant 0 : index
    %c0_9 = arith.constant 0 : index
    %18 = vector.load %arg5[%c0_8, %c0_9] : memref<96x128xf32, #tpu.memory_space<vmem>>, vector<96x128xf32>
    tpu.vector_store %arg5[%c0_8, %c0_9], %17 {strides = array<i32>} : memref<96x128xf32, #tpu.memory_space<vmem>>, vector<96x128xf32>,
    return
  }
  func.func @transform_0(%arg0: i32, %arg1: i32) -> (i32, i32) {
    %c0_i32 = arith.constant 0 : i32
    %c0_i32_0 = arith.constant 0 : i32
    return %arg0, %c0_i32 : i32, i32
  }
  func.func @transform_1(%arg0: i32, %arg1: i32) -> (i32, i32) {
    %c0_i32 = arith.constant 0 : i32
    %c0_i32_0 = arith.constant 0 : i32
    %c0_i32_1 = arith.constant 0 : i32
    return %c0_i32, %c0_i32_0 : i32, i32
  }
  func.func @transform_2(%arg0: i32, %arg1: i32) -> (i32, i32) {
    %c0_i32 = arith.constant 0 : i32
    %c0_i32_0 = arith.constant 0 : i32
    return %c0_i32, %arg1 : i32, i32
  }
  func.func @transform_3(%arg0: i32, %arg1: i32) -> (i32, i32) {
    %c0_i32 = arith.constant 0 : i32
    return %arg0, %arg1 : i32, i32
  }
}

module attributes {stable_mosaic.version = 11 : i64} {
  func.func @fused_mamba_kernel(%arg0: i32, %arg1: i32, %arg2: memref<2x24x32xf32, #tpu.memory_space<vmem>>, %arg3: memref<1x1x32xf32, #tpu.memory_space<vmem>>, %arg4: memref<1x32x128xbf16, #tpu.memory_space<vmem>>, %arg5: memref<1x4x64xf32, #tpu.memory_space<vmem>>, %arg6: memref<1x1x64xf32, #tpu.memory_space<vmem>>, %arg7: memref<1x64x384xbf16, #tpu.memory_space<vmem>>, %arg8: memref<1x128x64xbf16, #tpu.memory_space<vmem>>, %arg9: memref<1x1x64xf32, #tpu.memory_space<vmem>>, %arg10: memref<1x16x64xf32, #tpu.memory_space<vmem>>, %arg11: memref<1x1x64xf32, #tpu.memory_space<vmem>>, %arg12: memref<1x64x32xbf16, #tpu.memory_space<vmem>>, %arg13: memref<2x24x32xbf16, #tpu.memory_space<vmem>>, %arg14: memref<48x32xf32, #tpu.memory_space<vmem>>, %arg15: memref<48x32xf32, #tpu.memory_space<vmem>>, %arg16: memref<2x27x64xf32, #tpu.memory_space<vmem>>, %arg17: memref<48x64xf32, #tpu.memory_space<vmem>>, %arg18: memref<48x64xf32, #tpu.memory_space<vmem>>, %arg19: memref<48x64xbf16, #tpu.memory_space<vmem>>, %arg20: memref<48x16xf32, #tpu.memory_space<vmem>>, %arg21: memref<48x16xf32, #tpu.memory_space<vmem>>, %arg22: memref<48x64xf32, #tpu.memory_space<vmem>>, %arg23: memref<8x16x64xf32, #tpu.memory_space<vmem>>) attributes {dimension_semantics = [#tpu.dimension_semantics<parallel>, #tpu.dimension_semantics<arbitrary>], iteration_bounds = array<i64: 2, 2>, scalar_prefetch = 0 : i64, scratch_operands = 10 : i64, tpu.core_type = #tpu.core_type<tc>, window_params = [{transform_indices = @transform_0, window_bounds = array<i64: 2, 24, 32>}, {transform_indices = @transform_1, window_bounds = array<i64: 1, 1, 32>}, {transform_indices = @transform_2, window_bounds = array<i64: 1, 32, 128>}, {transform_indices = @transform_3, window_bounds = array<i64: 1, 4, 64>}, {transform_indices = @transform_4, window_bounds = array<i64: 1, 1, 64>}, {transform_indices = @transform_5, window_bounds = array<i64: 1, 64, 384>}, {transform_indices = @transform_6, window_bounds = array<i64: 1, 128, 64>}, {transform_indices = @transform_7, window_bounds = array<i64: 1, 1, 64>}, {transform_indices = @transform_8, window_bounds = array<i64: 1, 16, 64>}, {transform_indices = @transform_9, window_bounds = array<i64: 1, 1, 64>}, {transform_indices = @transform_10, window_bounds = array<i64: 1, 64, 32>}, {transform_indices = @transform_11, window_bounds = array<i64: 2, 24, 32>}]} {
    %c0_i32 = arith.constant 0 : i32
    %0 = arith.cmpi eq, %arg1, %c0_i32 : i32
    %1 = arith.extui %0 : i1 to i32
    %c0_i32_0 = arith.constant 0 : i32
    %2 = arith.cmpi ne, %1, %c0_i32_0 : i32
    scf.if %2 {
      %c0_88 = arith.constant 0 : index
      %c0_89 = arith.constant 0 : index
      %c0_90 = arith.constant 0 : index
      %133 = vector.load %arg2[%c0_88, %c0_89, %c0_90] : memref<2x24x32xf32, #tpu.memory_space<vmem>>, vector<2x24x32xf32>
      %134 = vector.shape_cast %133 : vector<2x24x32xf32> to vector<48x32xf32>
      %c0_91 = arith.constant 0 : index
      %c0_92 = arith.constant 0 : index
      %135 = vector.load %arg14[%c0_91, %c0_92] : memref<48x32xf32, #tpu.memory_space<vmem>>, vector<48x32xf32>
      tpu.vector_store %arg14[%c0_91, %c0_92], %134 {strides = array<i32>} : memref<48x32xf32, #tpu.memory_space<vmem>>, vector<48x32xf32>,
      %cst_93 = arith.constant 0.000000e+00 : f32
      %136 = vector.broadcast %cst_93 : f32 to vector<48x32xf32>
      %c0_94 = arith.constant 0 : index
      %c0_95 = arith.constant 0 : index
      %137 = vector.load %arg15[%c0_94, %c0_95] : memref<48x32xf32, #tpu.memory_space<vmem>>, vector<48x32xf32>
      tpu.vector_store %arg15[%c0_94, %c0_95], %136 {strides = array<i32>} : memref<48x32xf32, #tpu.memory_space<vmem>>, vector<48x32xf32>,
      %cst_96 = arith.constant 0.000000e+00 : f32
      %138 = vector.broadcast %cst_96 : f32 to vector<2x27x64xf32>
      %c0_97 = arith.constant 0 : index
      %c0_98 = arith.constant 0 : index
      %c0_99 = arith.constant 0 : index
      %139 = vector.load %arg16[%c0_97, %c0_98, %c0_99] : memref<2x27x64xf32, #tpu.memory_space<vmem>>, vector<2x27x64xf32>
      tpu.vector_store %arg16[%c0_97, %c0_98, %c0_99], %138 {strides = array<i32>} : memref<2x27x64xf32, #tpu.memory_space<vmem>>, vector<2x27x64xf32>,
    } else {
    }
    %c0 = arith.constant 0 : index
    %c0_1 = arith.constant 0 : index
    %3 = vector.load %arg14[%c0, %c0_1] : memref<48x32xf32, #tpu.memory_space<vmem>>, vector<48x32xf32>
    %c0_2 = arith.constant 0 : index
    %c0_3 = arith.constant 0 : index
    %4 = vector.load %arg15[%c0_2, %c0_3] : memref<48x32xf32, #tpu.memory_space<vmem>>, vector<48x32xf32>
    %5 = arith.addf %3, %4 : vector<48x32xf32>
    %c0_4 = arith.constant 0 : index
    %c0_5 = arith.constant 0 : index
    %6 = vector.load %arg15[%c0_4, %c0_5] : memref<48x32xf32, #tpu.memory_space<vmem>>, vector<48x32xf32>
    tpu.vector_store %arg15[%c0_4, %c0_5], %5 {strides = array<i32>} : memref<48x32xf32, #tpu.memory_space<vmem>>, vector<48x32xf32>,
    %7 = arith.mulf %5, %5 : vector<48x32xf32>
    %cst = arith.constant dense<0.000000e+00> : vector<48xf32>
    %8 = vector.multi_reduction <add>, %7, %cst [1] : vector<48x32xf32> to vector<48xf32>
    %9 = vector.shape_cast %8 : vector<48xf32> to vector<48x1xf32>
    %cst_6 = arith.constant 3.200000e+01 : f32
    %10 = vector.broadcast %cst_6 : f32 to vector<48x1xf32>
    %11 = arith.divf %9, %10 : vector<48x1xf32>
    %cst_7 = arith.constant 9.99999974E-6 : f32
    %12 = vector.broadcast %cst_7 : f32 to vector<48x1xf32>
    %13 = arith.addf %11, %12 : vector<48x1xf32>
    %14 = math.rsqrt %13 : vector<48x1xf32>
    %15 = vector.broadcast %14 : vector<48x1xf32> to vector<48x32xf32>
    %16 = arith.mulf %5, %15 : vector<48x32xf32>
    %c0_8 = arith.constant 0 : index
    %c0_9 = arith.constant 0 : index
    %c0_10 = arith.constant 0 : index
    %17 = vector.load %arg3[%c0_8, %c0_9, %c0_10] : memref<1x1x32xf32, #tpu.memory_space<vmem>>, vector<1x1x32xf32>
    %18 = vector.shape_cast %17 : vector<1x1x32xf32> to vector<1x32xf32>
    %19 = vector.broadcast %18 : vector<1x32xf32> to vector<48x32xf32>
    %20 = arith.mulf %16, %19 : vector<48x32xf32>
    %21 = arith.truncf %20 : vector<48x32xf32> to vector<48x32xbf16>
    %c0_11 = arith.constant 0 : index
    %c0_12 = arith.constant 0 : index
    %c0_13 = arith.constant 0 : index
    %22 = vector.load %arg4[%c0_11, %c0_12, %c0_13] : memref<1x32x128xbf16, #tpu.memory_space<vmem>>, vector<1x32x128xbf16>
    %23 = vector.shape_cast %22 : vector<1x32x128xbf16> to vector<32x128xbf16>
    %cst_14 = arith.constant dense<0.000000e+00> : vector<48x128xf32>
    %24 = tpu.matmul %21, %23, %cst_14 {dimension_numbers = #tpu.dot_dimension_numbers<[1], [0], [0], [1], [0, 0, 1, 1], [], []>} : vector<48x32xbf16>, vector<32x128xbf16>, vector<48x128xf32> -> vector<48x128xf32>
    %25 = vector.extract_strided_slice %24 {offsets = [0, 64], sizes = [48, 64], strides = [1, 1]} : vector<48x128xf32> to vector<48x64xf32>
    %26 = arith.truncf %25 : vector<48x64xf32> to vector<48x64xbf16>
    %c0_15 = arith.constant 0 : index
    %c0_16 = arith.constant 0 : index
    %27 = vector.load %arg19[%c0_15, %c0_16] : memref<48x64xbf16, #tpu.memory_space<vmem>>, vector<48x64xbf16>
    tpu.vector_store %arg19[%c0_15, %c0_16], %26 {strides = array<i32>} : memref<48x64xbf16, #tpu.memory_space<vmem>>, vector<48x64xbf16>,
    %28 = vector.extract_strided_slice %24 {offsets = [0, 0], sizes = [48, 64], strides = [1, 1]} : vector<48x128xf32> to vector<48x64xf32>
    %29 = vector.shape_cast %28 : vector<48x64xf32> to vector<2x24x64xf32>
    %c0_17 = arith.constant 0 : index
    %c3 = arith.constant 3 : index
    %c0_18 = arith.constant 0 : index
    %30 = vector.load %arg16[%c0_17, %c3, %c0_18] : memref<2x27x64xf32, #tpu.memory_space<vmem>>, vector<2x24x64xf32>
    tpu.vector_store %arg16[%c0_17, %c3, %c0_18], %29 {strides = array<i32>} : memref<2x27x64xf32, #tpu.memory_space<vmem>>, vector<2x24x64xf32>,
    %c0_19 = arith.constant 0 : index
    %c0_20 = arith.constant 0 : index
    %c0_21 = arith.constant 0 : index
    %31 = vector.load %arg5[%c0_19, %c0_20, %c0_21] : memref<1x4x64xf32, #tpu.memory_space<vmem>>, vector<1x4x64xf32>
    %32 = vector.shape_cast %31 : vector<1x4x64xf32> to vector<4x64xf32>
    %cst_22 = arith.constant 0.000000e+00 : f32
    %33 = vector.broadcast %cst_22 : f32 to vector<2x24x64xf32>
    %c0_23 = arith.constant 0 : index
    %c0_24 = arith.constant 0 : index
    %c0_25 = arith.constant 0 : index
    %34 = vector.load %arg16[%c0_23, %c0_24, %c0_25] : memref<2x27x64xf32, #tpu.memory_space<vmem>>, vector<2x24x64xf32>
    %35 = vector.extract_strided_slice %32 {offsets = [0, 0], sizes = [1, 64], strides = [1, 1]} : vector<4x64xf32> to vector<1x64xf32>
    %36 = vector.shape_cast %35 : vector<1x64xf32> to vector<64xf32>
    %37 = vector.shape_cast %36 : vector<64xf32> to vector<1x1x64xf32>
    %38 = vector.broadcast %37 : vector<1x1x64xf32> to vector<2x24x64xf32>
    %39 = arith.mulf %34, %38 : vector<2x24x64xf32>
    %40 = arith.addf %33, %39 : vector<2x24x64xf32>
    %c0_26 = arith.constant 0 : index
    %c1 = arith.constant 1 : index
    %c0_27 = arith.constant 0 : index
    %41 = vector.load %arg16[%c0_26, %c1, %c0_27] : memref<2x27x64xf32, #tpu.memory_space<vmem>>, vector<2x24x64xf32>
    %42 = vector.extract_strided_slice %32 {offsets = [1, 0], sizes = [1, 64], strides = [1, 1]} : vector<4x64xf32> to vector<1x64xf32>
    %43 = vector.shape_cast %42 : vector<1x64xf32> to vector<64xf32>
    %44 = vector.shape_cast %43 : vector<64xf32> to vector<1x1x64xf32>
    %45 = vector.broadcast %44 : vector<1x1x64xf32> to vector<2x24x64xf32>
    %46 = arith.mulf %41, %45 : vector<2x24x64xf32>
    %47 = arith.addf %40, %46 : vector<2x24x64xf32>
    %c0_28 = arith.constant 0 : index
    %c2 = arith.constant 2 : index
    %c0_29 = arith.constant 0 : index
    %48 = vector.load %arg16[%c0_28, %c2, %c0_29] : memref<2x27x64xf32, #tpu.memory_space<vmem>>, vector<2x24x64xf32>
    %49 = vector.extract_strided_slice %32 {offsets = [2, 0], sizes = [1, 64], strides = [1, 1]} : vector<4x64xf32> to vector<1x64xf32>
    %50 = vector.shape_cast %49 : vector<1x64xf32> to vector<64xf32>
    %51 = vector.shape_cast %50 : vector<64xf32> to vector<1x1x64xf32>
    %52 = vector.broadcast %51 : vector<1x1x64xf32> to vector<2x24x64xf32>
    %53 = arith.mulf %48, %52 : vector<2x24x64xf32>
    %54 = arith.addf %47, %53 : vector<2x24x64xf32>
    %c0_30 = arith.constant 0 : index
    %c3_31 = arith.constant 3 : index
    %c0_32 = arith.constant 0 : index
    %55 = vector.load %arg16[%c0_30, %c3_31, %c0_32] : memref<2x27x64xf32, #tpu.memory_space<vmem>>, vector<2x24x64xf32>
    %56 = vector.extract_strided_slice %32 {offsets = [3, 0], sizes = [1, 64], strides = [1, 1]} : vector<4x64xf32> to vector<1x64xf32>
    %57 = vector.shape_cast %56 : vector<1x64xf32> to vector<64xf32>
    %58 = vector.shape_cast %57 : vector<64xf32> to vector<1x1x64xf32>
    %59 = vector.broadcast %58 : vector<1x1x64xf32> to vector<2x24x64xf32>
    %60 = arith.mulf %55, %59 : vector<2x24x64xf32>
    %61 = arith.addf %54, %60 : vector<2x24x64xf32>
    %62 = vector.shape_cast %61 : vector<2x24x64xf32> to vector<48x64xf32>
    %c0_33 = arith.constant 0 : index
    %c0_34 = arith.constant 0 : index
    %c0_35 = arith.constant 0 : index
    %63 = vector.load %arg6[%c0_33, %c0_34, %c0_35] : memref<1x1x64xf32, #tpu.memory_space<vmem>>, vector<1x1x64xf32>
    %64 = vector.shape_cast %63 : vector<1x1x64xf32> to vector<1x64xf32>
    %65 = vector.broadcast %64 : vector<1x64xf32> to vector<48x64xf32>
    %66 = arith.addf %62, %65 : vector<48x64xf32>
    %cst_36 = arith.constant 0.000000e+00 : f32
    %67 = vector.broadcast %cst_36 : f32 to vector<48x64xf32>
    %68 = arith.subf %67, %66 : vector<48x64xf32>
    %69 = math.exp %68 : vector<48x64xf32>
    %cst_37 = arith.constant 1.000000e+00 : f32
    %70 = vector.broadcast %cst_37 : f32 to vector<48x64xf32>
    %71 = arith.addf %70, %69 : vector<48x64xf32>
    %72 = tpu.reciprocal %71 {approx = true} : vector<48x64xf32> -> vector<48x64xf32>
    %73 = arith.mulf %66, %72 : vector<48x64xf32>
    %c0_38 = arith.constant 0 : index
    %c0_39 = arith.constant 0 : index
    %74 = vector.load %arg17[%c0_38, %c0_39] : memref<48x64xf32, #tpu.memory_space<vmem>>, vector<48x64xf32>
    tpu.vector_store %arg17[%c0_38, %c0_39], %73 {strides = array<i32>} : memref<48x64xf32, #tpu.memory_space<vmem>>, vector<48x64xf32>,
    %75 = arith.truncf %73 : vector<48x64xf32> to vector<48x64xbf16>
    %c0_40 = arith.constant 0 : index
    %c0_41 = arith.constant 0 : index
    %c0_42 = arith.constant 0 : index
    %76 = vector.load %arg7[%c0_40, %c0_41, %c0_42] : memref<1x64x384xbf16, #tpu.memory_space<vmem>>, vector<1x64x384xbf16>
    %77 = vector.shape_cast %76 : vector<1x64x384xbf16> to vector<64x384xbf16>
    %cst_43 = arith.constant dense<0.000000e+00> : vector<48x384xf32>
    %78 = tpu.matmul %75, %77, %cst_43 {dimension_numbers = #tpu.dot_dimension_numbers<[1], [0], [0], [1], [0, 0, 1, 1], [], []>} : vector<48x64xbf16>, vector<64x384xbf16>, vector<48x384xf32> -> vector<48x384xf32>
    %79 = vector.extract_strided_slice %78 {offsets = [0, 128], sizes = [48, 16], strides = [1, 1]} : vector<48x384xf32> to vector<48x16xf32>
    %c0_44 = arith.constant 0 : index
    %c0_45 = arith.constant 0 : index
    %80 = vector.load %arg20[%c0_44, %c0_45] : memref<48x16xf32, #tpu.memory_space<vmem>>, vector<48x16xf32>
    tpu.vector_store %arg20[%c0_44, %c0_45], %79 {strides = array<i32>} : memref<48x16xf32, #tpu.memory_space<vmem>>, vector<48x16xf32>,
    %81 = vector.extract_strided_slice %78 {offsets = [0, 256], sizes = [48, 16], strides = [1, 1]} : vector<48x384xf32> to vector<48x16xf32>
    %c0_46 = arith.constant 0 : index
    %c0_47 = arith.constant 0 : index
    %82 = vector.load %arg21[%c0_46, %c0_47] : memref<48x16xf32, #tpu.memory_space<vmem>>, vector<48x16xf32>
    tpu.vector_store %arg21[%c0_46, %c0_47], %81 {strides = array<i32>} : memref<48x16xf32, #tpu.memory_space<vmem>>, vector<48x16xf32>,
    %83 = vector.extract_strided_slice %78 {offsets = [0, 0], sizes = [48, 128], strides = [1, 1]} : vector<48x384xf32> to vector<48x128xf32>
    %84 = arith.truncf %83 : vector<48x128xf32> to vector<48x128xbf16>
    %c0_48 = arith.constant 0 : index
    %c0_49 = arith.constant 0 : index
    %c0_50 = arith.constant 0 : index
    %85 = vector.load %arg8[%c0_48, %c0_49, %c0_50] : memref<1x128x64xbf16, #tpu.memory_space<vmem>>, vector<1x128x64xbf16>
    %86 = vector.shape_cast %85 : vector<1x128x64xbf16> to vector<128x64xbf16>
    %cst_51 = arith.constant dense<0.000000e+00> : vector<48x64xf32>
    %87 = tpu.matmul %84, %86, %cst_51 {dimension_numbers = #tpu.dot_dimension_numbers<[1], [0], [0], [1], [0, 0, 1, 1], [], []>} : vector<48x128xbf16>, vector<128x64xbf16>, vector<48x64xf32> -> vector<48x64xf32>
    %c0_52 = arith.constant 0 : index
    %c0_53 = arith.constant 0 : index
    %c0_54 = arith.constant 0 : index
    %88 = vector.load %arg9[%c0_52, %c0_53, %c0_54] : memref<1x1x64xf32, #tpu.memory_space<vmem>>, vector<1x1x64xf32>
    %89 = vector.shape_cast %88 : vector<1x1x64xf32> to vector<1x64xf32>
    %90 = vector.broadcast %89 : vector<1x64xf32> to vector<48x64xf32>
    %91 = arith.addf %87, %90 : vector<48x64xf32>
    %cst_55 = arith.constant 2.000000e+01 : f32
    %92 = vector.broadcast %cst_55 : f32 to vector<48x64xf32>
    %93 = arith.cmpf ogt, %91, %92 : vector<48x64xf32>
    %94 = math.exp %91 : vector<48x64xf32>
    %95 = math.log1p %94 : vector<48x64xf32>
    %96 = arith.select %93, %91, %95 : vector<48x64xi1>, vector<48x64xf32>
    %c0_56 = arith.constant 0 : index
    %c0_57 = arith.constant 0 : index
    %97 = vector.load %arg18[%c0_56, %c0_57] : memref<48x64xf32, #tpu.memory_space<vmem>>, vector<48x64xf32>
    tpu.vector_store %arg18[%c0_56, %c0_57], %96 {strides = array<i32>} : memref<48x64xf32, #tpu.memory_space<vmem>>, vector<48x64xf32>,
    %c0_58 = arith.constant 0 : index
    %c0_59 = arith.constant 0 : index
    %c0_60 = arith.constant 0 : index
    %98 = vector.load %arg10[%c0_58, %c0_59, %c0_60] : memref<1x16x64xf32, #tpu.memory_space<vmem>>, vector<1x16x64xf32>
    %99 = vector.shape_cast %98 : vector<1x16x64xf32> to vector<16x64xf32>
    %100 = math.exp %99 : vector<16x64xf32>
    %cst_61 = arith.constant 0.000000e+00 : f32
    %101 = vector.broadcast %cst_61 : f32 to vector<16x64xf32>
    %102 = arith.subf %101, %100 : vector<16x64xf32>
    %cst_62 = arith.constant 0.000000e+00 : f32
    %103 = vector.broadcast %cst_62 : f32 to vector<16x64xf32>
    %c0_i32_63 = arith.constant 0 : i32
    %c3_i32 = arith.constant 3 : i32
    %104 = arith.addi %c0_i32_63, %c3_i32 : i32
    %c1_i32 = arith.constant 1 : i32
    %105 = scf.for %arg24 = %c0_i32_63 to %104 step %c1_i32 iter_args(%arg25 = %103) -> (vector<16x64xf32>)  : i32 {
      %c8_i32 = arith.constant 8 : i32
      %133 = arith.muli %arg24, %c8_i32 : i32
      %c0_i32_88 = arith.constant 0 : i32
      %134 = arith.addi %c0_i32_88, %133 : i32
      %135 = tpu.assume_multiple %134, 8 : i32
      %136 = arith.index_cast %135 : i32 to index
      %c0_89 = arith.constant 0 : index
      %137 = vector.load %arg18[%136, %c0_89] : memref<48x64xf32, #tpu.memory_space<vmem>>, vector<8x64xf32>
      %138 = arith.index_cast %135 : i32 to index
      %c0_90 = arith.constant 0 : index
      %139 = vector.load %arg17[%138, %c0_90] : memref<48x64xf32, #tpu.memory_space<vmem>>, vector<8x64xf32>
      %140 = arith.mulf %137, %139 : vector<8x64xf32>
      %141 = arith.index_cast %135 : i32 to index
      %c0_91 = arith.constant 0 : index
      %142 = vector.load %arg20[%141, %c0_91] : memref<48x16xf32, #tpu.memory_space<vmem>>, vector<8x16xf32>
      %143 = arith.index_cast %135 : i32 to index
      %c0_92 = arith.constant 0 : index
      %144 = vector.load %arg21[%143, %c0_92] : memref<48x16xf32, #tpu.memory_space<vmem>>, vector<8x16xf32>
      %145 = vector.shape_cast %137 : vector<8x64xf32> to vector<8x1x64xf32>
      %146 = vector.shape_cast %102 : vector<16x64xf32> to vector<1x16x64xf32>
      %147 = vector.broadcast %145 : vector<8x1x64xf32> to vector<8x16x64xf32>
      %148 = vector.broadcast %146 : vector<1x16x64xf32> to vector<8x16x64xf32>
      %149 = arith.mulf %147, %148 : vector<8x16x64xf32>
      %150 = math.exp %149 : vector<8x16x64xf32>
      %151 = vector.shape_cast %142 : vector<8x16xf32> to vector<8x16x1xf32>
      %152 = vector.shape_cast %140 : vector<8x64xf32> to vector<8x1x64xf32>
      %153 = vector.broadcast %151 : vector<8x16x1xf32> to vector<8x16x64xf32>
      %154 = vector.broadcast %152 : vector<8x1x64xf32> to vector<8x16x64xf32>
      %155 = arith.mulf %153, %154 : vector<8x16x64xf32>
      %156 = vector.extract_strided_slice %150 {offsets = [0, 0, 0], sizes = [1, 16, 64], strides = [1, 1, 1]} : vector<8x16x64xf32> to vector<1x16x64xf32>
      %157 = vector.shape_cast %156 : vector<1x16x64xf32> to vector<16x64xf32>
      %158 = arith.mulf %157, %arg25 : vector<16x64xf32>
      %159 = vector.extract_strided_slice %155 {offsets = [0, 0, 0], sizes = [1, 16, 64], strides = [1, 1, 1]} : vector<8x16x64xf32> to vector<1x16x64xf32>
      %160 = vector.shape_cast %159 : vector<1x16x64xf32> to vector<16x64xf32>
      %161 = arith.addf %158, %160 : vector<16x64xf32>
      %c0_93 = arith.constant 0 : index
      %c0_94 = arith.constant 0 : index
      %c0_95 = arith.constant 0 : index
      %162 = vector.load %arg23[%c0_93, %c0_94, %c0_95] : memref<8x16x64xf32, #tpu.memory_space<vmem>>, vector<1x16x64xf32>
      %163 = vector.shape_cast %162 : vector<1x16x64xf32> to vector<16x64xf32>
      %164 = vector.shape_cast %161 : vector<16x64xf32> to vector<1x16x64xf32>
      tpu.vector_store %arg23[%c0_93, %c0_94, %c0_95], %164 {strides = array<i32>} : memref<8x16x64xf32, #tpu.memory_space<vmem>>, vector<1x16x64xf32>,
      %165 = vector.extract_strided_slice %150 {offsets = [1, 0, 0], sizes = [1, 16, 64], strides = [1, 1, 1]} : vector<8x16x64xf32> to vector<1x16x64xf32>
      %166 = vector.shape_cast %165 : vector<1x16x64xf32> to vector<16x64xf32>
      %167 = arith.mulf %166, %161 : vector<16x64xf32>
      %168 = vector.extract_strided_slice %155 {offsets = [1, 0, 0], sizes = [1, 16, 64], strides = [1, 1, 1]} : vector<8x16x64xf32> to vector<1x16x64xf32>
      %169 = vector.shape_cast %168 : vector<1x16x64xf32> to vector<16x64xf32>
      %170 = arith.addf %167, %169 : vector<16x64xf32>
      %c1_96 = arith.constant 1 : index
      %c0_97 = arith.constant 0 : index
      %c0_98 = arith.constant 0 : index
      %171 = vector.load %arg23[%c1_96, %c0_97, %c0_98] : memref<8x16x64xf32, #tpu.memory_space<vmem>>, vector<1x16x64xf32>
      %172 = vector.shape_cast %171 : vector<1x16x64xf32> to vector<16x64xf32>
      %173 = vector.shape_cast %170 : vector<16x64xf32> to vector<1x16x64xf32>
      tpu.vector_store %arg23[%c1_96, %c0_97, %c0_98], %173 {strides = array<i32>} : memref<8x16x64xf32, #tpu.memory_space<vmem>>, vector<1x16x64xf32>,
      %174 = vector.extract_strided_slice %150 {offsets = [2, 0, 0], sizes = [1, 16, 64], strides = [1, 1, 1]} : vector<8x16x64xf32> to vector<1x16x64xf32>
      %175 = vector.shape_cast %174 : vector<1x16x64xf32> to vector<16x64xf32>
      %176 = arith.mulf %175, %170 : vector<16x64xf32>
      %177 = vector.extract_strided_slice %155 {offsets = [2, 0, 0], sizes = [1, 16, 64], strides = [1, 1, 1]} : vector<8x16x64xf32> to vector<1x16x64xf32>
      %178 = vector.shape_cast %177 : vector<1x16x64xf32> to vector<16x64xf32>
      %179 = arith.addf %176, %178 : vector<16x64xf32>
      %c2_99 = arith.constant 2 : index
      %c0_100 = arith.constant 0 : index
      %c0_101 = arith.constant 0 : index
      %180 = vector.load %arg23[%c2_99, %c0_100, %c0_101] : memref<8x16x64xf32, #tpu.memory_space<vmem>>, vector<1x16x64xf32>
      %181 = vector.shape_cast %180 : vector<1x16x64xf32> to vector<16x64xf32>
      %182 = vector.shape_cast %179 : vector<16x64xf32> to vector<1x16x64xf32>
      tpu.vector_store %arg23[%c2_99, %c0_100, %c0_101], %182 {strides = array<i32>} : memref<8x16x64xf32, #tpu.memory_space<vmem>>, vector<1x16x64xf32>,
      %183 = vector.extract_strided_slice %150 {offsets = [3, 0, 0], sizes = [1, 16, 64], strides = [1, 1, 1]} : vector<8x16x64xf32> to vector<1x16x64xf32>
      %184 = vector.shape_cast %183 : vector<1x16x64xf32> to vector<16x64xf32>
      %185 = arith.mulf %184, %179 : vector<16x64xf32>
      %186 = vector.extract_strided_slice %155 {offsets = [3, 0, 0], sizes = [1, 16, 64], strides = [1, 1, 1]} : vector<8x16x64xf32> to vector<1x16x64xf32>
      %187 = vector.shape_cast %186 : vector<1x16x64xf32> to vector<16x64xf32>
      %188 = arith.addf %185, %187 : vector<16x64xf32>
      %c3_102 = arith.constant 3 : index
      %c0_103 = arith.constant 0 : index
      %c0_104 = arith.constant 0 : index
      %189 = vector.load %arg23[%c3_102, %c0_103, %c0_104] : memref<8x16x64xf32, #tpu.memory_space<vmem>>, vector<1x16x64xf32>
      %190 = vector.shape_cast %189 : vector<1x16x64xf32> to vector<16x64xf32>
      %191 = vector.shape_cast %188 : vector<16x64xf32> to vector<1x16x64xf32>
      tpu.vector_store %arg23[%c3_102, %c0_103, %c0_104], %191 {strides = array<i32>} : memref<8x16x64xf32, #tpu.memory_space<vmem>>, vector<1x16x64xf32>,
      %192 = vector.extract_strided_slice %150 {offsets = [4, 0, 0], sizes = [1, 16, 64], strides = [1, 1, 1]} : vector<8x16x64xf32> to vector<1x16x64xf32>
      %193 = vector.shape_cast %192 : vector<1x16x64xf32> to vector<16x64xf32>
      %194 = arith.mulf %193, %188 : vector<16x64xf32>
      %195 = vector.extract_strided_slice %155 {offsets = [4, 0, 0], sizes = [1, 16, 64], strides = [1, 1, 1]} : vector<8x16x64xf32> to vector<1x16x64xf32>
      %196 = vector.shape_cast %195 : vector<1x16x64xf32> to vector<16x64xf32>
      %197 = arith.addf %194, %196 : vector<16x64xf32>
      %c4 = arith.constant 4 : index
      %c0_105 = arith.constant 0 : index
      %c0_106 = arith.constant 0 : index
      %198 = vector.load %arg23[%c4, %c0_105, %c0_106] : memref<8x16x64xf32, #tpu.memory_space<vmem>>, vector<1x16x64xf32>
      %199 = vector.shape_cast %198 : vector<1x16x64xf32> to vector<16x64xf32>
      %200 = vector.shape_cast %197 : vector<16x64xf32> to vector<1x16x64xf32>
      tpu.vector_store %arg23[%c4, %c0_105, %c0_106], %200 {strides = array<i32>} : memref<8x16x64xf32, #tpu.memory_space<vmem>>, vector<1x16x64xf32>,
      %201 = vector.extract_strided_slice %150 {offsets = [5, 0, 0], sizes = [1, 16, 64], strides = [1, 1, 1]} : vector<8x16x64xf32> to vector<1x16x64xf32>
      %202 = vector.shape_cast %201 : vector<1x16x64xf32> to vector<16x64xf32>
      %203 = arith.mulf %202, %197 : vector<16x64xf32>
      %204 = vector.extract_strided_slice %155 {offsets = [5, 0, 0], sizes = [1, 16, 64], strides = [1, 1, 1]} : vector<8x16x64xf32> to vector<1x16x64xf32>
      %205 = vector.shape_cast %204 : vector<1x16x64xf32> to vector<16x64xf32>
      %206 = arith.addf %203, %205 : vector<16x64xf32>
      %c5 = arith.constant 5 : index
      %c0_107 = arith.constant 0 : index
      %c0_108 = arith.constant 0 : index
      %207 = vector.load %arg23[%c5, %c0_107, %c0_108] : memref<8x16x64xf32, #tpu.memory_space<vmem>>, vector<1x16x64xf32>
      %208 = vector.shape_cast %207 : vector<1x16x64xf32> to vector<16x64xf32>
      %209 = vector.shape_cast %206 : vector<16x64xf32> to vector<1x16x64xf32>
      tpu.vector_store %arg23[%c5, %c0_107, %c0_108], %209 {strides = array<i32>} : memref<8x16x64xf32, #tpu.memory_space<vmem>>, vector<1x16x64xf32>,
      %210 = vector.extract_strided_slice %150 {offsets = [6, 0, 0], sizes = [1, 16, 64], strides = [1, 1, 1]} : vector<8x16x64xf32> to vector<1x16x64xf32>
      %211 = vector.shape_cast %210 : vector<1x16x64xf32> to vector<16x64xf32>
      %212 = arith.mulf %211, %206 : vector<16x64xf32>
      %213 = vector.extract_strided_slice %155 {offsets = [6, 0, 0], sizes = [1, 16, 64], strides = [1, 1, 1]} : vector<8x16x64xf32> to vector<1x16x64xf32>
      %214 = vector.shape_cast %213 : vector<1x16x64xf32> to vector<16x64xf32>
      %215 = arith.addf %212, %214 : vector<16x64xf32>
      %c6 = arith.constant 6 : index
      %c0_109 = arith.constant 0 : index
      %c0_110 = arith.constant 0 : index
      %216 = vector.load %arg23[%c6, %c0_109, %c0_110] : memref<8x16x64xf32, #tpu.memory_space<vmem>>, vector<1x16x64xf32>
      %217 = vector.shape_cast %216 : vector<1x16x64xf32> to vector<16x64xf32>
      %218 = vector.shape_cast %215 : vector<16x64xf32> to vector<1x16x64xf32>
      tpu.vector_store %arg23[%c6, %c0_109, %c0_110], %218 {strides = array<i32>} : memref<8x16x64xf32, #tpu.memory_space<vmem>>, vector<1x16x64xf32>,
      %219 = vector.extract_strided_slice %150 {offsets = [7, 0, 0], sizes = [1, 16, 64], strides = [1, 1, 1]} : vector<8x16x64xf32> to vector<1x16x64xf32>
      %220 = vector.shape_cast %219 : vector<1x16x64xf32> to vector<16x64xf32>
      %221 = arith.mulf %220, %215 : vector<16x64xf32>
      %222 = vector.extract_strided_slice %155 {offsets = [7, 0, 0], sizes = [1, 16, 64], strides = [1, 1, 1]} : vector<8x16x64xf32> to vector<1x16x64xf32>
      %223 = vector.shape_cast %222 : vector<1x16x64xf32> to vector<16x64xf32>
      %224 = arith.addf %221, %223 : vector<16x64xf32>
      %c7 = arith.constant 7 : index
      %c0_111 = arith.constant 0 : index
      %c0_112 = arith.constant 0 : index
      %225 = vector.load %arg23[%c7, %c0_111, %c0_112] : memref<8x16x64xf32, #tpu.memory_space<vmem>>, vector<1x16x64xf32>
      %226 = vector.shape_cast %225 : vector<1x16x64xf32> to vector<16x64xf32>
      %227 = vector.shape_cast %224 : vector<16x64xf32> to vector<1x16x64xf32>
      tpu.vector_store %arg23[%c7, %c0_111, %c0_112], %227 {strides = array<i32>} : memref<8x16x64xf32, #tpu.memory_space<vmem>>, vector<1x16x64xf32>,
      %228 = vector.shape_cast %144 : vector<8x16xf32> to vector<8x16x1xf32>
      %c0_113 = arith.constant 0 : index
      %c0_114 = arith.constant 0 : index
      %c0_115 = arith.constant 0 : index
      %229 = vector.load %arg23[%c0_113, %c0_114, %c0_115] : memref<8x16x64xf32, #tpu.memory_space<vmem>>, vector<8x16x64xf32>
      %230 = vector.broadcast %228 : vector<8x16x1xf32> to vector<8x16x64xf32>
      %231 = arith.mulf %230, %229 : vector<8x16x64xf32>
      %cst_116 = arith.constant dense<0.000000e+00> : vector<8x64xf32>
      %232 = vector.multi_reduction <add>, %231, %cst_116 [1] : vector<8x16x64xf32> to vector<8x64xf32>
      %233 = arith.index_cast %135 : i32 to index
      %c0_117 = arith.constant 0 : index
      %234 = vector.load %arg22[%233, %c0_117] : memref<48x64xf32, #tpu.memory_space<vmem>>, vector<8x64xf32>
      tpu.vector_store %arg22[%233, %c0_117], %232 {strides = array<i32>} : memref<48x64xf32, #tpu.memory_space<vmem>>, vector<8x64xf32>,
      scf.yield %224 : vector<16x64xf32>
    }
    %c3_i32_64 = arith.constant 3 : i32
    %c0_i32_65 = arith.constant 0 : i32
    %c3_i32_66 = arith.constant 3 : i32
    %106 = arith.addi %c0_i32_65, %c3_i32_66 : i32
    %c1_i32_67 = arith.constant 1 : i32
    %107 = scf.for %arg24 = %c0_i32_65 to %106 step %c1_i32_67 iter_args(%arg25 = %103) -> (vector<16x64xf32>)  : i32 {
      %c8_i32 = arith.constant 8 : i32
      %133 = arith.muli %arg24, %c8_i32 : i32
      %c24_i32 = arith.constant 24 : i32
      %134 = arith.addi %c24_i32, %133 : i32
      %135 = tpu.assume_multiple %134, 8 : i32
      %136 = arith.index_cast %135 : i32 to index
      %c0_88 = arith.constant 0 : index
      %137 = vector.load %arg18[%136, %c0_88] : memref<48x64xf32, #tpu.memory_space<vmem>>, vector<8x64xf32>
      %138 = arith.index_cast %135 : i32 to index
      %c0_89 = arith.constant 0 : index
      %139 = vector.load %arg17[%138, %c0_89] : memref<48x64xf32, #tpu.memory_space<vmem>>, vector<8x64xf32>
      %140 = arith.mulf %137, %139 : vector<8x64xf32>
      %141 = arith.index_cast %135 : i32 to index
      %c0_90 = arith.constant 0 : index
      %142 = vector.load %arg20[%141, %c0_90] : memref<48x16xf32, #tpu.memory_space<vmem>>, vector<8x16xf32>
      %143 = arith.index_cast %135 : i32 to index
      %c0_91 = arith.constant 0 : index
      %144 = vector.load %arg21[%143, %c0_91] : memref<48x16xf32, #tpu.memory_space<vmem>>, vector<8x16xf32>
      %145 = vector.shape_cast %137 : vector<8x64xf32> to vector<8x1x64xf32>
      %146 = vector.shape_cast %102 : vector<16x64xf32> to vector<1x16x64xf32>
      %147 = vector.broadcast %145 : vector<8x1x64xf32> to vector<8x16x64xf32>
      %148 = vector.broadcast %146 : vector<1x16x64xf32> to vector<8x16x64xf32>
      %149 = arith.mulf %147, %148 : vector<8x16x64xf32>
      %150 = math.exp %149 : vector<8x16x64xf32>
      %151 = vector.shape_cast %142 : vector<8x16xf32> to vector<8x16x1xf32>
      %152 = vector.shape_cast %140 : vector<8x64xf32> to vector<8x1x64xf32>
      %153 = vector.broadcast %151 : vector<8x16x1xf32> to vector<8x16x64xf32>
      %154 = vector.broadcast %152 : vector<8x1x64xf32> to vector<8x16x64xf32>
      %155 = arith.mulf %153, %154 : vector<8x16x64xf32>
      %156 = vector.extract_strided_slice %150 {offsets = [0, 0, 0], sizes = [1, 16, 64], strides = [1, 1, 1]} : vector<8x16x64xf32> to vector<1x16x64xf32>
      %157 = vector.shape_cast %156 : vector<1x16x64xf32> to vector<16x64xf32>
      %158 = arith.mulf %157, %arg25 : vector<16x64xf32>
      %159 = vector.extract_strided_slice %155 {offsets = [0, 0, 0], sizes = [1, 16, 64], strides = [1, 1, 1]} : vector<8x16x64xf32> to vector<1x16x64xf32>
      %160 = vector.shape_cast %159 : vector<1x16x64xf32> to vector<16x64xf32>
      %161 = arith.addf %158, %160 : vector<16x64xf32>
      %c0_92 = arith.constant 0 : index
      %c0_93 = arith.constant 0 : index
      %c0_94 = arith.constant 0 : index
      %162 = vector.load %arg23[%c0_92, %c0_93, %c0_94] : memref<8x16x64xf32, #tpu.memory_space<vmem>>, vector<1x16x64xf32>
      %163 = vector.shape_cast %162 : vector<1x16x64xf32> to vector<16x64xf32>
      %164 = vector.shape_cast %161 : vector<16x64xf32> to vector<1x16x64xf32>
      tpu.vector_store %arg23[%c0_92, %c0_93, %c0_94], %164 {strides = array<i32>} : memref<8x16x64xf32, #tpu.memory_space<vmem>>, vector<1x16x64xf32>,
      %165 = vector.extract_strided_slice %150 {offsets = [1, 0, 0], sizes = [1, 16, 64], strides = [1, 1, 1]} : vector<8x16x64xf32> to vector<1x16x64xf32>
      %166 = vector.shape_cast %165 : vector<1x16x64xf32> to vector<16x64xf32>
      %167 = arith.mulf %166, %161 : vector<16x64xf32>
      %168 = vector.extract_strided_slice %155 {offsets = [1, 0, 0], sizes = [1, 16, 64], strides = [1, 1, 1]} : vector<8x16x64xf32> to vector<1x16x64xf32>
      %169 = vector.shape_cast %168 : vector<1x16x64xf32> to vector<16x64xf32>
      %170 = arith.addf %167, %169 : vector<16x64xf32>
      %c1_95 = arith.constant 1 : index
      %c0_96 = arith.constant 0 : index
      %c0_97 = arith.constant 0 : index
      %171 = vector.load %arg23[%c1_95, %c0_96, %c0_97] : memref<8x16x64xf32, #tpu.memory_space<vmem>>, vector<1x16x64xf32>
      %172 = vector.shape_cast %171 : vector<1x16x64xf32> to vector<16x64xf32>
      %173 = vector.shape_cast %170 : vector<16x64xf32> to vector<1x16x64xf32>
      tpu.vector_store %arg23[%c1_95, %c0_96, %c0_97], %173 {strides = array<i32>} : memref<8x16x64xf32, #tpu.memory_space<vmem>>, vector<1x16x64xf32>,
      %174 = vector.extract_strided_slice %150 {offsets = [2, 0, 0], sizes = [1, 16, 64], strides = [1, 1, 1]} : vector<8x16x64xf32> to vector<1x16x64xf32>
      %175 = vector.shape_cast %174 : vector<1x16x64xf32> to vector<16x64xf32>
      %176 = arith.mulf %175, %170 : vector<16x64xf32>
      %177 = vector.extract_strided_slice %155 {offsets = [2, 0, 0], sizes = [1, 16, 64], strides = [1, 1, 1]} : vector<8x16x64xf32> to vector<1x16x64xf32>
      %178 = vector.shape_cast %177 : vector<1x16x64xf32> to vector<16x64xf32>
      %179 = arith.addf %176, %178 : vector<16x64xf32>
      %c2_98 = arith.constant 2 : index
      %c0_99 = arith.constant 0 : index
      %c0_100 = arith.constant 0 : index
      %180 = vector.load %arg23[%c2_98, %c0_99, %c0_100] : memref<8x16x64xf32, #tpu.memory_space<vmem>>, vector<1x16x64xf32>
      %181 = vector.shape_cast %180 : vector<1x16x64xf32> to vector<16x64xf32>
      %182 = vector.shape_cast %179 : vector<16x64xf32> to vector<1x16x64xf32>
      tpu.vector_store %arg23[%c2_98, %c0_99, %c0_100], %182 {strides = array<i32>} : memref<8x16x64xf32, #tpu.memory_space<vmem>>, vector<1x16x64xf32>,
      %183 = vector.extract_strided_slice %150 {offsets = [3, 0, 0], sizes = [1, 16, 64], strides = [1, 1, 1]} : vector<8x16x64xf32> to vector<1x16x64xf32>
      %184 = vector.shape_cast %183 : vector<1x16x64xf32> to vector<16x64xf32>
      %185 = arith.mulf %184, %179 : vector<16x64xf32>
      %186 = vector.extract_strided_slice %155 {offsets = [3, 0, 0], sizes = [1, 16, 64], strides = [1, 1, 1]} : vector<8x16x64xf32> to vector<1x16x64xf32>
      %187 = vector.shape_cast %186 : vector<1x16x64xf32> to vector<16x64xf32>
      %188 = arith.addf %185, %187 : vector<16x64xf32>
      %c3_101 = arith.constant 3 : index
      %c0_102 = arith.constant 0 : index
      %c0_103 = arith.constant 0 : index
      %189 = vector.load %arg23[%c3_101, %c0_102, %c0_103] : memref<8x16x64xf32, #tpu.memory_space<vmem>>, vector<1x16x64xf32>
      %190 = vector.shape_cast %189 : vector<1x16x64xf32> to vector<16x64xf32>
      %191 = vector.shape_cast %188 : vector<16x64xf32> to vector<1x16x64xf32>
      tpu.vector_store %arg23[%c3_101, %c0_102, %c0_103], %191 {strides = array<i32>} : memref<8x16x64xf32, #tpu.memory_space<vmem>>, vector<1x16x64xf32>,
      %192 = vector.extract_strided_slice %150 {offsets = [4, 0, 0], sizes = [1, 16, 64], strides = [1, 1, 1]} : vector<8x16x64xf32> to vector<1x16x64xf32>
      %193 = vector.shape_cast %192 : vector<1x16x64xf32> to vector<16x64xf32>
      %194 = arith.mulf %193, %188 : vector<16x64xf32>
      %195 = vector.extract_strided_slice %155 {offsets = [4, 0, 0], sizes = [1, 16, 64], strides = [1, 1, 1]} : vector<8x16x64xf32> to vector<1x16x64xf32>
      %196 = vector.shape_cast %195 : vector<1x16x64xf32> to vector<16x64xf32>
      %197 = arith.addf %194, %196 : vector<16x64xf32>
      %c4 = arith.constant 4 : index
      %c0_104 = arith.constant 0 : index
      %c0_105 = arith.constant 0 : index
      %198 = vector.load %arg23[%c4, %c0_104, %c0_105] : memref<8x16x64xf32, #tpu.memory_space<vmem>>, vector<1x16x64xf32>
      %199 = vector.shape_cast %198 : vector<1x16x64xf32> to vector<16x64xf32>
      %200 = vector.shape_cast %197 : vector<16x64xf32> to vector<1x16x64xf32>
      tpu.vector_store %arg23[%c4, %c0_104, %c0_105], %200 {strides = array<i32>} : memref<8x16x64xf32, #tpu.memory_space<vmem>>, vector<1x16x64xf32>,
      %201 = vector.extract_strided_slice %150 {offsets = [5, 0, 0], sizes = [1, 16, 64], strides = [1, 1, 1]} : vector<8x16x64xf32> to vector<1x16x64xf32>
      %202 = vector.shape_cast %201 : vector<1x16x64xf32> to vector<16x64xf32>
      %203 = arith.mulf %202, %197 : vector<16x64xf32>
      %204 = vector.extract_strided_slice %155 {offsets = [5, 0, 0], sizes = [1, 16, 64], strides = [1, 1, 1]} : vector<8x16x64xf32> to vector<1x16x64xf32>
      %205 = vector.shape_cast %204 : vector<1x16x64xf32> to vector<16x64xf32>
      %206 = arith.addf %203, %205 : vector<16x64xf32>
      %c5 = arith.constant 5 : index
      %c0_106 = arith.constant 0 : index
      %c0_107 = arith.constant 0 : index
      %207 = vector.load %arg23[%c5, %c0_106, %c0_107] : memref<8x16x64xf32, #tpu.memory_space<vmem>>, vector<1x16x64xf32>
      %208 = vector.shape_cast %207 : vector<1x16x64xf32> to vector<16x64xf32>
      %209 = vector.shape_cast %206 : vector<16x64xf32> to vector<1x16x64xf32>
      tpu.vector_store %arg23[%c5, %c0_106, %c0_107], %209 {strides = array<i32>} : memref<8x16x64xf32, #tpu.memory_space<vmem>>, vector<1x16x64xf32>,
      %210 = vector.extract_strided_slice %150 {offsets = [6, 0, 0], sizes = [1, 16, 64], strides = [1, 1, 1]} : vector<8x16x64xf32> to vector<1x16x64xf32>
      %211 = vector.shape_cast %210 : vector<1x16x64xf32> to vector<16x64xf32>
      %212 = arith.mulf %211, %206 : vector<16x64xf32>
      %213 = vector.extract_strided_slice %155 {offsets = [6, 0, 0], sizes = [1, 16, 64], strides = [1, 1, 1]} : vector<8x16x64xf32> to vector<1x16x64xf32>
      %214 = vector.shape_cast %213 : vector<1x16x64xf32> to vector<16x64xf32>
      %215 = arith.addf %212, %214 : vector<16x64xf32>
      %c6 = arith.constant 6 : index
      %c0_108 = arith.constant 0 : index
      %c0_109 = arith.constant 0 : index
      %216 = vector.load %arg23[%c6, %c0_108, %c0_109] : memref<8x16x64xf32, #tpu.memory_space<vmem>>, vector<1x16x64xf32>
      %217 = vector.shape_cast %216 : vector<1x16x64xf32> to vector<16x64xf32>
      %218 = vector.shape_cast %215 : vector<16x64xf32> to vector<1x16x64xf32>
      tpu.vector_store %arg23[%c6, %c0_108, %c0_109], %218 {strides = array<i32>} : memref<8x16x64xf32, #tpu.memory_space<vmem>>, vector<1x16x64xf32>,
      %219 = vector.extract_strided_slice %150 {offsets = [7, 0, 0], sizes = [1, 16, 64], strides = [1, 1, 1]} : vector<8x16x64xf32> to vector<1x16x64xf32>
      %220 = vector.shape_cast %219 : vector<1x16x64xf32> to vector<16x64xf32>
      %221 = arith.mulf %220, %215 : vector<16x64xf32>
      %222 = vector.extract_strided_slice %155 {offsets = [7, 0, 0], sizes = [1, 16, 64], strides = [1, 1, 1]} : vector<8x16x64xf32> to vector<1x16x64xf32>
      %223 = vector.shape_cast %222 : vector<1x16x64xf32> to vector<16x64xf32>
      %224 = arith.addf %221, %223 : vector<16x64xf32>
      %c7 = arith.constant 7 : index
      %c0_110 = arith.constant 0 : index
      %c0_111 = arith.constant 0 : index
      %225 = vector.load %arg23[%c7, %c0_110, %c0_111] : memref<8x16x64xf32, #tpu.memory_space<vmem>>, vector<1x16x64xf32>
      %226 = vector.shape_cast %225 : vector<1x16x64xf32> to vector<16x64xf32>
      %227 = vector.shape_cast %224 : vector<16x64xf32> to vector<1x16x64xf32>
      tpu.vector_store %arg23[%c7, %c0_110, %c0_111], %227 {strides = array<i32>} : memref<8x16x64xf32, #tpu.memory_space<vmem>>, vector<1x16x64xf32>,
      %228 = vector.shape_cast %144 : vector<8x16xf32> to vector<8x16x1xf32>
      %c0_112 = arith.constant 0 : index
      %c0_113 = arith.constant 0 : index
      %c0_114 = arith.constant 0 : index
      %229 = vector.load %arg23[%c0_112, %c0_113, %c0_114] : memref<8x16x64xf32, #tpu.memory_space<vmem>>, vector<8x16x64xf32>
      %230 = vector.broadcast %228 : vector<8x16x1xf32> to vector<8x16x64xf32>
      %231 = arith.mulf %230, %229 : vector<8x16x64xf32>
      %cst_115 = arith.constant dense<0.000000e+00> : vector<8x64xf32>
      %232 = vector.multi_reduction <add>, %231, %cst_115 [1] : vector<8x16x64xf32> to vector<8x64xf32>
      %233 = arith.index_cast %135 : i32 to index
      %c0_116 = arith.constant 0 : index
      %234 = vector.load %arg22[%233, %c0_116] : memref<48x64xf32, #tpu.memory_space<vmem>>, vector<8x64xf32>
      tpu.vector_store %arg22[%233, %c0_116], %232 {strides = array<i32>} : memref<48x64xf32, #tpu.memory_space<vmem>>, vector<8x64xf32>,
      scf.yield %224 : vector<16x64xf32>
    }
    %c3_i32_68 = arith.constant 3 : i32
    %c0_69 = arith.constant 0 : index
    %c0_70 = arith.constant 0 : index
    %108 = vector.load %arg22[%c0_69, %c0_70] : memref<48x64xf32, #tpu.memory_space<vmem>>, vector<48x64xf32>
    %c0_71 = arith.constant 0 : index
    %c0_72 = arith.constant 0 : index
    %109 = vector.load %arg17[%c0_71, %c0_72] : memref<48x64xf32, #tpu.memory_space<vmem>>, vector<48x64xf32>
    %c0_73 = arith.constant 0 : index
    %c0_74 = arith.constant 0 : index
    %c0_75 = arith.constant 0 : index
    %110 = vector.load %arg11[%c0_73, %c0_74, %c0_75] : memref<1x1x64xf32, #tpu.memory_space<vmem>>, vector<1x1x64xf32>
    %111 = vector.shape_cast %110 : vector<1x1x64xf32> to vector<1x64xf32>
    %112 = vector.broadcast %111 : vector<1x64xf32> to vector<48x64xf32>
    %113 = arith.mulf %109, %112 : vector<48x64xf32>
    %114 = arith.addf %108, %113 : vector<48x64xf32>
    %c0_76 = arith.constant 0 : index
    %c0_77 = arith.constant 0 : index
    %115 = vector.load %arg19[%c0_76, %c0_77] : memref<48x64xbf16, #tpu.memory_space<vmem>>, vector<48x64xbf16>
    %116 = arith.extf %115 : vector<48x64xbf16> to vector<48x64xf32>
    %cst_78 = arith.constant 0.000000e+00 : f32
    %117 = vector.broadcast %cst_78 : f32 to vector<48x64xf32>
    %118 = arith.subf %117, %116 : vector<48x64xf32>
    %119 = math.exp %118 : vector<48x64xf32>
    %cst_79 = arith.constant 1.000000e+00 : f32
    %120 = vector.broadcast %cst_79 : f32 to vector<48x64xf32>
    %121 = arith.addf %120, %119 : vector<48x64xf32>
    %122 = tpu.reciprocal %121 {approx = true} : vector<48x64xf32> -> vector<48x64xf32>
    %123 = arith.mulf %116, %122 : vector<48x64xf32>
    %124 = arith.mulf %114, %123 : vector<48x64xf32>
    %125 = arith.truncf %124 : vector<48x64xf32> to vector<48x64xbf16>
    %c0_80 = arith.constant 0 : index
    %c0_81 = arith.constant 0 : index
    %c0_82 = arith.constant 0 : index
    %126 = vector.load %arg12[%c0_80, %c0_81, %c0_82] : memref<1x64x32xbf16, #tpu.memory_space<vmem>>, vector<1x64x32xbf16>
    %127 = vector.shape_cast %126 : vector<1x64x32xbf16> to vector<64x32xbf16>
    %cst_83 = arith.constant dense<0.000000e+00> : vector<48x32xf32>
    %128 = tpu.matmul %125, %127, %cst_83 {dimension_numbers = #tpu.dot_dimension_numbers<[1], [0], [0], [1], [0, 0, 1, 1], [], []>} : vector<48x64xbf16>, vector<64x32xbf16>, vector<48x32xf32> -> vector<48x32xf32>
    %c0_84 = arith.constant 0 : index
    %c0_85 = arith.constant 0 : index
    %129 = vector.load %arg14[%c0_84, %c0_85] : memref<48x32xf32, #tpu.memory_space<vmem>>, vector<48x32xf32>
    tpu.vector_store %arg14[%c0_84, %c0_85], %128 {strides = array<i32>} : memref<48x32xf32, #tpu.memory_space<vmem>>, vector<48x32xf32>,
    %c1_i32_86 = arith.constant 1 : i32
    %130 = arith.cmpi eq, %arg1, %c1_i32_86 : i32
    %131 = arith.extui %130 : i1 to i32
    %c0_i32_87 = arith.constant 0 : i32
    %132 = arith.cmpi ne, %131, %c0_i32_87 : i32
    scf.if %132 {
      %c0_88 = arith.constant 0 : index
      %c0_89 = arith.constant 0 : index
      %133 = vector.load %arg14[%c0_88, %c0_89] : memref<48x32xf32, #tpu.memory_space<vmem>>, vector<48x32xf32>
      %c0_90 = arith.constant 0 : index
      %c0_91 = arith.constant 0 : index
      %134 = vector.load %arg15[%c0_90, %c0_91] : memref<48x32xf32, #tpu.memory_space<vmem>>, vector<48x32xf32>
      %135 = arith.addf %133, %134 : vector<48x32xf32>
      %136 = vector.shape_cast %135 : vector<48x32xf32> to vector<2x24x32xf32>
      %137 = arith.truncf %136 : vector<2x24x32xf32> to vector<2x24x32xbf16>
      %c0_92 = arith.constant 0 : index
      %c0_93 = arith.constant 0 : index
      %c0_94 = arith.constant 0 : index
      %138 = vector.load %arg13[%c0_92, %c0_93, %c0_94] : memref<2x24x32xbf16, #tpu.memory_space<vmem>>, vector<2x24x32xbf16>
      tpu.vector_store %arg13[%c0_92, %c0_93, %c0_94], %137 {strides = array<i32>} : memref<2x24x32xbf16, #tpu.memory_space<vmem>>, vector<2x24x32xbf16>,
    } else {
    }
    return
  }
  func.func @transform_0(%arg0: i32, %arg1: i32) -> (i32, i32, i32) {
    %c0_i32 = arith.constant 0 : i32
    %c0_i32_0 = arith.constant 0 : i32
    %c0_i32_1 = arith.constant 0 : i32
    return %arg0, %c0_i32, %c0_i32_0 : i32, i32, i32
  }
  func.func @transform_1(%arg0: i32, %arg1: i32) -> (i32, i32, i32) {
    %c0_i32 = arith.constant 0 : i32
    %c0_i32_0 = arith.constant 0 : i32
    %c0_i32_1 = arith.constant 0 : i32
    return %arg1, %c0_i32, %c0_i32_0 : i32, i32, i32
  }
  func.func @transform_2(%arg0: i32, %arg1: i32) -> (i32, i32, i32) {
    %c0_i32 = arith.constant 0 : i32
    %c0_i32_0 = arith.constant 0 : i32
    %c0_i32_1 = arith.constant 0 : i32
    return %arg1, %c0_i32, %c0_i32_0 : i32, i32, i32
  }
  func.func @transform_3(%arg0: i32, %arg1: i32) -> (i32, i32, i32) {
    %c0_i32 = arith.constant 0 : i32
    %c0_i32_0 = arith.constant 0 : i32
    %c0_i32_1 = arith.constant 0 : i32
    return %arg1, %c0_i32, %c0_i32_0 : i32, i32, i32
  }
  func.func @transform_4(%arg0: i32, %arg1: i32) -> (i32, i32, i32) {
    %c0_i32 = arith.constant 0 : i32
    %c0_i32_0 = arith.constant 0 : i32
    %c0_i32_1 = arith.constant 0 : i32
    return %arg1, %c0_i32, %c0_i32_0 : i32, i32, i32
  }
  func.func @transform_5(%arg0: i32, %arg1: i32) -> (i32, i32, i32) {
    %c0_i32 = arith.constant 0 : i32
    %c0_i32_0 = arith.constant 0 : i32
    %c0_i32_1 = arith.constant 0 : i32
    return %arg1, %c0_i32, %c0_i32_0 : i32, i32, i32
  }
  func.func @transform_6(%arg0: i32, %arg1: i32) -> (i32, i32, i32) {
    %c0_i32 = arith.constant 0 : i32
    %c0_i32_0 = arith.constant 0 : i32
    %c0_i32_1 = arith.constant 0 : i32
    return %arg1, %c0_i32, %c0_i32_0 : i32, i32, i32
  }
  func.func @transform_7(%arg0: i32, %arg1: i32) -> (i32, i32, i32) {
    %c0_i32 = arith.constant 0 : i32
    %c0_i32_0 = arith.constant 0 : i32
    %c0_i32_1 = arith.constant 0 : i32
    return %arg1, %c0_i32, %c0_i32_0 : i32, i32, i32
  }
  func.func @transform_8(%arg0: i32, %arg1: i32) -> (i32, i32, i32) {
    %c0_i32 = arith.constant 0 : i32
    %c0_i32_0 = arith.constant 0 : i32
    %c0_i32_1 = arith.constant 0 : i32
    return %arg1, %c0_i32, %c0_i32_0 : i32, i32, i32
  }
  func.func @transform_9(%arg0: i32, %arg1: i32) -> (i32, i32, i32) {
    %c0_i32 = arith.constant 0 : i32
    %c0_i32_0 = arith.constant 0 : i32
    %c0_i32_1 = arith.constant 0 : i32
    return %arg1, %c0_i32, %c0_i32_0 : i32, i32, i32
  }
  func.func @transform_10(%arg0: i32, %arg1: i32) -> (i32, i32, i32) {
    %c0_i32 = arith.constant 0 : i32
    %c0_i32_0 = arith.constant 0 : i32
    %c0_i32_1 = arith.constant 0 : i32
    return %arg1, %c0_i32, %c0_i32_0 : i32, i32, i32
  }
  func.func @transform_11(%arg0: i32, %arg1: i32) -> (i32, i32, i32) {
    %c0_i32 = arith.constant 0 : i32
    %c0_i32_0 = arith.constant 0 : i32
    %c0_i32_1 = arith.constant 0 : i32
    return %arg0, %c0_i32, %c0_i32_0 : i32, i32, i32
  }
}

</mosaic_0001>

<llo_original>
// kernel: aim_forward.3
$region0: #{aim_forward.3}
  #allocation0 [shape = 'u32[]', space=smem, size = 0x4, offset = 0x4, fixed_abs, tag = 'smem constant byte address 0x4 - core index']
  #allocation1 [shape = 'u32[144,128]{1,0:T(1,128)}', space=vmem, size = 0x12000, scoped, tag = 'internal scratch']
  %s0 = inlined_call_operand.hbm [shape: bf16[96,32], index: 0, kind: input, shape index: {}]
  %s1 = inlined_call_operand.hbm [shape: f32[1,32], index: 1, kind: input, shape index: {}]
  %s2 = inlined_call_operand.hbm [shape: bf16[32,384], index: 2, kind: input, shape index: {}]
  %s3 = inlined_call_operand.hbm [shape: f32[96,384], index: 3, kind: output, shape index: {}]
  %s4 = sld [smem:[#allocation0]]
  $region57: #{aim_forward.3} parent=0
    _
  %s6 = ssub.s32 1, %s4
  %s7 = scalar_select 0, %s6, %s4
  $region1: #{aim_forward.3} parent=0
    #allocation2 [shape = 'u8[24576]{0}', space=vmem, size = 0x6000, scoped, tag = 'input window, operand 0, single buffered']
    #allocation3 [shape = 's32[2]{0}', space=sflag, size = 0x8, scoped, tag = 'scoped memory for aim_forward.3']
    #allocation4 [shape = 's32[2]{0}', space=sflag, size = 0x8, scoped, tag = 'scoped memory for aim_forward.3']
    #allocation5 [shape = 'u8[512]{0}', space=vmem, size = 0x400, scoped, tag = 'input window, operand 1, single buffered']
    #allocation6 [shape = 's32[1]{0}', space=sflag, size = 0x4, scoped, tag = 'scoped memory for aim_forward.3']
    #allocation7 [shape = 'u8[16384]{0}', space=vmem, size = 0x4000, scoped, tag = 'input window, operand 2']
    #allocation8 [shape = 'u8[98304]{0}', space=vmem, size = 0x18000, scoped, tag = 'output window, operand 0']
    %8 = vsyncpa [#allocation3], 0
    %9 = vsyncpa [#allocation6], 0
    %10 = vsyncpa [#allocation4], 0
    %s11 = scalar_lea.sflag [#allocation4], 1
    %12 = vsyncpa %s11, 0
    loop: start=0, step=1, limit=5
    $region2: #{aim_forward.3} parent=1 // loop_pre_header
      _
    $region3: #{aim_forward.3} parent=1 // loop_header
      %s14 = sphi 0, %s18
      %p15 = scmp.ge.s32.totalorder %s14, 5
      %s21 = sphi 0, %s33
      %s22 = sphi 0, %s29
      %s23 = sphi 0, %s21
      %s24 = sphi 0, %s22
      %s25 = sphi 0, %s23
      %s26 = sphi 0, %s24
      %s36 = sphi 0, %s38
      %s39 = sphi 0, %s36
      %s40 = sphi 0, %s39
      %s56 = sphi 0, %s40
      %s60 = sphi 0, %s60
      %s62 = sphi 0, %s60
      %s63 = sphi 0, %s62
      %s77 = sphi 0, %s63
      %s83 = sphi 0, %s85
      %s86 = sphi 0, %s83
      %s87 = sphi 0, %s86
      %s103 = sphi 0, %s87
      %s111 = sphi 0, %s113
      %s114 = sphi 0, %s111
      %s115 = sphi 0, %s114
      %s131 = sphi 0, %s115
    $region4: #{aim_forward.3} parent=1 // loop_header_branch
      %17 = sbr.rel (%p15) target = $region8
    $region5: #{aim_forward.3} parent=1 // loop_body
      %s19 = ssub.s32 %s14, 1
      %s20 = ssub.s32 %s14, 2
      %s27 = sadd.s32 1, %s22
      %p28 = scmp.ge.s32.totalorder %s27, 3
      %s29 = scalar_select %p28, 0, %s27
      %s30 = sadd.s32 1, %s21
      %s31 = scalar_select %p28, %s30, %s21
      %p32 = scmp.ge.s32.totalorder %s31, 1
      %s33 = scalar_select %p32, 0, %s31
      %s34 = ssub.s32 %s21, %s33
      %p35 = scmp.eq.s32.totalorder %s34, 0
      %s37 = sadd.s32 %s36, 1
      %s38 = scalar_select %p35, %s36, %s37
      %p41 = pneg %p35
      %p42 = scmp.eq.s32.totalorder %s14, 2
      %p43 = por %p41, %p42
      %p44 = scmp.ne.s32.totalorder %s36, %s39
      %p45 = scmp.eq.s32.totalorder %s14, 0
      %p46 = por %p44, %p45
      %p47 = scmp.ne.s32.totalorder %s36, %s39
      %p48 = scmp.eq.s32.totalorder %s19, 2
      %p49 = por %p47, %p48
      %p50 = scmp.ne.s32.totalorder %s39, %s40
      %p51 = scmp.eq.s32.totalorder %s19, 0
      %p52 = por %p50, %p51
      %p53 = scmp.ne.s32.totalorder %s39, %s40
      %p54 = scmp.eq.s32.totalorder %s20, 2
      %p55 = por %p53, %p54
      %p57 = scmp.ne.s32.totalorder %s40, %s56
      %p58 = scmp.eq.s32.totalorder %s20, 0
      %p59 = por %p57, %p58
      %s61 = sadd.s32 %s60, 1
      %p64 = scmp.eq.s32.totalorder %s14, 2
      %p65 = scmp.ne.s32.totalorder %s60, %s62
      %p66 = scmp.eq.s32.totalorder %s14, 0
      %p67 = por %p65, %p66
      %p68 = scmp.ne.s32.totalorder %s60, %s62
      %p69 = scmp.eq.s32.totalorder %s19, 2
      %p70 = por %p68, %p69
      %p71 = scmp.ne.s32.totalorder %s62, %s63
      %p72 = scmp.eq.s32.totalorder %s19, 0
      %p73 = por %p71, %p72
      %p74 = scmp.ne.s32.totalorder %s62, %s63
      %p75 = scmp.eq.s32.totalorder %s20, 2
      %p76 = por %p74, %p75
      %p78 = scmp.ne.s32.totalorder %s63, %s77
      %p79 = scmp.eq.s32.totalorder %s20, 0
      %p80 = por %p78, %p79
      %s81 = ssub.s32 %s22, %s29
      %p82 = scmp.eq.s32.totalorder %s81, 0
      %s84 = sadd.s32 %s83, 1
      %s85 = scalar_select %p82, %s83, %s84
      %p88 = pneg %p82
      %p89 = scmp.eq.s32.totalorder %s14, 2
      %p90 = por %p88, %p89
      %p91 = scmp.ne.s32.totalorder %s83, %s86
      %p92 = scmp.eq.s32.totalorder %s14, 0
      %p93 = por %p91, %p92
      %p94 = scmp.ne.s32.totalorder %s83, %s86
      %p95 = scmp.eq.s32.totalorder %s19, 2
      %p96 = por %p94, %p95
      %p97 = scmp.ne.s32.totalorder %s86, %s87
      %p98 = scmp.eq.s32.totalorder %s19, 0
      %p99 = por %p97, %p98
      %p100 = scmp.ne.s32.totalorder %s86, %s87
      %p101 = scmp.eq.s32.totalorder %s20, 2
      %p102 = por %p100, %p101
      %p104 = scmp.ne.s32.totalorder %s87, %s103
      %p105 = scmp.eq.s32.totalorder %s20, 0
      %p106 = por %p104, %p105
      %s107 = ssub.s32 %s21, %s33
      %s108 = ssub.s32 %s22, %s29
      %s109 = sor.u32 %s107, %s108
      %p110 = scmp.eq.s32.totalorder %s109, 0
      %s112 = sadd.s32 %s111, 1
      %s113 = scalar_select %p110, %s111, %s112
      %p116 = pneg %p110
      %p117 = scmp.eq.s32.totalorder %s14, 2
      %p118 = por %p116, %p117
      %p119 = scmp.ne.s32.totalorder %s111, %s114
      %p120 = scmp.eq.s32.totalorder %s14, 0
      %p121 = por %p119, %p120
      %p122 = scmp.ne.s32.totalorder %s111, %s114
      %p123 = scmp.eq.s32.totalorder %s19, 2
      %p124 = por %p122, %p123
      %p125 = scmp.ne.s32.totalorder %s114, %s115
      %p126 = scmp.eq.s32.totalorder %s19, 0
      %p127 = por %p125, %p126
      %p128 = scmp.ne.s32.totalorder %s114, %s115
      %p129 = scmp.eq.s32.totalorder %s20, 2
      %p130 = por %p128, %p129
      %p132 = scmp.ne.s32.totalorder %s115, %s131
      %p133 = scmp.eq.s32.totalorder %s20, 0
      %p134 = por %p132, %p133
      %p135 = scmp.le.s32.totalorder 1, %s14
      %p136 = scmp.lt.s32.totalorder %s14, 4
      %p137 = pnand %p135, %p136
      %p138 = pneg %p137
      // Predicated region
      $region9: #{aim_forward.3} parent=5 // pred_check
        _
      $region10: #{aim_forward.3} parent=5 // pred_check_branch
        %140 = sbr.rel (%p137) target = $region12
      $region11: #{aim_forward.3} parent=5 // pred_region
        %s141 = ssub.s32 %s14, 1
        // Predicated region
        $region13: #{aim_forward.3} parent=11 // pred_check
          %p142 = pneg %p52
        $region14: #{aim_forward.3} parent=11 // pred_check_branch
          %144 = sbr.rel (%p142) target = $region16
        $region15: #{aim_forward.3} parent=11 // pred_region
          %s145 = smul.u32 12, %s23
          %s147 = ssub.s32 768, 768
          %148 = vsyncadd [#allocation3], %s147
          %s149 = smul.addr %s145, 64
          %s150 = scalar_lea.hbm %s0, %s149
          %s151 = sshll.u32 [#allocation2], 4
          %s152 = int_to_ptr.vmem [resolvable:$true] %s151
          %157 = dma.hbm_to_vmem [thread:$0]  %s150, 768, %s152, [#allocation3], 64, 64, 4
        $region16: #{aim_forward.3} parent=11 // pred_fallthru
          _
        // Predicated region
        $region17: #{aim_forward.3} parent=11 // pred_check
          %p158 = pneg %p73
        $region18: #{aim_forward.3} parent=11 // pred_check_branch
          %160 = sbr.rel (%p158) target = $region20
        $region19: #{aim_forward.3} parent=11 // pred_region
          %s162 = ssub.s32 16, 16
          %163 = vsyncadd [#allocation6], %s162
          %s165 = sshll.u32 [#allocation5], 4
          %s166 = int_to_ptr.vmem [resolvable:$true] %s165
          %168 = dma.hbm_to_vmem [thread:$0]  %s1, 16, %s166, [#allocation6]
        $region20: #{aim_forward.3} parent=11 // pred_fallthru
          _
      $region12: #{aim_forward.3} parent=5 // pred_fallthru
        _
      %p169 = scmp.lt.s32.totalorder %s14, 3
      // Predicated region
      $region21: #{aim_forward.3} parent=5 // pred_check
        %p170 = pneg %p169
      $region22: #{aim_forward.3} parent=5 // pred_check_branch
        %172 = sbr.rel (%p170) target = $region24
      $region23: #{aim_forward.3} parent=5 // pred_region
        // Predicated region
        $region25: #{aim_forward.3} parent=23 // pred_check
          %p173 = pneg %p93
        $region26: #{aim_forward.3} parent=23 // pred_check_branch
          %175 = sbr.rel (%p173) target = $region28
        $region27: #{aim_forward.3} parent=23 // pred_region
          %s176 = sand.u32 %s14, 1
          %s177 = scalar_lea.sflag [#allocation3], %s176
          %s178 = sand.u32 %s83, 1
          %s179 = smul.addr %s178, 16
          %s180 = scalar_lea.vmem [#allocation7], %s179
          %s182 = ssub.s32 256, 256
          %183 = vsyncadd %s177, %s182
          %s184 = smul.addr %s22, 64
          %s185 = scalar_lea.hbm %s2, %s184
          %s186 = sshll.u32 %s180, 4
          %s187 = int_to_ptr.vmem [resolvable:$true] %s186
          %192 = dma.hbm_to_vmem [thread:$0]  %s185, 256, %s187, %s177, 192, 64, 4
        $region28: #{aim_forward.3} parent=23 // pred_fallthru
          _
      $region24: #{aim_forward.3} parent=5 // pred_fallthru
        _
      %p193 = scmp.le.s32.totalorder 1, %s14
      %p194 = scmp.lt.s32.totalorder %s14, 4
      %p195 = pnand %p193, %p194
      %p196 = pneg %p195
      // Predicated region
      $region29: #{aim_forward.3} parent=5 // pred_check
        _
      $region30: #{aim_forward.3} parent=5 // pred_check_branch
        %198 = sbr.rel (%p195) target = $region32
      $region31: #{aim_forward.3} parent=5 // pred_region
        %s199 = ssub.s32 %s14, 1
        // Predicated region
        $region33: #{aim_forward.3} parent=31 // pred_check
          %p200 = pneg %p52
        $region34: #{aim_forward.3} parent=31 // pred_check_branch
          %202 = sbr.rel (%p200) target = $region36
        $region35: #{aim_forward.3} parent=31 // pred_region
          %203 = dma.done [#allocation3], 768
        $region36: #{aim_forward.3} parent=31 // pred_fallthru
          _
        // Predicated region
        $region37: #{aim_forward.3} parent=31 // pred_check
          %p204 = pneg %p73
        $region38: #{aim_forward.3} parent=31 // pred_check_branch
          %206 = sbr.rel (%p204) target = $region40
        $region39: #{aim_forward.3} parent=31 // pred_region
          %207 = dma.done [#allocation6], 16
        $region40: #{aim_forward.3} parent=31 // pred_fallthru
          _
        %s208 = sand.u32 %s19, 1
        %s209 = scalar_lea.sflag [#allocation3], %s208
        %s210 = sand.u32 %s86, 1
        %s211 = smul.addr %s210, 16
        %s212 = scalar_lea.vmem [#allocation7], %s211
        // Predicated region
        $region41: #{aim_forward.3} parent=31 // pred_check
          %p213 = pneg %p99
        $region42: #{aim_forward.3} parent=31 // pred_check_branch
          %215 = sbr.rel (%p213) target = $region44
        $region43: #{aim_forward.3} parent=31 // pred_region
          %216 = dma.done %s209, 256
        $region44: #{aim_forward.3} parent=31 // pred_fallthru
          _
        %p217 = pneg %p52
        %p218 = pneg %p49
        %p219 = pneg %p73
        %p220 = pneg %p70
        %s221 = sand.u32 %s19, 1
        %s222 = scalar_lea.sflag [#allocation3], %s221
        %s223 = sand.u32 %s86, 1
        %s224 = smul.addr %s223, 16
        %s225 = scalar_lea.vmem [#allocation7], %s224
        %p226 = pneg %p99
        %p227 = pneg %p96
        %p228 = pneg %p127
        %p229 = pneg %p124
        %s230 = sand.u32 %s114, 1
        %s231 = scalar_lea.sflag [#allocation4], %s230
        %s232 = sand.u32 %s114, 1
        %s233 = smul.addr %s232, 96
        %s234 = scalar_lea.vmem [#allocation8], %s233
        %s235 = smul.u32 12, %s23
        %s236 = smul.u32 12, %s23
        %v238 = vld [vmem:[#allocation2] sm:$0xf]
        %v239 = vld [vmem:[#allocation2 + $0x4] sm:$0xf]
        %v240 = vld [vmem:[#allocation2 + $0x8] sm:$0xf]
        %v241 = vld [vmem:[#allocation2 + $0xc] sm:$0xf]
        %v242 = vld [vmem:[#allocation2 + $0x10] sm:$0xf]
        %v243 = vld [vmem:[#allocation2 + $0x14] sm:$0xf]
        %v244 = vld [vmem:[#allocation2 + $0x18] sm:$0xf]
        %v245 = vld [vmem:[#allocation2 + $0x1c] sm:$0xf]
        %v246 = vld [vmem:[#allocation2 + $0x20] sm:$0xf]
        %v247 = vld [vmem:[#allocation2 + $0x24] sm:$0xf]
        %v248 = vld [vmem:[#allocation2 + $0x28] sm:$0xf]
        %v249 = vld [vmem:[#allocation2 + $0x2c] sm:$0xf]
        %v250 = vunpack.c.l.bf16 %v238
        %v251 = vunpack.c.l.bf16 %v239
        %v252 = vunpack.c.l.bf16 %v240
        %v253 = vunpack.c.l.bf16 %v241
        %v254 = vunpack.c.l.bf16 %v242
        %v255 = vunpack.c.l.bf16 %v243
        %v256 = vunpack.c.l.bf16 %v244
        %v257 = vunpack.c.l.bf16 %v245
        %v258 = vunpack.c.l.bf16 %v246
        %v259 = vunpack.c.l.bf16 %v247
        %v260 = vunpack.c.l.bf16 %v248
        %v261 = vunpack.c.l.bf16 %v249
        %v262 = vmul.f32 %v250, %v250
        %v263 = vmul.f32 %v251, %v251
        %v264 = vmul.f32 %v252, %v252
        %v265 = vmul.f32 %v253, %v253
        %v266 = vmul.f32 %v254, %v254
        %v267 = vmul.f32 %v255, %v255
        %v268 = vmul.f32 %v256, %v256
        %v269 = vmul.f32 %v257, %v257
        %v270 = vmul.f32 %v258, %v258
        %v271 = vmul.f32 %v259, %v259
        %v272 = vmul.f32 %v260, %v260
        %v273 = vmul.f32 %v261, %v261
        %vm274 = vcmask 261120
        %v275 = vsel %vm274, %v262, 0.0
        %276 = vadd.xlane.f32.xlu0 %v275
        %v277 = vpop.xlane.xlu0 %276
        %v278 = vsel %vm274, %v263, 0.0
        %279 = vadd.xlane.f32.xlu0 %v278
        %v280 = vpop.xlane.xlu0 %279
        %v281 = vsel %vm274, %v264, 0.0
        %282 = vadd.xlane.f32.xlu0 %v281
        %v283 = vpop.xlane.xlu0 %282
        %v284 = vsel %vm274, %v265, 0.0
        %285 = vadd.xlane.f32.xlu0 %v284
        %v286 = vpop.xlane.xlu0 %285
        %v287 = vsel %vm274, %v266, 0.0
        %288 = vadd.xlane.f32.xlu0 %v287
        %v289 = vpop.xlane.xlu0 %288
        %v290 = vsel %vm274, %v267, 0.0
        %291 = vadd.xlane.f32.xlu0 %v290
        %v292 = vpop.xlane.xlu0 %291
        %v293 = vsel %vm274, %v268, 0.0
        %294 = vadd.xlane.f32.xlu0 %v293
        %v295 = vpop.xlane.xlu0 %294
        %v296 = vsel %vm274, %v269, 0.0
        %297 = vadd.xlane.f32.xlu0 %v296
        %v298 = vpop.xlane.xlu0 %297
        %v299 = vsel %vm274, %v270, 0.0
        %300 = vadd.xlane.f32.xlu0 %v299
        %v301 = vpop.xlane.xlu0 %300
        %v302 = vsel %vm274, %v271, 0.0
        %303 = vadd.xlane.f32.xlu0 %v302
        %v304 = vpop.xlane.xlu0 %303
        %v305 = vsel %vm274, %v272, 0.0
        %306 = vadd.xlane.f32.xlu0 %v305
        %v307 = vpop.xlane.xlu0 %306
        %v308 = vsel %vm274, %v273, 0.0
        %309 = vadd.xlane.f32.xlu0 %v308
        %v310 = vpop.xlane.xlu0 %309
        %v311 = vrcp.pop 32.0
        %v312 = vmul.f32 %v277, %v311
        %v313 = vmul.f32 %v280, %v311
        %v314 = vmul.f32 %v283, %v311
        %v315 = vmul.f32 %v286, %v311
        %v316 = vmul.f32 %v289, %v311
        %v317 = vmul.f32 %v292, %v311
        %v318 = vmul.f32 %v295, %v311
        %v319 = vmul.f32 %v298, %v311
        %v320 = vmul.f32 %v301, %v311
        %v321 = vmul.f32 %v304, %v311
        %v322 = vmul.f32 %v307, %v311
        %v323 = vmul.f32 %v310, %v311
        %v324 = vadd.f32 %v312, 1e-05
        %v325 = vadd.f32 %v313, 1e-05
        %v326 = vadd.f32 %v314, 1e-05
        %v327 = vadd.f32 %v315, 1e-05
        %v328 = vadd.f32 %v316, 1e-05
        %v329 = vadd.f32 %v317, 1e-05
        %v330 = vadd.f32 %v318, 1e-05
        %v331 = vadd.f32 %v319, 1e-05
        %v332 = vadd.f32 %v320, 1e-05
        %v333 = vadd.f32 %v321, 1e-05
        %v334 = vadd.f32 %v322, 1e-05
        %v335 = vadd.f32 %v323, 1e-05
        %v336 = vrsqrt.pop %v324
        %v337 = vrsqrt.pop %v325
        %v338 = vrsqrt.pop %v326
        %v339 = vrsqrt.pop %v327
        %v340 = vrsqrt.pop %v328
        %v341 = vrsqrt.pop %v329
        %v342 = vrsqrt.pop %v330
        %v343 = vrsqrt.pop %v331
        %v344 = vrsqrt.pop %v332
        %v345 = vrsqrt.pop %v333
        %v346 = vrsqrt.pop %v334
        %v347 = vrsqrt.pop %v335
        %v348 = vmul.f32 %v250, %v336
        %v349 = vmul.f32 %v251, %v337
        %v350 = vmul.f32 %v252, %v338
        %v351 = vmul.f32 %v253, %v339
        %v352 = vmul.f32 %v254, %v340
        %v353 = vmul.f32 %v255, %v341
        %v354 = vmul.f32 %v256, %v342
        %v355 = vmul.f32 %v257, %v343
        %v356 = vmul.f32 %v258, %v344
        %v357 = vmul.f32 %v259, %v345
        %v358 = vmul.f32 %v260, %v346
        %v359 = vmul.f32 %v261, %v347
        %v360 = vld [vmem:[#allocation5] sm:$0x1]
        %v362 = vlaneseq
        %v363 = vshrl.u32 %v362, 7
        %v364 = vsub.s32 0, %v363
        %v365 = vrot.slane %v360, %v364
        %v367 = vmul.f32 %v348, %v365
        %v368 = vmul.f32 %v349, %v365
        %v369 = vmul.f32 %v350, %v365
        %v370 = vmul.f32 %v351, %v365
        %v371 = vmul.f32 %v352, %v365
        %v372 = vmul.f32 %v353, %v365
        %v373 = vmul.f32 %v354, %v365
        %v374 = vmul.f32 %v355, %v365
        %v375 = vmul.f32 %v356, %v365
        %v376 = vmul.f32 %v357, %v365
        %v377 = vmul.f32 %v358, %v365
        %v378 = vmul.f32 %v359, %v365
        %v379 = vpack.c.bf16 %v368, %v367
        %v380 = vpack.c.bf16 %v370, %v369
        %v381 = vpack.c.bf16 %v372, %v371
        %v382 = vpack.c.bf16 %v374, %v373
        %v383 = vpack.c.bf16 %v376, %v375
        %v384 = vpack.c.bf16 %v378, %v377
        %v385 = vld [vmem:[%s212] sm:$0xf]
        %v386 = vld [vmem:[%s212 + $0x4] sm:$0xf]
        %v387 = vld [vmem:[%s212 + $0x8] sm:$0xf]
        %v388 = vld [vmem:[%s212 + $0xc] sm:$0xf]
        %v393 = vunpack.c.l.b16 %v385
        %v394 = vunpack.c.l.b16 %v386
        %v395 = vunpack.c.l.b16 %v387
        %v396 = vunpack.c.l.b16 %v388
        %v397 = vpack.c.b16 %v394, %v393
        %v398 = vpack.c.b16 %v396, %v395
        %v402 = vsel %vm274, %v379, 0
        %v405 = vsel %vm274, %v380, 0
        %v408 = vsel %vm274, %v381, 0
        %v411 = vsel %vm274, %v382, 0
        %v414 = vsel %vm274, %v383, 0
        %v417 = vsel %vm274, %v384, 0
        %419 = vmatprep.subr.bf16.mxu0 0
        %420 = vmatpush1.bf16.msra.mxu0 %v397
        %421 = vmatprep.subr.bf16.mxu0 0
        %422 = vmatpush1.bf16.msra.mxu0 %v398
        %423 = vmatprep.subr.bf16.mxu0 0
        %424 = vmatpush1.bf16.msra.mxu0 0
        %425 = vmatprep.subr.bf16.mxu0 0
        %426 = vmatpush1.bf16.msra.mxu0 0
        %427 = vmatprep.subr.bf16.mxu0 0
        %428 = vmatpush1.bf16.msra.mxu0 0
        %429 = vmatprep.subr.bf16.mxu0 0
        %430 = vmatpush1.bf16.msra.mxu0 0
        %431 = vmatprep.subr.bf16.mxu0 0
        %432 = vmatpush1.bf16.msra.mxu0 0
        %433 = vmatprep.subr.bf16.mxu0 0
        %434 = vmatpush1.bf16.msra.mxu0 0
        %435 = vmatprep.subr.bf16.mxu0 0
        %436 = vmatpush1.bf16.msra.mxu0 0
        %437 = vmatprep.subr.bf16.mxu0 0
        %438 = vmatpush1.bf16.msra.mxu0 0
        %439 = vmatprep.subr.bf16.mxu0 0
        %440 = vmatpush1.bf16.msra.mxu0 0
        %441 = vmatprep.subr.bf16.mxu0 0
        %442 = vmatpush1.bf16.msra.mxu0 0
        %443 = vmatprep.subr.bf16.mxu0 0
        %444 = vmatpush1.bf16.msra.mxu0 0
        %445 = vmatprep.subr.bf16.mxu0 0
        %446 = vmatpush1.bf16.msra.mxu0 0
        %447 = vmatprep.subr.bf16.mxu0 0
        %448 = vmatpush1.bf16.msra.mxu0 0
        %449 = vmatprep.subr.bf16.mxu0 0
        %450 = vmatpush1.bf16.msra.mxu0 0
        %451 = vmatprep.mubr.bf16.mxu0 0
        %452 = vmatmul.mubr.bf16.gmra.mrb[0].mxu0 %v402
        %v453 = vpop.f32.mrb[0].mxu0
        %v454 = vadd.f32 0.0, %v453
        %v455 = vpop.f32.mrb[0].mxu0
        %v456 = vpop.f32.mrb[0].mxu0
        %v457 = vadd.f32 0.0, %v456
        %v458 = vpop.f32.mrb[0].mxu0
        %459 = vmatprep.mubr.bf16.mxu0 0
        %460 = vmatmul.mubr.bf16.gmra.mrb[0].mxu0 %v405
        %v461 = vpop.f32.mrb[0].mxu0
        %v462 = vadd.f32 0.0, %v461
        %v463 = vpop.f32.mrb[0].mxu0
        %v464 = vpop.f32.mrb[0].mxu0
        %v465 = vadd.f32 0.0, %v464
        %v466 = vpop.f32.mrb[0].mxu0
        %467 = vmatprep.mubr.bf16.mxu0 0
        %468 = vmatmul.mubr.bf16.gmra.mrb[0].mxu0 %v408
        %v469 = vpop.f32.mrb[0].mxu0
        %v470 = vadd.f32 0.0, %v469
        %v471 = vpop.f32.mrb[0].mxu0
        %v472 = vpop.f32.mrb[0].mxu0
        %v473 = vadd.f32 0.0, %v472
        %v474 = vpop.f32.mrb[0].mxu0
        %475 = vmatprep.mubr.bf16.mxu0 0
        %476 = vmatmul.mubr.bf16.gmra.mrb[0].mxu0 %v411
        %v477 = vpop.f32.mrb[0].mxu0
        %v478 = vadd.f32 0.0, %v477
        %v479 = vpop.f32.mrb[0].mxu0
        %v480 = vpop.f32.mrb[0].mxu0
        %v481 = vadd.f32 0.0, %v480
        %v482 = vpop.f32.mrb[0].mxu0
        %483 = vmatprep.mubr.bf16.mxu0 0
        %484 = vmatmul.mubr.bf16.gmra.mrb[0].mxu0 %v414
        %v485 = vpop.f32.mrb[0].mxu0
        %v486 = vadd.f32 0.0, %v485
        %v487 = vpop.f32.mrb[0].mxu0
        %v488 = vpop.f32.mrb[0].mxu0
        %v489 = vadd.f32 0.0, %v488
        %v490 = vpop.f32.mrb[0].mxu0
        %491 = vmatprep.mubr.bf16.mxu0 0
        %492 = vmatmul.mubr.bf16.gmra.mrb[0].mxu0 %v417
        %v493 = vpop.f32.mrb[0].mxu0
        %v494 = vadd.f32 0.0, %v493
        %v495 = vpop.f32.mrb[0].mxu0
        %v496 = vpop.f32.mrb[0].mxu0
        %v497 = vadd.f32 0.0, %v496
        %v498 = vpop.f32.mrb[0].mxu0
        %499 = vdwg.mxu0
        %500 = vst [vmem:[%s234] sm:$0xff] %v454
        %501 = vst [vmem:[%s234 + $0x8] sm:$0xff] %v457
        %502 = vst [vmem:[%s234 + $0x10] sm:$0xff] %v462
        %503 = vst [vmem:[%s234 + $0x18] sm:$0xff] %v465
        %504 = vst [vmem:[%s234 + $0x20] sm:$0xff] %v470
        %505 = vst [vmem:[%s234 + $0x28] sm:$0xff] %v473
        %506 = vst [vmem:[%s234 + $0x30] sm:$0xff] %v478
        %507 = vst [vmem:[%s234 + $0x38] sm:$0xff] %v481
        %508 = vst [vmem:[%s234 + $0x40] sm:$0xff] %v486
        %509 = vst [vmem:[%s234 + $0x48] sm:$0xff] %v489
        %510 = vst [vmem:[%s234 + $0x50] sm:$0xff] %v494
        %511 = vst [vmem:[%s234 + $0x58] sm:$0xff] %v497
        %s512 = sand.u32 %s114, 1
        %s513 = scalar_lea.sflag [#allocation4], %s512
        %s514 = sand.u32 %s114, 1
        %s515 = smul.addr %s514, 96
        %s516 = scalar_lea.vmem [#allocation8], %s515
        // Predicated region
        $region45: #{aim_forward.3} parent=31 // pred_check
          %p517 = pneg %p124
        $region46: #{aim_forward.3} parent=31 // pred_check_branch
          %519 = sbr.rel (%p517) target = $region48
        $region47: #{aim_forward.3} parent=31 // pred_region
          %s520 = smul.u32 12, %s23
          %s522 = ssub.s32 1536, 1536
          %523 = vsyncadd %s513, %s522
          %s524 = smul.addr %s520, 3
          %s525 = sadd.s32 %s24, %s524
          %s526 = smul.addr %s525, 128
          %s527 = scalar_lea.hbm %s3, %s526
          %s528 = sshll.u32 %s516, 4
          %s529 = int_to_ptr.vmem [resolvable:$true] %s528
          %534 = dma.vmem_to_hbm [thread:$0]  %s529, 1536, %s527, %s513, 128, 384, 8
        $region48: #{aim_forward.3} parent=31 // pred_fallthru
          _
      $region32: #{aim_forward.3} parent=5 // pred_fallthru
        _
      %p535 = scmp.le.s32.totalorder 2, %s14
      // Predicated region
      $region49: #{aim_forward.3} parent=5 // pred_check
        %p536 = pneg %p535
      $region50: #{aim_forward.3} parent=5 // pred_check_branch
        %538 = sbr.rel (%p536) target = $region52
      $region51: #{aim_forward.3} parent=5 // pred_region
        %s539 = ssub.s32 %s14, 2
        // Predicated region
        $region53: #{aim_forward.3} parent=51 // pred_check
          %p540 = pneg %p130
        $region54: #{aim_forward.3} parent=51 // pred_check_branch
          %542 = sbr.rel (%p540) target = $region56
        $region55: #{aim_forward.3} parent=51 // pred_region
          %s543 = sand.u32 %s115, 1
          %s544 = scalar_lea.sflag [#allocation4], %s543
          %s545 = sand.u32 %s115, 1
          %s546 = smul.addr %s545, 96
          %s547 = scalar_lea.vmem [#allocation8], %s546
          %548 = dma.done %s544, 1536
        $region56: #{aim_forward.3} parent=51 // pred_fallthru
          _
      $region52: #{aim_forward.3} parent=5 // pred_fallthru
        _
    $region6: #{aim_forward.3} parent=1 // loop_footer
      %s18 = sadd.s32 1, %s14
    $region7: #{aim_forward.3} parent=1 // loop_footer_branch
      %13 = sbr.rel target = $region3
    $region8: #{aim_forward.3} parent=1 // loop_exit
      _
    %549 = vsyncpa [#allocation3], 1
    %s550 = scalar_lea.sflag [#allocation3], 1
    %551 = vsyncpa %s550, 1
    %552 = vsyncpa [#allocation6], 1
    %553 = vsyncpa [#allocation4], 1
    %s554 = scalar_lea.sflag [#allocation4], 1
    %555 = vsyncpa %s554, 1

// kernel: aim_forward.2
$region0: #{aim_forward.2}
  #allocation0 [shape = 'u32[]', space=smem, size = 0x4, offset = 0x4, fixed_abs, tag = 'smem constant byte address 0x4 - core index']
  #allocation1 [shape = 'u32[144,128]{1,0:T(1,128)}', space=vmem, size = 0x12000, scoped, tag = 'internal scratch']
  #allocation2 [shape = 'f32[48,32]{1,0:T(8,128)}', space=vmem, size = 0x6000, scoped, tag = 'scratch operand']
  #allocation3 [shape = 'f32[48,32]{1,0:T(8,128)}', space=vmem, size = 0x6000, scoped, tag = 'scratch operand']
  #allocation4 [shape = 'f32[2,27,64]{2,1,0:T(8,128)}', space=vmem, size = 0x8000, scoped, tag = 'scratch operand']
  #allocation5 [shape = 'f32[48,64]{1,0:T(8,128)}', space=vmem, size = 0x6000, scoped, tag = 'scratch operand']
  #allocation6 [shape = 'f32[48,64]{1,0:T(8,128)}', space=vmem, size = 0x6000, scoped, tag = 'scratch operand']
  #allocation7 [shape = 'bf16[48,64]{1,0:T(16,128)(2,1)}', space=vmem, size = 0x3000, scoped, tag = 'scratch operand']
  #allocation8 [shape = 'f32[48,16]{1,0:T(8,128)}', space=vmem, size = 0x6000, scoped, tag = 'scratch operand']
  #allocation9 [shape = 'f32[48,16]{1,0:T(8,128)}', space=vmem, size = 0x6000, scoped, tag = 'scratch operand']
  #allocation10 [shape = 'f32[48,64]{1,0:T(8,128)}', space=vmem, size = 0x6000, scoped, tag = 'scratch operand']
  #allocation11 [shape = 'f32[8,16,64]{2,1,0:T(8,128)}', space=vmem, size = 0x10000, scoped, tag = 'scratch operand']
  %s0 = inlined_call_operand.hbm [shape: f32[4,24,32], index: 0, kind: input, shape index: {}]
  %s1 = inlined_call_operand.hbm [shape: f32[2,1,32], index: 1, kind: input, shape index: {}]
  %s2 = inlined_call_operand.hbm [shape: bf16[2,32,128], index: 2, kind: input, shape index: {}]
  %s3 = inlined_call_operand.hbm [shape: f32[2,4,64], index: 3, kind: input, shape index: {}]
  %s4 = inlined_call_operand.hbm [shape: f32[2,1,64], index: 4, kind: input, shape index: {}]
  %s5 = inlined_call_operand.hbm [shape: bf16[2,64,384], index: 5, kind: input, shape index: {}]
  %s6 = inlined_call_operand.hbm [shape: bf16[2,128,64], index: 6, kind: input, shape index: {}]
  %s7 = inlined_call_operand.hbm [shape: f32[2,1,64], index: 7, kind: input, shape index: {}]
  %s8 = inlined_call_operand.hbm [shape: f32[2,16,64], index: 8, kind: input, shape index: {}]
  %s9 = inlined_call_operand.hbm [shape: f32[2,1,64], index: 9, kind: input, shape index: {}]
  %s10 = inlined_call_operand.hbm [shape: bf16[2,64,32], index: 10, kind: input, shape index: {}]
  %s11 = inlined_call_operand.hbm [shape: bf16[4,24,32], index: 11, kind: output, shape index: {}]
  %s12 = sld [smem:[#allocation0]]
  $region143: #{aim_forward.2} parent=0
    _
  %s14 = ssub.s32 1, %s12
  %s15 = scalar_select 0, %s14, %s12
  $region1: #{aim_forward.2} parent=0
    #allocation12 [shape = 'u8[49152]{0}', space=vmem, size = 0xc000, scoped, tag = 'input window, operand 0']
    #allocation13 [shape = 's32[2]{0}', space=sflag, size = 0x8, scoped, tag = 'scoped memory for aim_forward.2']
    #allocation14 [shape = 's32[2]{0}', space=sflag, size = 0x8, scoped, tag = 'scoped memory for aim_forward.2']
    #allocation15 [shape = 'u8[1024]{0}', space=vmem, size = 0x400, scoped, tag = 'input window, operand 1']
    #allocation16 [shape = 's32[2]{0}', space=sflag, size = 0x8, scoped, tag = 'scoped memory for aim_forward.2']
    #allocation17 [shape = 'u8[16384]{0}', space=vmem, size = 0x4000, scoped, tag = 'input window, operand 2']
    #allocation18 [shape = 'u8[4096]{0}', space=vmem, size = 0x1000, scoped, tag = 'input window, operand 3']
    #allocation19 [shape = 's32[2]{0}', space=sflag, size = 0x8, scoped, tag = 'scoped memory for aim_forward.2']
    #allocation20 [shape = 'u8[1024]{0}', space=vmem, size = 0x400, scoped, tag = 'input window, operand 4']
    #allocation21 [shape = 'u8[98304]{0}', space=vmem, size = 0x18000, scoped, tag = 'input window, operand 5']
    #allocation22 [shape = 's32[2]{0}', space=sflag, size = 0x8, scoped, tag = 'scoped memory for aim_forward.2']
    #allocation23 [shape = 'u8[65536]{0}', space=vmem, size = 0x10000, scoped, tag = 'input window, operand 6']
    #allocation24 [shape = 'u8[1024]{0}', space=vmem, size = 0x400, scoped, tag = 'input window, operand 7']
    #allocation25 [shape = 's32[2]{0}', space=sflag, size = 0x8, scoped, tag = 'scoped memory for aim_forward.2']
    #allocation26 [shape = 'u8[16384]{0}', space=vmem, size = 0x4000, scoped, tag = 'input window, operand 8']
    #allocation27 [shape = 'u8[1024]{0}', space=vmem, size = 0x400, scoped, tag = 'input window, operand 9']
    #allocation28 [shape = 's32[2]{0}', space=sflag, size = 0x8, scoped, tag = 'scoped memory for aim_forward.2']
    #allocation29 [shape = 'u8[32768]{0}', space=vmem, size = 0x8000, scoped, tag = 'input window, operand 10']
    #allocation30 [shape = 'u8[24576]{0}', space=vmem, size = 0x6000, scoped, tag = 'output window, operand 0']
    %16 = vsyncpa [#allocation13], 0
    %s17 = scalar_lea.sflag [#allocation13], 1
    %18 = vsyncpa %s17, 0
    %19 = vsyncpa [#allocation16], 0
    %s20 = scalar_lea.sflag [#allocation16], 1
    %21 = vsyncpa %s20, 0
    %22 = vsyncpa [#allocation19], 0
    %s23 = scalar_lea.sflag [#allocation19], 1
    %24 = vsyncpa %s23, 0
    %25 = vsyncpa [#allocation22], 0
    %s26 = scalar_lea.sflag [#allocation22], 1
    %27 = vsyncpa %s26, 0
    %28 = vsyncpa [#allocation25], 0
    %s29 = scalar_lea.sflag [#allocation25], 1
    %30 = vsyncpa %s29, 0
    %31 = vsyncpa [#allocation28], 0
    %s32 = scalar_lea.sflag [#allocation28], 1
    %33 = vsyncpa %s32, 0
    %34 = vsyncpa [#allocation14], 0
    %s35 = scalar_lea.sflag [#allocation14], 1
    %36 = vsyncpa %s35, 0
    loop: start=0, step=1, limit=6
    $region2: #{aim_forward.2} parent=1 // loop_pre_header
      _
    $region3: #{aim_forward.2} parent=1 // loop_header
      %s38 = sphi 0, %s42
      %p39 = scmp.ge.s32.totalorder %s38, 6
      %s45 = sphi 0, %s57
      %s46 = sphi 0, %s53
      %s47 = sphi 0, %s45
      %s48 = sphi 0, %s46
      %s49 = sphi 0, %s47
      %s50 = sphi 0, %s48
      %s60 = sphi 0, %s62
      %s63 = sphi 0, %s60
      %s64 = sphi 0, %s63
      %s80 = sphi 0, %s64
      %s86 = sphi 0, %s88
      %s89 = sphi 0, %s86
      %s90 = sphi 0, %s89
      %s106 = sphi 0, %s90
      %s112 = sphi 0, %s114
      %s115 = sphi 0, %s112
      %s116 = sphi 0, %s115
      %s132 = sphi 0, %s116
      %s138 = sphi 0, %s140
      %s141 = sphi 0, %s138
      %s142 = sphi 0, %s141
      %s158 = sphi 0, %s142
      %s164 = sphi 0, %s166
      %s167 = sphi 0, %s164
      %s168 = sphi 0, %s167
      %s184 = sphi 0, %s168
      %s190 = sphi 0, %s192
      %s193 = sphi 0, %s190
      %s194 = sphi 0, %s193
      %s210 = sphi 0, %s194
      %s216 = sphi 0, %s218
      %s219 = sphi 0, %s216
      %s220 = sphi 0, %s219
      %s236 = sphi 0, %s220
      %s242 = sphi 0, %s244
      %s245 = sphi 0, %s242
      %s246 = sphi 0, %s245
      %s262 = sphi 0, %s246
      %s268 = sphi 0, %s270
      %s271 = sphi 0, %s268
      %s272 = sphi 0, %s271
      %s288 = sphi 0, %s272
      %s294 = sphi 0, %s296
      %s297 = sphi 0, %s294
      %s298 = sphi 0, %s297
      %s314 = sphi 0, %s298
      %s320 = sphi 0, %s322
      %s323 = sphi 0, %s320
      %s324 = sphi 0, %s323
      %s340 = sphi 0, %s324
      %s346 = sphi 0, %s348
      %s349 = sphi 0, %s346
      %s350 = sphi 0, %s349
      %s366 = sphi 0, %s350
    $region4: #{aim_forward.2} parent=1 // loop_header_branch
      %41 = sbr.rel (%p39) target = $region8
    $region5: #{aim_forward.2} parent=1 // loop_body
      %s43 = ssub.s32 %s38, 1
      %s44 = ssub.s32 %s38, 2
      %s51 = sadd.s32 1, %s46
      %p52 = scmp.ge.s32.totalorder %s51, 2
      %s53 = scalar_select %p52, 0, %s51
      %s54 = sadd.s32 1, %s45
      %s55 = scalar_select %p52, %s54, %s45
      %p56 = scmp.ge.s32.totalorder %s55, 2
      %s57 = scalar_select %p56, 0, %s55
      %s58 = ssub.s32 %s45, %s57
      %p59 = scmp.eq.s32.totalorder %s58, 0
      %s61 = sadd.s32 %s60, 1
      %s62 = scalar_select %p59, %s60, %s61
      %p65 = pneg %p59
      %p66 = scmp.eq.s32.totalorder %s38, 3
      %p67 = por %p65, %p66
      %p68 = scmp.ne.s32.totalorder %s60, %s63
      %p69 = scmp.eq.s32.totalorder %s38, 0
      %p70 = por %p68, %p69
      %p71 = scmp.ne.s32.totalorder %s60, %s63
      %p72 = scmp.eq.s32.totalorder %s43, 3
      %p73 = por %p71, %p72
      %p74 = scmp.ne.s32.totalorder %s63, %s64
      %p75 = scmp.eq.s32.totalorder %s43, 0
      %p76 = por %p74, %p75
      %p77 = scmp.ne.s32.totalorder %s63, %s64
      %p78 = scmp.eq.s32.totalorder %s44, 3
      %p79 = por %p77, %p78
      %p81 = scmp.ne.s32.totalorder %s64, %s80
      %p82 = scmp.eq.s32.totalorder %s44, 0
      %p83 = por %p81, %p82
      %s84 = ssub.s32 %s46, %s53
      %p85 = scmp.eq.s32.totalorder %s84, 0
      %s87 = sadd.s32 %s86, 1
      %s88 = scalar_select %p85, %s86, %s87
      %p91 = pneg %p85
      %p92 = scmp.eq.s32.totalorder %s38, 3
      %p93 = por %p91, %p92
      %p94 = scmp.ne.s32.totalorder %s86, %s89
      %p95 = scmp.eq.s32.totalorder %s38, 0
      %p96 = por %p94, %p95
      %p97 = scmp.ne.s32.totalorder %s86, %s89
      %p98 = scmp.eq.s32.totalorder %s43, 3
      %p99 = por %p97, %p98
      %p100 = scmp.ne.s32.totalorder %s89, %s90
      %p101 = scmp.eq.s32.totalorder %s43, 0
      %p102 = por %p100, %p101
      %p103 = scmp.ne.s32.totalorder %s89, %s90
      %p104 = scmp.eq.s32.totalorder %s44, 3
      %p105 = por %p103, %p104
      %p107 = scmp.ne.s32.totalorder %s90, %s106
      %p108 = scmp.eq.s32.totalorder %s44, 0
      %p109 = por %p107, %p108
      %s110 = ssub.s32 %s46, %s53
      %p111 = scmp.eq.s32.totalorder %s110, 0
      %s113 = sadd.s32 %s112, 1
      %s114 = scalar_select %p111, %s112, %s113
      %p117 = pneg %p111
      %p118 = scmp.eq.s32.totalorder %s38, 3
      %p119 = por %p117, %p118
      %p120 = scmp.ne.s32.totalorder %s112, %s115
      %p121 = scmp.eq.s32.totalorder %s38, 0
      %p122 = por %p120, %p121
      %p123 = scmp.ne.s32.totalorder %s112, %s115
      %p124 = scmp.eq.s32.totalorder %s43, 3
      %p125 = por %p123, %p124
      %p126 = scmp.ne.s32.totalorder %s115, %s116
      %p127 = scmp.eq.s32.totalorder %s43, 0
      %p128 = por %p126, %p127
      %p129 = scmp.ne.s32.totalorder %s115, %s116
      %p130 = scmp.eq.s32.totalorder %s44, 3
      %p131 = por %p129, %p130
      %p133 = scmp.ne.s32.totalorder %s116, %s132
      %p134 = scmp.eq.s32.totalorder %s44, 0
      %p135 = por %p133, %p134
      %s136 = ssub.s32 %s46, %s53
      %p137 = scmp.eq.s32.totalorder %s136, 0
      %s139 = sadd.s32 %s138, 1
      %s140 = scalar_select %p137, %s138, %s139
      %p143 = pneg %p137
      %p144 = scmp.eq.s32.totalorder %s38, 3
      %p145 = por %p143, %p144
      %p146 = scmp.ne.s32.totalorder %s138, %s141
      %p147 = scmp.eq.s32.totalorder %s38, 0
      %p148 = por %p146, %p147
      %p149 = scmp.ne.s32.totalorder %s138, %s141
      %p150 = scmp.eq.s32.totalorder %s43, 3
      %p151 = por %p149, %p150
      %p152 = scmp.ne.s32.totalorder %s141, %s142
      %p153 = scmp.eq.s32.totalorder %s43, 0
      %p154 = por %p152, %p153
      %p155 = scmp.ne.s32.totalorder %s141, %s142
      %p156 = scmp.eq.s32.totalorder %s44, 3
      %p157 = por %p155, %p156
      %p159 = scmp.ne.s32.totalorder %s142, %s158
      %p160 = scmp.eq.s32.totalorder %s44, 0
      %p161 = por %p159, %p160
      %s162 = ssub.s32 %s46, %s53
      %p163 = scmp.eq.s32.totalorder %s162, 0
      %s165 = sadd.s32 %s164, 1
      %s166 = scalar_select %p163, %s164, %s165
      %p169 = pneg %p163
      %p170 = scmp.eq.s32.totalorder %s38, 3
      %p171 = por %p169, %p170
      %p172 = scmp.ne.s32.totalorder %s164, %s167
      %p173 = scmp.eq.s32.totalorder %s38, 0
      %p174 = por %p172, %p173
      %p175 = scmp.ne.s32.totalorder %s164, %s167
      %p176 = scmp.eq.s32.totalorder %s43, 3
      %p177 = por %p175, %p176
      %p178 = scmp.ne.s32.totalorder %s167, %s168
      %p179 = scmp.eq.s32.totalorder %s43, 0
      %p180 = por %p178, %p179
      %p181 = scmp.ne.s32.totalorder %s167, %s168
      %p182 = scmp.eq.s32.totalorder %s44, 3
      %p183 = por %p181, %p182
      %p185 = scmp.ne.s32.totalorder %s168, %s184
      %p186 = scmp.eq.s32.totalorder %s44, 0
      %p187 = por %p185, %p186
      %s188 = ssub.s32 %s46, %s53
      %p189 = scmp.eq.s32.totalorder %s188, 0
      %s191 = sadd.s32 %s190, 1
      %s192 = scalar_select %p189, %s190, %s191
      %p195 = pneg %p189
      %p196 = scmp.eq.s32.totalorder %s38, 3
      %p197 = por %p195, %p196
      %p198 = scmp.ne.s32.totalorder %s190, %s193
      %p199 = scmp.eq.s32.totalorder %s38, 0
      %p200 = por %p198, %p199
      %p201 = scmp.ne.s32.totalorder %s190, %s193
      %p202 = scmp.eq.s32.totalorder %s43, 3
      %p203 = por %p201, %p202
      %p204 = scmp.ne.s32.totalorder %s193, %s194
      %p205 = scmp.eq.s32.totalorder %s43, 0
      %p206 = por %p204, %p205
      %p207 = scmp.ne.s32.totalorder %s193, %s194
      %p208 = scmp.eq.s32.totalorder %s44, 3
      %p209 = por %p207, %p208
      %p211 = scmp.ne.s32.totalorder %s194, %s210
      %p212 = scmp.eq.s32.totalorder %s44, 0
      %p213 = por %p211, %p212
      %s214 = ssub.s32 %s46, %s53
      %p215 = scmp.eq.s32.totalorder %s214, 0
      %s217 = sadd.s32 %s216, 1
      %s218 = scalar_select %p215, %s216, %s217
      %p221 = pneg %p215
      %p222 = scmp.eq.s32.totalorder %s38, 3
      %p223 = por %p221, %p222
      %p224 = scmp.ne.s32.totalorder %s216, %s219
      %p225 = scmp.eq.s32.totalorder %s38, 0
      %p226 = por %p224, %p225
      %p227 = scmp.ne.s32.totalorder %s216, %s219
      %p228 = scmp.eq.s32.totalorder %s43, 3
      %p229 = por %p227, %p228
      %p230 = scmp.ne.s32.totalorder %s219, %s220
      %p231 = scmp.eq.s32.totalorder %s43, 0
      %p232 = por %p230, %p231
      %p233 = scmp.ne.s32.totalorder %s219, %s220
      %p234 = scmp.eq.s32.totalorder %s44, 3
      %p235 = por %p233, %p234
      %p237 = scmp.ne.s32.totalorder %s220, %s236
      %p238 = scmp.eq.s32.totalorder %s44, 0
      %p239 = por %p237, %p238
      %s240 = ssub.s32 %s46, %s53
      %p241 = scmp.eq.s32.totalorder %s240, 0
      %s243 = sadd.s32 %s242, 1
      %s244 = scalar_select %p241, %s242, %s243
      %p247 = pneg %p241
      %p248 = scmp.eq.s32.totalorder %s38, 3
      %p249 = por %p247, %p248
      %p250 = scmp.ne.s32.totalorder %s242, %s245
      %p251 = scmp.eq.s32.totalorder %s38, 0
      %p252 = por %p250, %p251
      %p253 = scmp.ne.s32.totalorder %s242, %s245
      %p254 = scmp.eq.s32.totalorder %s43, 3
      %p255 = por %p253, %p254
      %p256 = scmp.ne.s32.totalorder %s245, %s246
      %p257 = scmp.eq.s32.totalorder %s43, 0
      %p258 = por %p256, %p257
      %p259 = scmp.ne.s32.totalorder %s245, %s246
      %p260 = scmp.eq.s32.totalorder %s44, 3
      %p261 = por %p259, %p260
      %p263 = scmp.ne.s32.totalorder %s246, %s262
      %p264 = scmp.eq.s32.totalorder %s44, 0
      %p265 = por %p263, %p264
      %s266 = ssub.s32 %s46, %s53
      %p267 = scmp.eq.s32.totalorder %s266, 0
      %s269 = sadd.s32 %s268, 1
      %s270 = scalar_select %p267, %s268, %s269
      %p273 = pneg %p267
      %p274 = scmp.eq.s32.totalorder %s38, 3
      %p275 = por %p273, %p274
      %p276 = scmp.ne.s32.totalorder %s268, %s271
      %p277 = scmp.eq.s32.totalorder %s38, 0
      %p278 = por %p276, %p277
      %p279 = scmp.ne.s32.totalorder %s268, %s271
      %p280 = scmp.eq.s32.totalorder %s43, 3
      %p281 = por %p279, %p280
      %p282 = scmp.ne.s32.totalorder %s271, %s272
      %p283 = scmp.eq.s32.totalorder %s43, 0
      %p284 = por %p282, %p283
      %p285 = scmp.ne.s32.totalorder %s271, %s272
      %p286 = scmp.eq.s32.totalorder %s44, 3
      %p287 = por %p285, %p286
      %p289 = scmp.ne.s32.totalorder %s272, %s288
      %p290 = scmp.eq.s32.totalorder %s44, 0
      %p291 = por %p289, %p290
      %s292 = ssub.s32 %s46, %s53
      %p293 = scmp.eq.s32.totalorder %s292, 0
      %s295 = sadd.s32 %s294, 1
      %s296 = scalar_select %p293, %s294, %s295
      %p299 = pneg %p293
      %p300 = scmp.eq.s32.totalorder %s38, 3
      %p301 = por %p299, %p300
      %p302 = scmp.ne.s32.totalorder %s294, %s297
      %p303 = scmp.eq.s32.totalorder %s38, 0
      %p304 = por %p302, %p303
      %p305 = scmp.ne.s32.totalorder %s294, %s297
      %p306 = scmp.eq.s32.totalorder %s43, 3
      %p307 = por %p305, %p306
      %p308 = scmp.ne.s32.totalorder %s297, %s298
      %p309 = scmp.eq.s32.totalorder %s43, 0
      %p310 = por %p308, %p309
      %p311 = scmp.ne.s32.totalorder %s297, %s298
      %p312 = scmp.eq.s32.totalorder %s44, 3
      %p313 = por %p311, %p312
      %p315 = scmp.ne.s32.totalorder %s298, %s314
      %p316 = scmp.eq.s32.totalorder %s44, 0
      %p317 = por %p315, %p316
      %s318 = ssub.s32 %s46, %s53
      %p319 = scmp.eq.s32.totalorder %s318, 0
      %s321 = sadd.s32 %s320, 1
      %s322 = scalar_select %p319, %s320, %s321
      %p325 = pneg %p319
      %p326 = scmp.eq.s32.totalorder %s38, 3
      %p327 = por %p325, %p326
      %p328 = scmp.ne.s32.totalorder %s320, %s323
      %p329 = scmp.eq.s32.totalorder %s38, 0
      %p330 = por %p328, %p329
      %p331 = scmp.ne.s32.totalorder %s320, %s323
      %p332 = scmp.eq.s32.totalorder %s43, 3
      %p333 = por %p331, %p332
      %p334 = scmp.ne.s32.totalorder %s323, %s324
      %p335 = scmp.eq.s32.totalorder %s43, 0
      %p336 = por %p334, %p335
      %p337 = scmp.ne.s32.totalorder %s323, %s324
      %p338 = scmp.eq.s32.totalorder %s44, 3
      %p339 = por %p337, %p338
      %p341 = scmp.ne.s32.totalorder %s324, %s340
      %p342 = scmp.eq.s32.totalorder %s44, 0
      %p343 = por %p341, %p342
      %s344 = ssub.s32 %s45, %s57
      %p345 = scmp.eq.s32.totalorder %s344, 0
      %s347 = sadd.s32 %s346, 1
      %s348 = scalar_select %p345, %s346, %s347
      %p351 = pneg %p345
      %p352 = scmp.eq.s32.totalorder %s38, 3
      %p353 = por %p351, %p352
      %p354 = scmp.ne.s32.totalorder %s346, %s349
      %p355 = scmp.eq.s32.totalorder %s38, 0
      %p356 = por %p354, %p355
      %p357 = scmp.ne.s32.totalorder %s346, %s349
      %p358 = scmp.eq.s32.totalorder %s43, 3
      %p359 = por %p357, %p358
      %p360 = scmp.ne.s32.totalorder %s349, %s350
      %p361 = scmp.eq.s32.totalorder %s43, 0
      %p362 = por %p360, %p361
      %p363 = scmp.ne.s32.totalorder %s349, %s350
      %p364 = scmp.eq.s32.totalorder %s44, 3
      %p365 = por %p363, %p364
      %p367 = scmp.ne.s32.totalorder %s350, %s366
      %p368 = scmp.eq.s32.totalorder %s44, 0
      %p369 = por %p367, %p368
      %p370 = scmp.le.s32.totalorder 1, %s38
      %p371 = scmp.lt.s32.totalorder %s38, 5
      %p372 = pnand %p370, %p371
      %p373 = pneg %p372
      // Predicated region
      $region9: #{aim_forward.2} parent=5 // pred_check
        _
      $region10: #{aim_forward.2} parent=5 // pred_check_branch
        %375 = sbr.rel (%p372) target = $region12
      $region11: #{aim_forward.2} parent=5 // pred_region
        %s376 = ssub.s32 %s38, 1
      $region12: #{aim_forward.2} parent=5 // pred_fallthru
        _
      %p377 = scmp.lt.s32.totalorder %s38, 4
      // Predicated region
      $region13: #{aim_forward.2} parent=5 // pred_check
        %p378 = pneg %p377
      $region14: #{aim_forward.2} parent=5 // pred_check_branch
        %380 = sbr.rel (%p378) target = $region16
      $region15: #{aim_forward.2} parent=5 // pred_region
        // Predicated region
        $region17: #{aim_forward.2} parent=15 // pred_check
          %p381 = pneg %p70
        $region18: #{aim_forward.2} parent=15 // pred_check_branch
          %383 = sbr.rel (%p381) target = $region20
        $region19: #{aim_forward.2} parent=15 // pred_region
          %s384 = sand.u32 %s60, 1
          %s385 = scalar_lea.sflag [#allocation13], %s384
          %s386 = sand.u32 %s60, 1
          %s387 = smul.addr %s386, 48
          %s388 = scalar_lea.vmem [#allocation12], %s387
          %s389 = smul.u32 2, %s45
          %s391 = ssub.s32 768, 768
          %392 = vsyncadd %s385, %s391
          %s393 = smul.addr %s389, 3
          %s394 = smul.addr %s393, 128
          %s395 = scalar_lea.hbm %s0, %s394
          %s396 = sshll.u32 %s388, 4
          %s397 = int_to_ptr.vmem [resolvable:$true] %s396
          %402 = dma.hbm_to_vmem [thread:$0]  %s395, 768, %s397, %s385, 128, 128, 8
        $region20: #{aim_forward.2} parent=15 // pred_fallthru
          _
        // Predicated region
        $region21: #{aim_forward.2} parent=15 // pred_check
          %p403 = pneg %p96
        $region22: #{aim_forward.2} parent=15 // pred_check_branch
          %405 = sbr.rel (%p403) target = $region24
        $region23: #{aim_forward.2} parent=15 // pred_region
          %s406 = sand.u32 %s38, 1
          %s407 = scalar_lea.sflag [#allocation16], %s406
          %s408 = sand.u32 %s86, 1
          %s409 = scalar_lea.vmem [#allocation15], %s408
          %s411 = ssub.s32 16, 16
          %412 = vsyncadd %s407, %s411
          %s413 = smul.addr %s46, 16
          %s414 = scalar_lea.hbm %s1, %s413
          %s416 = sshll.u32 %s409, 4
          %s417 = int_to_ptr.vmem [resolvable:$true] %s416
          %419 = dma.hbm_to_vmem [thread:$0]  %s414, 16, %s417, %s407
        $region24: #{aim_forward.2} parent=15 // pred_fallthru
          _
        // Predicated region
        $region25: #{aim_forward.2} parent=15 // pred_check
          %p420 = pneg %p122
        $region26: #{aim_forward.2} parent=15 // pred_check_branch
          %422 = sbr.rel (%p420) target = $region28
        $region27: #{aim_forward.2} parent=15 // pred_region
          %s423 = sand.u32 %s38, 1
          %s424 = scalar_lea.sflag [#allocation16], %s423
          %s425 = sand.u32 %s112, 1
          %s426 = smul.addr %s425, 16
          %s427 = scalar_lea.vmem [#allocation17], %s426
          %s429 = ssub.s32 256, 256
          %430 = vsyncadd %s424, %s429
          %s431 = smul.addr %s46, 4
          %s432 = smul.addr %s431, 64
          %s433 = scalar_lea.hbm %s2, %s432
          %s434 = sshll.u32 %s427, 4
          %s435 = int_to_ptr.vmem [resolvable:$true] %s434
          %440 = dma.hbm_to_vmem [thread:$0]  %s433, 256, %s435, %s424, 64, 64, 4
        $region28: #{aim_forward.2} parent=15 // pred_fallthru
          _
        // Predicated region
        $region29: #{aim_forward.2} parent=15 // pred_check
          %p441 = pneg %p148
        $region30: #{aim_forward.2} parent=15 // pred_check_branch
          %443 = sbr.rel (%p441) target = $region32
        $region31: #{aim_forward.2} parent=15 // pred_region
          %s444 = sand.u32 %s38, 1
          %s445 = scalar_lea.sflag [#allocation19], %s444
          %s446 = sand.u32 %s138, 1
          %s447 = smul.addr %s446, 4
          %s448 = scalar_lea.vmem [#allocation18], %s447
          %s450 = ssub.s32 64, 64
          %451 = vsyncadd %s445, %s450
          %s452 = smul.addr %s46, 64
          %s453 = scalar_lea.hbm %s3, %s452
          %s455 = sshll.u32 %s448, 4
          %s456 = int_to_ptr.vmem [resolvable:$true] %s455
          %458 = dma.hbm_to_vmem [thread:$0]  %s453, 64, %s456, %s445
        $region32: #{aim_forward.2} parent=15 // pred_fallthru
          _
        // Predicated region
        $region33: #{aim_forward.2} parent=15 // pred_check
          %p459 = pneg %p174
        $region34: #{aim_forward.2} parent=15 // pred_check_branch
          %461 = sbr.rel (%p459) target = $region36
        $region35: #{aim_forward.2} parent=15 // pred_region
          %s462 = sand.u32 %s38, 1
          %s463 = scalar_lea.sflag [#allocation19], %s462
          %s464 = sand.u32 %s164, 1
          %s465 = scalar_lea.vmem [#allocation20], %s464
          %s467 = ssub.s32 16, 16
          %468 = vsyncadd %s463, %s467
          %s469 = smul.addr %s46, 16
          %s470 = scalar_lea.hbm %s4, %s469
          %s472 = sshll.u32 %s465, 4
          %s473 = int_to_ptr.vmem [resolvable:$true] %s472
          %475 = dma.hbm_to_vmem [thread:$0]  %s470, 16, %s473, %s463
        $region36: #{aim_forward.2} parent=15 // pred_fallthru
          _
        // Predicated region
        $region37: #{aim_forward.2} parent=15 // pred_check
          %p476 = pneg %p200
        $region38: #{aim_forward.2} parent=15 // pred_check_branch
          %478 = sbr.rel (%p476) target = $region40
        $region39: #{aim_forward.2} parent=15 // pred_region
          %s479 = sand.u32 %s38, 1
          %s480 = scalar_lea.sflag [#allocation22], %s479
          %s481 = sand.u32 %s190, 1
          %s482 = smul.addr %s481, 96
          %s483 = scalar_lea.vmem [#allocation21], %s482
          %s485 = ssub.s32 1536, 1536
          %486 = vsyncadd %s480, %s485
          %s487 = smul.addr %s46, 24
          %s488 = smul.addr %s487, 64
          %s489 = scalar_lea.hbm %s5, %s488
          %s490 = sshll.u32 %s483, 4
          %s491 = int_to_ptr.vmem [resolvable:$true] %s490
          %496 = dma.hbm_to_vmem [thread:$0]  %s489, 1536, %s491, %s480, 192, 192, 12
        $region40: #{aim_forward.2} parent=15 // pred_fallthru
          _
        // Predicated region
        $region41: #{aim_forward.2} parent=15 // pred_check
          %p497 = pneg %p226
        $region42: #{aim_forward.2} parent=15 // pred_check_branch
          %499 = sbr.rel (%p497) target = $region44
        $region43: #{aim_forward.2} parent=15 // pred_region
          %s500 = sand.u32 %s38, 1
          %s501 = scalar_lea.sflag [#allocation22], %s500
          %s502 = sand.u32 %s216, 1
          %s503 = smul.addr %s502, 64
          %s504 = scalar_lea.vmem [#allocation23], %s503
          %s506 = ssub.s32 1024, 1024
          %507 = vsyncadd %s501, %s506
          %s508 = smul.addr %s46, 16
          %s509 = smul.addr %s508, 64
          %s510 = scalar_lea.hbm %s6, %s509
          %s511 = sshll.u32 %s504, 4
          %s512 = int_to_ptr.vmem [resolvable:$true] %s511
          %517 = dma.hbm_to_vmem [thread:$0]  %s510, 1024, %s512, %s501, 64, 64, 4
        $region44: #{aim_forward.2} parent=15 // pred_fallthru
          _
        // Predicated region
        $region45: #{aim_forward.2} parent=15 // pred_check
          %p518 = pneg %p252
        $region46: #{aim_forward.2} parent=15 // pred_check_branch
          %520 = sbr.rel (%p518) target = $region48
        $region47: #{aim_forward.2} parent=15 // pred_region
          %s521 = sand.u32 %s38, 1
          %s522 = scalar_lea.sflag [#allocation25], %s521
          %s523 = sand.u32 %s242, 1
          %s524 = scalar_lea.vmem [#allocation24], %s523
          %s526 = ssub.s32 16, 16
          %527 = vsyncadd %s522, %s526
          %s528 = smul.addr %s46, 16
          %s529 = scalar_lea.hbm %s7, %s528
          %s531 = sshll.u32 %s524, 4
          %s532 = int_to_ptr.vmem [resolvable:$true] %s531
          %534 = dma.hbm_to_vmem [thread:$0]  %s529, 16, %s532, %s522
        $region48: #{aim_forward.2} parent=15 // pred_fallthru
          _
        // Predicated region
        $region49: #{aim_forward.2} parent=15 // pred_check
          %p535 = pneg %p278
        $region50: #{aim_forward.2} parent=15 // pred_check_branch
          %537 = sbr.rel (%p535) target = $region52
        $region51: #{aim_forward.2} parent=15 // pred_region
          %s538 = sand.u32 %s38, 1
          %s539 = scalar_lea.sflag [#allocation25], %s538
          %s540 = sand.u32 %s268, 1
          %s541 = smul.addr %s540, 16
          %s542 = scalar_lea.vmem [#allocation26], %s541
          %s544 = ssub.s32 256, 256
          %545 = vsyncadd %s539, %s544
          %s546 = smul.addr %s46, 2
          %s547 = smul.addr %s546, 128
          %s548 = scalar_lea.hbm %s8, %s547
          %s549 = sshll.u32 %s542, 4
          %s550 = int_to_ptr.vmem [resolvable:$true] %s549
          %555 = dma.hbm_to_vmem [thread:$0]  %s548, 256, %s550, %s539, 128, 128, 8
        $region52: #{aim_forward.2} parent=15 // pred_fallthru
          _
        // Predicated region
        $region53: #{aim_forward.2} parent=15 // pred_check
          %p556 = pneg %p304
        $region54: #{aim_forward.2} parent=15 // pred_check_branch
          %558 = sbr.rel (%p556) target = $region56
        $region55: #{aim_forward.2} parent=15 // pred_region
          %s559 = sand.u32 %s38, 1
          %s560 = scalar_lea.sflag [#allocation28], %s559
          %s561 = sand.u32 %s294, 1
          %s562 = scalar_lea.vmem [#allocation27], %s561
          %s564 = ssub.s32 16, 16
          %565 = vsyncadd %s560, %s564
          %s566 = smul.addr %s46, 16
          %s567 = scalar_lea.hbm %s9, %s566
          %s569 = sshll.u32 %s562, 4
          %s570 = int_to_ptr.vmem [resolvable:$true] %s569
          %572 = dma.hbm_to_vmem [thread:$0]  %s567, 16, %s570, %s560
        $region56: #{aim_forward.2} parent=15 // pred_fallthru
          _
        // Predicated region
        $region57: #{aim_forward.2} parent=15 // pred_check
          %p573 = pneg %p330
        $region58: #{aim_forward.2} parent=15 // pred_check_branch
          %575 = sbr.rel (%p573) target = $region60
        $region59: #{aim_forward.2} parent=15 // pred_region
          %s576 = sand.u32 %s38, 1
          %s577 = scalar_lea.sflag [#allocation28], %s576
          %s578 = sand.u32 %s320, 1
          %s579 = smul.addr %s578, 32
          %s580 = scalar_lea.vmem [#allocation29], %s579
          %s582 = ssub.s32 512, 512
          %583 = vsyncadd %s577, %s582
          %s584 = smul.addr %s46, 8
          %s585 = smul.addr %s584, 64
          %s586 = scalar_lea.hbm %s10, %s585
          %s587 = sshll.u32 %s580, 4
          %s588 = int_to_ptr.vmem [resolvable:$true] %s587
          %593 = dma.hbm_to_vmem [thread:$0]  %s586, 512, %s588, %s577, 64, 64, 4
        $region60: #{aim_forward.2} parent=15 // pred_fallthru
          _
      $region16: #{aim_forward.2} parent=5 // pred_fallthru
        _
      %p594 = scmp.le.s32.totalorder 1, %s38
      %p595 = scmp.lt.s32.totalorder %s38, 5
      %p596 = pnand %p594, %p595
      %p597 = pneg %p596
      // Predicated region
      $region61: #{aim_forward.2} parent=5 // pred_check
        _
      $region62: #{aim_forward.2} parent=5 // pred_check_branch
        %599 = sbr.rel (%p596) target = $region64
      $region63: #{aim_forward.2} parent=5 // pred_region
        %s600 = ssub.s32 %s38, 1
        %s601 = sand.u32 %s63, 1
        %s602 = scalar_lea.sflag [#allocation13], %s601
        %s603 = sand.u32 %s63, 1
        %s604 = smul.addr %s603, 48
        %s605 = scalar_lea.vmem [#allocation12], %s604
        // Predicated region
        $region65: #{aim_forward.2} parent=63 // pred_check
          %p606 = pneg %p76
        $region66: #{aim_forward.2} parent=63 // pred_check_branch
          %608 = sbr.rel (%p606) target = $region68
        $region67: #{aim_forward.2} parent=63 // pred_region
          %609 = dma.done %s602, 768
        $region68: #{aim_forward.2} parent=63 // pred_fallthru
          _
        %s610 = sand.u32 %s43, 1
        %s611 = scalar_lea.sflag [#allocation16], %s610
        %s612 = sand.u32 %s89, 1
        %s613 = scalar_lea.vmem [#allocation15], %s612
        // Predicated region
        $region69: #{aim_forward.2} parent=63 // pred_check
          %p614 = pneg %p102
        $region70: #{aim_forward.2} parent=63 // pred_check_branch
          %616 = sbr.rel (%p614) target = $region72
        $region71: #{aim_forward.2} parent=63 // pred_region
          %617 = dma.done %s611, 16
        $region72: #{aim_forward.2} parent=63 // pred_fallthru
          _
        %s618 = sand.u32 %s43, 1
        %s619 = scalar_lea.sflag [#allocation16], %s618
        %s620 = sand.u32 %s115, 1
        %s621 = smul.addr %s620, 16
        %s622 = scalar_lea.vmem [#allocation17], %s621
        // Predicated region
        $region73: #{aim_forward.2} parent=63 // pred_check
          %p623 = pneg %p128
        $region74: #{aim_forward.2} parent=63 // pred_check_branch
          %625 = sbr.rel (%p623) target = $region76
        $region75: #{aim_forward.2} parent=63 // pred_region
          %626 = dma.done %s619, 256
        $region76: #{aim_forward.2} parent=63 // pred_fallthru
          _
        %s627 = sand.u32 %s43, 1
        %s628 = scalar_lea.sflag [#allocation19], %s627
        %s629 = sand.u32 %s141, 1
        %s630 = smul.addr %s629, 4
        %s631 = scalar_lea.vmem [#allocation18], %s630
        // Predicated region
        $region77: #{aim_forward.2} parent=63 // pred_check
          %p632 = pneg %p154
        $region78: #{aim_forward.2} parent=63 // pred_check_branch
          %634 = sbr.rel (%p632) target = $region80
        $region79: #{aim_forward.2} parent=63 // pred_region
          %635 = dma.done %s628, 64
        $region80: #{aim_forward.2} parent=63 // pred_fallthru
          _
        %s636 = sand.u32 %s43, 1
        %s637 = scalar_lea.sflag [#allocation19], %s636
        %s638 = sand.u32 %s167, 1
        %s639 = scalar_lea.vmem [#allocation20], %s638
        // Predicated region
        $region81: #{aim_forward.2} parent=63 // pred_check
          %p640 = pneg %p180
        $region82: #{aim_forward.2} parent=63 // pred_check_branch
          %642 = sbr.rel (%p640) target = $region84
        $region83: #{aim_forward.2} parent=63 // pred_region
          %643 = dma.done %s637, 16
        $region84: #{aim_forward.2} parent=63 // pred_fallthru
          _
        %s644 = sand.u32 %s43, 1
        %s645 = scalar_lea.sflag [#allocation22], %s644
        %s646 = sand.u32 %s193, 1
        %s647 = smul.addr %s646, 96
        %s648 = scalar_lea.vmem [#allocation21], %s647
        // Predicated region
        $region85: #{aim_forward.2} parent=63 // pred_check
          %p649 = pneg %p206
        $region86: #{aim_forward.2} parent=63 // pred_check_branch
          %651 = sbr.rel (%p649) target = $region88
        $region87: #{aim_forward.2} parent=63 // pred_region
          %652 = dma.done %s645, 1536
        $region88: #{aim_forward.2} parent=63 // pred_fallthru
          _
        %s653 = sand.u32 %s43, 1
        %s654 = scalar_lea.sflag [#allocation22], %s653
        %s655 = sand.u32 %s219, 1
        %s656 = smul.addr %s655, 64
        %s657 = scalar_lea.vmem [#allocation23], %s656
        // Predicated region
        $region89: #{aim_forward.2} parent=63 // pred_check
          %p658 = pneg %p232
        $region90: #{aim_forward.2} parent=63 // pred_check_branch
          %660 = sbr.rel (%p658) target = $region92
        $region91: #{aim_forward.2} parent=63 // pred_region
          %661 = dma.done %s654, 1024
        $region92: #{aim_forward.2} parent=63 // pred_fallthru
          _
        %s662 = sand.u32 %s43, 1
        %s663 = scalar_lea.sflag [#allocation25], %s662
        %s664 = sand.u32 %s245, 1
        %s665 = scalar_lea.vmem [#allocation24], %s664
        // Predicated region
        $region93: #{aim_forward.2} parent=63 // pred_check
          %p666 = pneg %p258
        $region94: #{aim_forward.2} parent=63 // pred_check_branch
          %668 = sbr.rel (%p666) target = $region96
        $region95: #{aim_forward.2} parent=63 // pred_region
          %669 = dma.done %s663, 16
        $region96: #{aim_forward.2} parent=63 // pred_fallthru
          _
        %s670 = sand.u32 %s43, 1
        %s671 = scalar_lea.sflag [#allocation25], %s670
        %s672 = sand.u32 %s271, 1
        %s673 = smul.addr %s672, 16
        %s674 = scalar_lea.vmem [#allocation26], %s673
        // Predicated region
        $region97: #{aim_forward.2} parent=63 // pred_check
          %p675 = pneg %p284
        $region98: #{aim_forward.2} parent=63 // pred_check_branch
          %677 = sbr.rel (%p675) target = $region100
        $region99: #{aim_forward.2} parent=63 // pred_region
          %678 = dma.done %s671, 256
        $region100: #{aim_forward.2} parent=63 // pred_fallthru
          _
        %s679 = sand.u32 %s43, 1
        %s680 = scalar_lea.sflag [#allocation28], %s679
        %s681 = sand.u32 %s297, 1
        %s682 = scalar_lea.vmem [#allocation27], %s681
        // Predicated region
        $region101: #{aim_forward.2} parent=63 // pred_check
          %p683 = pneg %p310
        $region102: #{aim_forward.2} parent=63 // pred_check_branch
          %685 = sbr.rel (%p683) target = $region104
        $region103: #{aim_forward.2} parent=63 // pred_region
          %686 = dma.done %s680, 16
        $region104: #{aim_forward.2} parent=63 // pred_fallthru
          _
        %s687 = sand.u32 %s43, 1
        %s688 = scalar_lea.sflag [#allocation28], %s687
        %s689 = sand.u32 %s323, 1
        %s690 = smul.addr %s689, 32
        %s691 = scalar_lea.vmem [#allocation29], %s690
        // Predicated region
        $region105: #{aim_forward.2} parent=63 // pred_check
          %p692 = pneg %p336
        $region106: #{aim_forward.2} parent=63 // pred_check_branch
          %694 = sbr.rel (%p692) target = $region108
        $region107: #{aim_forward.2} parent=63 // pred_region
          %695 = dma.done %s688, 512
        $region108: #{aim_forward.2} parent=63 // pred_fallthru
          _
        %s696 = sand.u32 %s63, 1
        %s697 = scalar_lea.sflag [#allocation13], %s696
        %s698 = sand.u32 %s63, 1
        %s699 = smul.addr %s698, 48
        %s700 = scalar_lea.vmem [#allocation12], %s699
        %p701 = pneg %p76
        %p702 = pneg %p73
        %s703 = sand.u32 %s43, 1
        %s704 = scalar_lea.sflag [#allocation16], %s703
        %s705 = sand.u32 %s89, 1
        %s706 = scalar_lea.vmem [#allocation15], %s705
        %p707 = pneg %p102
        %p708 = pneg %p99
        %s709 = sand.u32 %s43, 1
        %s710 = scalar_lea.sflag [#allocation16], %s709
        %s711 = sand.u32 %s115, 1
        %s712 = smul.addr %s711, 16
        %s713 = scalar_lea.vmem [#allocation17], %s712
        %p714 = pneg %p128
        %p715 = pneg %p125
        %s716 = sand.u32 %s43, 1
        %s717 = scalar_lea.sflag [#allocation19], %s716
        %s718 = sand.u32 %s141, 1
        %s719 = smul.addr %s718, 4
        %s720 = scalar_lea.vmem [#allocation18], %s719
        %p721 = pneg %p154
        %p722 = pneg %p151
        %s723 = sand.u32 %s43, 1
        %s724 = scalar_lea.sflag [#allocation19], %s723
        %s725 = sand.u32 %s167, 1
        %s726 = scalar_lea.vmem [#allocation20], %s725
        %p727 = pneg %p180
        %p728 = pneg %p177
        %s729 = sand.u32 %s43, 1
        %s730 = scalar_lea.sflag [#allocation22], %s729
        %s731 = sand.u32 %s193, 1
        %s732 = smul.addr %s731, 96
        %s733 = scalar_lea.vmem [#allocation21], %s732
        %p734 = pneg %p206
        %p735 = pneg %p203
        %s736 = sand.u32 %s43, 1
        %s737 = scalar_lea.sflag [#allocation22], %s736
        %s738 = sand.u32 %s219, 1
        %s739 = smul.addr %s738, 64
        %s740 = scalar_lea.vmem [#allocation23], %s739
        %p741 = pneg %p232
        %p742 = pneg %p229
        %s743 = sand.u32 %s43, 1
        %s744 = scalar_lea.sflag [#allocation25], %s743
        %s745 = sand.u32 %s245, 1
        %s746 = scalar_lea.vmem [#allocation24], %s745
        %p747 = pneg %p258
        %p748 = pneg %p255
        %s749 = sand.u32 %s43, 1
        %s750 = scalar_lea.sflag [#allocation25], %s749
        %s751 = sand.u32 %s271, 1
        %s752 = smul.addr %s751, 16
        %s753 = scalar_lea.vmem [#allocation26], %s752
        %p754 = pneg %p284
        %p755 = pneg %p281
        %s756 = sand.u32 %s43, 1
        %s757 = scalar_lea.sflag [#allocation28], %s756
        %s758 = sand.u32 %s297, 1
        %s759 = scalar_lea.vmem [#allocation27], %s758
        %p760 = pneg %p310
        %p761 = pneg %p307
        %s762 = sand.u32 %s43, 1
        %s763 = scalar_lea.sflag [#allocation28], %s762
        %s764 = sand.u32 %s323, 1
        %s765 = smul.addr %s764, 32
        %s766 = scalar_lea.vmem [#allocation29], %s765
        %p767 = pneg %p336
        %p768 = pneg %p333
        %p769 = pneg %p362
        %p770 = pneg %p359
        %s771 = sand.u32 %s349, 1
        %s772 = scalar_lea.sflag [#allocation14], %s771
        %s773 = sand.u32 %s349, 1
        %s774 = smul.addr %s773, 24
        %s775 = scalar_lea.vmem [#allocation30], %s774
        %s776 = smul.u32 2, %s47
        %s777 = smul.u32 2, %s47
        %p779 = scmp.eq.s32.totalorder %s48, 0
        // Predicated region
        $region109: #{aim_forward.2} parent=63 // pred_check
          %p780 = pneg %p779
        $region110: #{aim_forward.2} parent=63 // pred_check_branch
          %782 = sbr.rel (%p780) target = $region112
        $region111: #{aim_forward.2} parent=63 // pred_region
          %v783 = vld [vmem:[%s605] sm:$0xff]
          %v784 = vld [vmem:[%s605 + $0x8] sm:$0xff]
          %v785 = vld [vmem:[%s605 + $0x10] sm:$0xff]
          %v786 = vld [vmem:[%s605 + $0x18] sm:$0xff]
          %v787 = vld [vmem:[%s605 + $0x20] sm:$0xff]
          %v788 = vld [vmem:[%s605 + $0x28] sm:$0xff]
          %vm789 = vcmask 261120
          %790 = vst.msk [vmem:[#allocation2] sm:$0xff] %vm789, %v783
          %791 = vst.msk [vmem:[#allocation2 + $0x8] sm:$0xff] %vm789, %v784
          %792 = vst.msk [vmem:[#allocation2 + $0x10] sm:$0xff] %vm789, %v785
          %793 = vst.msk [vmem:[#allocation2 + $0x18] sm:$0xff] %vm789, %v786
          %794 = vst.msk [vmem:[#allocation2 + $0x20] sm:$0xff] %vm789, %v787
          %795 = vst.msk [vmem:[#allocation2 + $0x28] sm:$0xff] %vm789, %v788
          %796 = vst.msk [vmem:[#allocation3] sm:$0xff] %vm789, 0.0
          %797 = vst.msk [vmem:[#allocation3 + $0x8] sm:$0xff] %vm789, 0.0
          %798 = vst.msk [vmem:[#allocation3 + $0x10] sm:$0xff] %vm789, 0.0
          %799 = vst.msk [vmem:[#allocation3 + $0x18] sm:$0xff] %vm789, 0.0
          %800 = vst.msk [vmem:[#allocation3 + $0x20] sm:$0xff] %vm789, 0.0
          %801 = vst.msk [vmem:[#allocation3 + $0x28] sm:$0xff] %vm789, 0.0
          %vm802 = vcmask 523264
          %803 = vst.msk [vmem:[#allocation4] sm:$0xff] %vm802, 0.0
          %804 = vst.msk [vmem:[#allocation4 + $0x8] sm:$0xff] %vm802, 0.0
          %805 = vst.msk [vmem:[#allocation4 + $0x10] sm:$0xff] %vm802, 0.0
          %vm806 = vcmask 518144
          %807 = vst.msk [vmem:[#allocation4 + $0x18] sm:$0x7] %vm806, 0.0
          %808 = vst.msk [vmem:[#allocation4 + $0x20] sm:$0xff] %vm802, 0.0
          %809 = vst.msk [vmem:[#allocation4 + $0x28] sm:$0xff] %vm802, 0.0
          %810 = vst.msk [vmem:[#allocation4 + $0x30] sm:$0xff] %vm802, 0.0
          %811 = vst.msk [vmem:[#allocation4 + $0x38] sm:$0x7] %vm806, 0.0
        $region112: #{aim_forward.2} parent=63 // pred_fallthru
          _
        %v812 = vld [vmem:[#allocation2] sm:$0xff]
        %v813 = vld [vmem:[#allocation2 + $0x8] sm:$0xff]
        %v814 = vld [vmem:[#allocation2 + $0x10] sm:$0xff]
        %v815 = vld [vmem:[#allocation2 + $0x18] sm:$0xff]
        %v816 = vld [vmem:[#allocation2 + $0x20] sm:$0xff]
        %v817 = vld [vmem:[#allocation2 + $0x28] sm:$0xff]
        %v818 = vld [vmem:[#allocation3] sm:$0xff]
        %v819 = vld [vmem:[#allocation3 + $0x8] sm:$0xff]
        %v820 = vld [vmem:[#allocation3 + $0x10] sm:$0xff]
        %v821 = vld [vmem:[#allocation3 + $0x18] sm:$0xff]
        %v822 = vld [vmem:[#allocation3 + $0x20] sm:$0xff]
        %v823 = vld [vmem:[#allocation3 + $0x28] sm:$0xff]
        %v824 = vadd.f32 %v812, %v818
        %v825 = vadd.f32 %v813, %v819
        %v826 = vadd.f32 %v814, %v820
        %v827 = vadd.f32 %v815, %v821
        %v828 = vadd.f32 %v816, %v822
        %v829 = vadd.f32 %v817, %v823
        %vm830 = vcmask 261120
        %831 = vst.msk [vmem:[#allocation3] sm:$0xff] %vm830, %v824
        %832 = vst.msk [vmem:[#allocation3 + $0x8] sm:$0xff] %vm830, %v825
        %833 = vst.msk [vmem:[#allocation3 + $0x10] sm:$0xff] %vm830, %v826
        %834 = vst.msk [vmem:[#allocation3 + $0x18] sm:$0xff] %vm830, %v827
        %835 = vst.msk [vmem:[#allocation3 + $0x20] sm:$0xff] %vm830, %v828
        %836 = vst.msk [vmem:[#allocation3 + $0x28] sm:$0xff] %vm830, %v829
        %v837 = vmul.f32 %v824, %v824
        %v838 = vmul.f32 %v825, %v825
        %v839 = vmul.f32 %v826, %v826
        %v840 = vmul.f32 %v827, %v827
        %v841 = vmul.f32 %v828, %v828
        %v842 = vmul.f32 %v829, %v829
        %v843 = vsel %vm830, %v837, 0.0
        %844 = vadd.xlane.f32.xlu0 %v843
        %v845 = vpop.xlane.xlu0 %844
        %v846 = vsel %vm830, %v838, 0.0
        %847 = vadd.xlane.f32.xlu0 %v846
        %v848 = vpop.xlane.xlu0 %847
        %v849 = vsel %vm830, %v839, 0.0
        %850 = vadd.xlane.f32.xlu0 %v849
        %v851 = vpop.xlane.xlu0 %850
        %v852 = vsel %vm830, %v840, 0.0
        %853 = vadd.xlane.f32.xlu0 %v852
        %v854 = vpop.xlane.xlu0 %853
        %v855 = vsel %vm830, %v841, 0.0
        %856 = vadd.xlane.f32.xlu0 %v855
        %v857 = vpop.xlane.xlu0 %856
        %v858 = vsel %vm830, %v842, 0.0
        %859 = vadd.xlane.f32.xlu0 %v858
        %v860 = vpop.xlane.xlu0 %859
        %v861 = vrcp.pop 32.0
        %v862 = vmul.f32 %v845, %v861
        %v863 = vmul.f32 %v848, %v861
        %v864 = vmul.f32 %v851, %v861
        %v865 = vmul.f32 %v854, %v861
        %v866 = vmul.f32 %v857, %v861
        %v867 = vmul.f32 %v860, %v861
        %v868 = vadd.f32 %v862, 1e-05
        %v869 = vadd.f32 %v863, 1e-05
        %v870 = vadd.f32 %v864, 1e-05
        %v871 = vadd.f32 %v865, 1e-05
        %v872 = vadd.f32 %v866, 1e-05
        %v873 = vadd.f32 %v867, 1e-05
        %v874 = vrsqrt.pop %v868
        %v875 = vrsqrt.pop %v869
        %v876 = vrsqrt.pop %v870
        %v877 = vrsqrt.pop %v871
        %v878 = vrsqrt.pop %v872
        %v879 = vrsqrt.pop %v873
        %v880 = vmul.f32 %v824, %v874
        %v881 = vmul.f32 %v825, %v875
        %v882 = vmul.f32 %v826, %v876
        %v883 = vmul.f32 %v827, %v877
        %v884 = vmul.f32 %v828, %v878
        %v885 = vmul.f32 %v829, %v879
        %v886 = vld [vmem:[%s613] sm:$0x1]
        %v888 = vlaneseq
        %v889 = vshrl.u32 %v888, 7
        %v890 = vsub.s32 0, %v889
        %v891 = vrot.slane %v886, %v890
        %v893 = vmul.f32 %v880, %v891
        %v894 = vmul.f32 %v881, %v891
        %v895 = vmul.f32 %v882, %v891
        %v896 = vmul.f32 %v883, %v891
        %v897 = vmul.f32 %v884, %v891
        %v898 = vmul.f32 %v885, %v891
        %v899 = vpack.c.bf16 %v894, %v893
        %v900 = vpack.c.bf16 %v896, %v895
        %v901 = vpack.c.bf16 %v898, %v897
        %v902 = vld [vmem:[%s622] sm:$0xf]
        %v903 = vld [vmem:[%s622 + $0x4] sm:$0xf]
        %v904 = vld [vmem:[%s622 + $0x8] sm:$0xf]
        %v905 = vld [vmem:[%s622 + $0xc] sm:$0xf]
        %v910 = vunpack.c.l.b16 %v902
        %v911 = vunpack.c.l.b16 %v903
        %v912 = vunpack.c.l.b16 %v904
        %v913 = vunpack.c.l.b16 %v905
        %v914 = vpack.c.b16 %v911, %v910
        %v915 = vpack.c.b16 %v913, %v912
        %v919 = vsel %vm830, %v899, 0
        %v922 = vsel %vm830, %v900, 0
        %v925 = vsel %vm830, %v901, 0
        %927 = vmatprep.subr.bf16.mxu0 0
        %928 = vmatpush1.bf16.msra.mxu0 %v914
        %929 = vmatprep.subr.bf16.mxu0 0
        %930 = vmatpush1.bf16.msra.mxu0 %v915
        %931 = vmatprep.subr.bf16.mxu0 0
        %932 = vmatpush1.bf16.msra.mxu0 0
        %933 = vmatprep.subr.bf16.mxu0 0
        %934 = vmatpush1.bf16.msra.mxu0 0
        %935 = vmatprep.subr.bf16.mxu0 0
        %936 = vmatpush1.bf16.msra.mxu0 0
        %937 = vmatprep.subr.bf16.mxu0 0
        %938 = vmatpush1.bf16.msra.mxu0 0
        %939 = vmatprep.subr.bf16.mxu0 0
        %940 = vmatpush1.bf16.msra.mxu0 0
        %941 = vmatprep.subr.bf16.mxu0 0
        %942 = vmatpush1.bf16.msra.mxu0 0
        %943 = vmatprep.subr.bf16.mxu0 0
        %944 = vmatpush1.bf16.msra.mxu0 0
        %945 = vmatprep.subr.bf16.mxu0 0
        %946 = vmatpush1.bf16.msra.mxu0 0
        %947 = vmatprep.subr.bf16.mxu0 0
        %948 = vmatpush1.bf16.msra.mxu0 0
        %949 = vmatprep.subr.bf16.mxu0 0
        %950 = vmatpush1.bf16.msra.mxu0 0
        %951 = vmatprep.subr.bf16.mxu0 0
        %952 = vmatpush1.bf16.msra.mxu0 0
        %953 = vmatprep.subr.bf16.mxu0 0
        %954 = vmatpush1.bf16.msra.mxu0 0
        %955 = vmatprep.subr.bf16.mxu0 0
        %956 = vmatpush1.bf16.msra.mxu0 0
        %957 = vmatprep.subr.bf16.mxu0 0
        %958 = vmatpush1.bf16.msra.mxu0 0
        %959 = vmatprep.mubr.bf16.mxu0 0
        %960 = vmatmul.mubr.bf16.gmra.mrb[0].mxu0 %v919
        %v961 = vpop.f32.mrb[0].mxu0
        %v962 = vadd.f32 0.0, %v961
        %v963 = vpop.f32.mrb[0].mxu0
        %v964 = vpop.f32.mrb[0].mxu0
        %v965 = vadd.f32 0.0, %v964
        %v966 = vpop.f32.mrb[0].mxu0
        %967 = vmatprep.mubr.bf16.mxu0 0
        %968 = vmatmul.mubr.bf16.gmra.mrb[0].mxu0 %v922
        %v969 = vpop.f32.mrb[0].mxu0
        %v970 = vadd.f32 0.0, %v969
        %v971 = vpop.f32.mrb[0].mxu0
        %v972 = vpop.f32.mrb[0].mxu0
        %v973 = vadd.f32 0.0, %v972
        %v974 = vpop.f32.mrb[0].mxu0
        %975 = vmatprep.mubr.bf16.mxu0 0
        %976 = vmatmul.mubr.bf16.gmra.mrb[0].mxu0 %v925
        %v977 = vpop.f32.mrb[0].mxu0
        %v978 = vadd.f32 0.0, %v977
        %v979 = vpop.f32.mrb[0].mxu0
        %v980 = vpop.f32.mrb[0].mxu0
        %v981 = vadd.f32 0.0, %v980
        %v982 = vpop.f32.mrb[0].mxu0
        %983 = vdwg.mxu0
        %v984 = vpack.c.bf16 %v965, %v962
        %v985 = vpack.c.bf16 %v973, %v970
        %v986 = vpack.c.bf16 %v981, %v978
        %990 = vrot.lane.b32.xlu0 %v984, 64
        %v991 = vpop.permute.xlu0 %990
        %992 = vrot.lane.b32.xlu0 %v985, 64
        %v993 = vpop.permute.xlu0 %992
        %994 = vrot.lane.b32.xlu0 %v986, 64
        %v995 = vpop.permute.xlu0 %994
        %vm999 = vcmask 523264
        %1000 = vst.msk [vmem:[#allocation7] sm:$0xff] %vm999, %v991
        %1001 = vst.msk [vmem:[#allocation7 + $0x8] sm:$0xff] %vm999, %v993
        %1002 = vst.msk [vmem:[#allocation7 + $0x10] sm:$0xff] %vm999, %v995
        %1003 = vst.msk [vmem:[#allocation4 + $0x3] sm:$0xff] %vm999, %v962
        %1004 = vst.msk [vmem:[#allocation4 + $0xb] sm:$0xff] %vm999, %v965
        %1005 = vst.msk [vmem:[#allocation4 + $0x13] sm:$0xff] %vm999, %v970
        %1006 = vst.msk [vmem:[#allocation4 + $0x23] sm:$0xff] %vm999, %v973
        %1007 = vst.msk [vmem:[#allocation4 + $0x2b] sm:$0xff] %vm999, %v978
        %1008 = vst.msk [vmem:[#allocation4 + $0x33] sm:$0xff] %vm999, %v981
        %v1009 = vld [vmem:[%s631] sm:$0xf]
        %v1010 = vld [vmem:[#allocation4] sm:$0xff]
        %v1011 = vld [vmem:[#allocation4 + $0x8] sm:$0xff]
        %v1012 = vld [vmem:[#allocation4 + $0x10] sm:$0xff]
        %v1013 = vld [vmem:[#allocation4 + $0x20] sm:$0xff]
        %v1014 = vld [vmem:[#allocation4 + $0x28] sm:$0xff]
        %v1015 = vld [vmem:[#allocation4 + $0x30] sm:$0xff]
        %v1016 = vlaneseq
        %v1017 = vshrl.u32 %v1016, 7
        %v1018 = vsub.s32 0, %v1017
        %v1019 = vrot.slane %v1009, %v1018
        %v1020 = vmul.f32 %v1010, %v1019
        %v1021 = vmul.f32 %v1011, %v1019
        %v1022 = vmul.f32 %v1012, %v1019
        %v1023 = vmul.f32 %v1013, %v1019
        %v1024 = vmul.f32 %v1014, %v1019
        %v1025 = vmul.f32 %v1015, %v1019
        %v1026 = vadd.f32 %v1020, 0.0
        %v1027 = vadd.f32 %v1021, 0.0
        %v1028 = vadd.f32 %v1022, 0.0
        %v1029 = vadd.f32 %v1023, 0.0
        %v1030 = vadd.f32 %v1024, 0.0
        %v1031 = vadd.f32 %v1025, 0.0
        %v1032 = vld [vmem:[#allocation4 + $0x1] sm:$0xff]
        %v1033 = vld [vmem:[#allocation4 + $0x9] sm:$0xff]
        %v1034 = vld [vmem:[#allocation4 + $0x11] sm:$0xff]
        %v1035 = vld [vmem:[#allocation4 + $0x21] sm:$0xff]
        %v1036 = vld [vmem:[#allocation4 + $0x29] sm:$0xff]
        %v1037 = vld [vmem:[#allocation4 + $0x31] sm:$0xff]
        %v1038 = vlaneseq
        %v1039 = vshrl.u32 %v1038, 7
        %v1040 = vsub.s32 1, %v1039
        %v1041 = vrot.slane %v1009, %v1040
        %v1042 = vmul.f32 %v1032, %v1041
        %v1043 = vmul.f32 %v1033, %v1041
        %v1044 = vmul.f32 %v1034, %v1041
        %v1045 = vmul.f32 %v1035, %v1041
        %v1046 = vmul.f32 %v1036, %v1041
        %v1047 = vmul.f32 %v1037, %v1041
        %v1048 = vadd.f32 %v1026, %v1042
        %v1049 = vadd.f32 %v1027, %v1043
        %v1050 = vadd.f32 %v1028, %v1044
        %v1051 = vadd.f32 %v1029, %v1045
        %v1052 = vadd.f32 %v1030, %v1046
        %v1053 = vadd.f32 %v1031, %v1047
        %v1054 = vld [vmem:[#allocation4 + $0x2] sm:$0xff]
        %v1055 = vld [vmem:[#allocation4 + $0xa] sm:$0xff]
        %v1056 = vld [vmem:[#allocation4 + $0x12] sm:$0xff]
        %v1057 = vld [vmem:[#allocation4 + $0x22] sm:$0xff]
        %v1058 = vld [vmem:[#allocation4 + $0x2a] sm:$0xff]
        %v1059 = vld [vmem:[#allocation4 + $0x32] sm:$0xff]
        %v1060 = vlaneseq
        %v1061 = vshrl.u32 %v1060, 7
        %v1062 = vsub.s32 2, %v1061
        %v1063 = vrot.slane %v1009, %v1062
        %v1064 = vmul.f32 %v1054, %v1063
        %v1065 = vmul.f32 %v1055, %v1063
        %v1066 = vmul.f32 %v1056, %v1063
        %v1067 = vmul.f32 %v1057, %v1063
        %v1068 = vmul.f32 %v1058, %v1063
        %v1069 = vmul.f32 %v1059, %v1063
        %v1070 = vadd.f32 %v1048, %v1064
        %v1071 = vadd.f32 %v1049, %v1065
        %v1072 = vadd.f32 %v1050, %v1066
        %v1073 = vadd.f32 %v1051, %v1067
        %v1074 = vadd.f32 %v1052, %v1068
        %v1075 = vadd.f32 %v1053, %v1069
        %v1076 = vld [vmem:[#allocation4 + $0x3] sm:$0xff]
        %v1077 = vld [vmem:[#allocation4 + $0xb] sm:$0xff]
        %v1078 = vld [vmem:[#allocation4 + $0x13] sm:$0xff]
        %v1079 = vld [vmem:[#allocation4 + $0x23] sm:$0xff]
        %v1080 = vld [vmem:[#allocation4 + $0x2b] sm:$0xff]
        %v1081 = vld [vmem:[#allocation4 + $0x33] sm:$0xff]
        %v1082 = vlaneseq
        %v1083 = vshrl.u32 %v1082, 7
        %v1084 = vsub.s32 3, %v1083
        %v1085 = vrot.slane %v1009, %v1084
        %v1086 = vmul.f32 %v1076, %v1085
        %v1087 = vmul.f32 %v1077, %v1085
        %v1088 = vmul.f32 %v1078, %v1085
        %v1089 = vmul.f32 %v1079, %v1085
        %v1090 = vmul.f32 %v1080, %v1085
        %v1091 = vmul.f32 %v1081, %v1085
        %v1092 = vadd.f32 %v1070, %v1086
        %v1093 = vadd.f32 %v1071, %v1087
        %v1094 = vadd.f32 %v1072, %v1088
        %v1095 = vadd.f32 %v1073, %v1089
        %v1096 = vadd.f32 %v1074, %v1090
        %v1097 = vadd.f32 %v1075, %v1091
        %v1098 = vld [vmem:[%s639] sm:$0x1]
        %v1100 = vlaneseq
        %v1101 = vshrl.u32 %v1100, 7
        %v1102 = vsub.s32 0, %v1101
        %v1103 = vrot.slane %v1098, %v1102
        %v1105 = vadd.f32 %v1092, %v1103
        %v1106 = vadd.f32 %v1093, %v1103
        %v1107 = vadd.f32 %v1094, %v1103
        %v1108 = vadd.f32 %v1095, %v1103
        %v1109 = vadd.f32 %v1096, %v1103
        %v1110 = vadd.f32 %v1097, %v1103
        %v1111 = vsub.f32 0.0, %v1105
        %v1112 = vsub.f32 0.0, %v1106
        %v1113 = vsub.f32 0.0, %v1107
        %v1114 = vsub.f32 0.0, %v1108
        %v1115 = vsub.f32 0.0, %v1109
        %v1116 = vsub.f32 0.0, %v1110
        %v1117 = vmul.f32 %v1111, 1.442695
        %v1118 = vpow.pop %v1117
        %v1119 = vmul.f32 %v1112, 1.442695
        %v1120 = vpow.pop %v1119
        %v1121 = vmul.f32 %v1113, 1.442695
        %v1122 = vpow.pop %v1121
        %v1123 = vmul.f32 %v1114, 1.442695
        %v1124 = vpow.pop %v1123
        %v1125 = vmul.f32 %v1115, 1.442695
        %v1126 = vpow.pop %v1125
        %v1127 = vmul.f32 %v1116, 1.442695
        %v1128 = vpow.pop %v1127
        %v1129 = vadd.f32 %v1118, 1.0
        %v1130 = vadd.f32 %v1120, 1.0
        %v1131 = vadd.f32 %v1122, 1.0
        %v1132 = vadd.f32 %v1124, 1.0
        %v1133 = vadd.f32 %v1126, 1.0
        %v1134 = vadd.f32 %v1128, 1.0
        %v1135 = vrcp.pop %v1129
        %v1136 = vrcp.pop %v1130
        %v1137 = vrcp.pop %v1131
        %v1138 = vrcp.pop %v1132
        %v1139 = vrcp.pop %v1133
        %v1140 = vrcp.pop %v1134
        %v1141 = vmul.f32 %v1105, %v1135
        %v1142 = vmul.f32 %v1106, %v1136
        %v1143 = vmul.f32 %v1107, %v1137
        %v1144 = vmul.f32 %v1108, %v1138
        %v1145 = vmul.f32 %v1109, %v1139
        %v1146 = vmul.f32 %v1110, %v1140
        %1147 = vst.msk [vmem:[#allocation5] sm:$0xff] %vm999, %v1141
        %1148 = vst.msk [vmem:[#allocation5 + $0x8] sm:$0xff] %vm999, %v1142
        %1149 = vst.msk [vmem:[#allocation5 + $0x10] sm:$0xff] %vm999, %v1143
        %1150 = vst.msk [vmem:[#allocation5 + $0x18] sm:$0xff] %vm999, %v1144
        %1151 = vst.msk [vmem:[#allocation5 + $0x20] sm:$0xff] %vm999, %v1145
        %1152 = vst.msk [vmem:[#allocation5 + $0x28] sm:$0xff] %vm999, %v1146
        %v1153 = vpack.c.bf16 %v1142, %v1141
        %v1154 = vpack.c.bf16 %v1144, %v1143
        %v1155 = vpack.c.bf16 %v1146, %v1145
        %v1156 = vld [vmem:[%s648] sm:$0xff]
        %v1157 = vld [vmem:[%s648 + $0x8] sm:$0xf]
        %v1158 = vld [vmem:[%s648 + $0xc] sm:$0xff]
        %v1159 = vld [vmem:[%s648 + $0x14] sm:$0xf]
        %v1160 = vld [vmem:[%s648 + $0x18] sm:$0xff]
        %v1161 = vld [vmem:[%s648 + $0x20] sm:$0xf]
        %v1162 = vld [vmem:[%s648 + $0x24] sm:$0xff]
        %v1163 = vld [vmem:[%s648 + $0x2c] sm:$0xf]
        %v1164 = vld [vmem:[%s648 + $0x30] sm:$0xff]
        %v1165 = vld [vmem:[%s648 + $0x38] sm:$0xf]
        %v1166 = vld [vmem:[%s648 + $0x3c] sm:$0xff]
        %v1167 = vld [vmem:[%s648 + $0x44] sm:$0xf]
        %v1168 = vld [vmem:[%s648 + $0x48] sm:$0xff]
        %v1169 = vld [vmem:[%s648 + $0x50] sm:$0xf]
        %v1170 = vld [vmem:[%s648 + $0x54] sm:$0xff]
        %v1171 = vld [vmem:[%s648 + $0x5c] sm:$0xf]
        %v1188 = vunpack.c.l.b16 %v1156
        %v1189 = vunpack.c.h.b16 %v1156
        %v1190 = vunpack.c.l.b16 %v1157
        %v1191 = vunpack.c.l.b16 %v1158
        %v1192 = vunpack.c.h.b16 %v1158
        %v1193 = vunpack.c.l.b16 %v1159
        %v1194 = vunpack.c.l.b16 %v1160
        %v1195 = vunpack.c.h.b16 %v1160
        %v1196 = vunpack.c.l.b16 %v1161
        %v1197 = vunpack.c.l.b16 %v1162
        %v1198 = vunpack.c.h.b16 %v1162
        %v1199 = vunpack.c.l.b16 %v1163
        %v1200 = vunpack.c.l.b16 %v1164
        %v1201 = vunpack.c.h.b16 %v1164
        %v1202 = vunpack.c.l.b16 %v1165
        %v1203 = vunpack.c.l.b16 %v1166
        %v1204 = vunpack.c.h.b16 %v1166
        %v1205 = vunpack.c.l.b16 %v1167
        %v1206 = vunpack.c.l.b16 %v1168
        %v1207 = vunpack.c.h.b16 %v1168
        %v1208 = vunpack.c.l.b16 %v1169
        %v1209 = vunpack.c.l.b16 %v1170
        %v1210 = vunpack.c.h.b16 %v1170
        %v1211 = vunpack.c.l.b16 %v1171
        %v1212 = vpack.c.b16 %v1191, %v1188
        %v1213 = vpack.c.b16 %v1192, %v1189
        %v1214 = vpack.c.b16 %v1193, %v1190
        %v1215 = vpack.c.b16 %v1197, %v1194
        %v1216 = vpack.c.b16 %v1198, %v1195
        %v1217 = vpack.c.b16 %v1199, %v1196
        %v1218 = vpack.c.b16 %v1203, %v1200
        %v1219 = vpack.c.b16 %v1204, %v1201
        %v1220 = vpack.c.b16 %v1205, %v1202
        %v1221 = vpack.c.b16 %v1209, %v1206
        %v1222 = vpack.c.b16 %v1210, %v1207
        %v1223 = vpack.c.b16 %v1211, %v1208
        %v1237 = vsel %vm999, %v1153, 0
        %v1240 = vsel %vm999, %v1154, 0
        %v1243 = vsel %vm999, %v1155, 0
        %1245 = vmatprep.subr.bf16.mxu0 %v1213
        %1246 = vmatpush1.bf16.msra.mxu0 %v1212
        %1247 = vmatprep.subr.bf16.mxu0 %v1216
        %1248 = vmatpush1.bf16.msra.mxu0 %v1215
        %1249 = vmatprep.subr.bf16.mxu0 %v1219
        %1250 = vmatpush1.bf16.msra.mxu0 %v1218
        %1251 = vmatprep.subr.bf16.mxu0 %v1222
        %1252 = vmatpush1.bf16.msra.mxu0 %v1221
        %1253 = vmatprep.subr.bf16.mxu0 0
        %1254 = vmatpush1.bf16.msra.mxu0 0
        %1255 = vmatprep.subr.bf16.mxu0 0
        %1256 = vmatpush1.bf16.msra.mxu0 0
        %1257 = vmatprep.subr.bf16.mxu0 0
        %1258 = vmatpush1.bf16.msra.mxu0 0
        %1259 = vmatprep.subr.bf16.mxu0 0
        %1260 = vmatpush1.bf16.msra.mxu0 0
        %1261 = vmatprep.subr.bf16.mxu0 0
        %1262 = vmatpush1.bf16.msra.mxu0 0
        %1263 = vmatprep.subr.bf16.mxu0 0
        %1264 = vmatpush1.bf16.msra.mxu0 0
        %1265 = vmatprep.subr.bf16.mxu0 0
        %1266 = vmatpush1.bf16.msra.mxu0 0
        %1267 = vmatprep.subr.bf16.mxu0 0
        %1268 = vmatpush1.bf16.msra.mxu0 0
        %1269 = vmatprep.subr.bf16.mxu0 0
        %1270 = vmatpush1.bf16.msra.mxu0 0
        %1271 = vmatprep.subr.bf16.mxu0 0
        %1272 = vmatpush1.bf16.msra.mxu0 0
        %1273 = vmatprep.subr.bf16.mxu0 0
        %1274 = vmatpush1.bf16.msra.mxu0 0
        %1275 = vmatprep.subr.bf16.mxu0 0
        %1276 = vmatpush1.bf16.msra.mxu0 0
        %1277 = vmatprep.mubr.bf16.mxu0 0
        %1278 = vmatmul.mubr.bf16.gmra.mrb[0].mxu0 %v1237
        %v1279 = vpop.f32.mrb[0].mxu0
        %v1280 = vadd.f32 0.0, %v1279
        %v1281 = vpop.f32.mrb[0].mxu0
        %v1282 = vadd.f32 0.0, %v1281
        %v1283 = vpop.f32.mrb[0].mxu0
        %v1284 = vadd.f32 0.0, %v1283
        %v1285 = vpop.f32.mrb[0].mxu0
        %v1286 = vadd.f32 0.0, %v1285
        %1287 = vmatprep.mubr.bf16.mxu0 0
        %1288 = vmatmul.mubr.bf16.gmra.mrb[0].mxu0 %v1240
        %v1289 = vpop.f32.mrb[0].mxu0
        %v1290 = vadd.f32 0.0, %v1289
        %v1291 = vpop.f32.mrb[0].mxu0
        %v1292 = vadd.f32 0.0, %v1291
        %v1293 = vpop.f32.mrb[0].mxu0
        %v1294 = vadd.f32 0.0, %v1293
        %v1295 = vpop.f32.mrb[0].mxu0
        %v1296 = vadd.f32 0.0, %v1295
        %1297 = vmatprep.mubr.bf16.mxu0 0
        %1298 = vmatmul.mubr.bf16.gmra.mrb[0].mxu0 %v1243
        %v1299 = vpop.f32.mrb[0].mxu0
        %v1300 = vadd.f32 0.0, %v1299
        %v1301 = vpop.f32.mrb[0].mxu0
        %v1302 = vadd.f32 0.0, %v1301
        %v1303 = vpop.f32.mrb[0].mxu0
        %v1304 = vadd.f32 0.0, %v1303
        %v1305 = vpop.f32.mrb[0].mxu0
        %v1306 = vadd.f32 0.0, %v1305
        %1307 = vdwg.mxu0
        %1308 = vmatprep.subr.bf16.mxu0 0
        %1309 = vmatpush1.bf16.msra.mxu0 %v1214
        %1310 = vmatprep.subr.bf16.mxu0 0
        %1311 = vmatpush1.bf16.msra.mxu0 %v1217
        %1312 = vmatprep.subr.bf16.mxu0 0
        %1313 = vmatpush1.bf16.msra.mxu0 %v1220
        %1314 = vmatprep.subr.bf16.mxu0 0
        %1315 = vmatpush1.bf16.msra.mxu0 %v1223
        %1316 = vmatprep.subr.bf16.mxu0 0
        %1317 = vmatpush1.bf16.msra.mxu0 0
        %1318 = vmatprep.subr.bf16.mxu0 0
        %1319 = vmatpush1.bf16.msra.mxu0 0
        %1320 = vmatprep.subr.bf16.mxu0 0
        %1321 = vmatpush1.bf16.msra.mxu0 0
        %1322 = vmatprep.subr.bf16.mxu0 0
        %1323 = vmatpush1.bf16.msra.mxu0 0
        %1324 = vmatprep.subr.bf16.mxu0 0
        %1325 = vmatpush1.bf16.msra.mxu0 0
        %1326 = vmatprep.subr.bf16.mxu0 0
        %1327 = vmatpush1.bf16.msra.mxu0 0
        %1328 = vmatprep.subr.bf16.mxu0 0
        %1329 = vmatpush1.bf16.msra.mxu0 0
        %1330 = vmatprep.subr.bf16.mxu0 0
        %1331 = vmatpush1.bf16.msra.mxu0 0
        %1332 = vmatprep.subr.bf16.mxu0 0
        %1333 = vmatpush1.bf16.msra.mxu0 0
        %1334 = vmatprep.subr.bf16.mxu0 0
        %1335 = vmatpush1.bf16.msra.mxu0 0
        %1336 = vmatprep.subr.bf16.mxu0 0
        %1337 = vmatpush1.bf16.msra.mxu0 0
        %1338 = vmatprep.subr.bf16.mxu0 0
        %1339 = vmatpush1.bf16.msra.mxu0 0
        %1340 = vmatprep.mubr.bf16.mxu0 0
        %1341 = vmatmul.mubr.bf16.gmra.mrb[0].mxu0 %v1237
        %v1342 = vpop.f32.mrb[0].mxu0
        %v1343 = vadd.f32 0.0, %v1342
        %v1344 = vpop.f32.mrb[0].mxu0
        %v1345 = vpop.f32.mrb[0].mxu0
        %v1346 = vadd.f32 0.0, %v1345
        %v1347 = vpop.f32.mrb[0].mxu0
        %1348 = vmatprep.mubr.bf16.mxu0 0
        %1349 = vmatmul.mubr.bf16.gmra.mrb[0].mxu0 %v1240
        %v1350 = vpop.f32.mrb[0].mxu0
        %v1351 = vadd.f32 0.0, %v1350
        %v1352 = vpop.f32.mrb[0].mxu0
        %v1353 = vpop.f32.mrb[0].mxu0
        %v1354 = vadd.f32 0.0, %v1353
        %v1355 = vpop.f32.mrb[0].mxu0
        %1356 = vmatprep.mubr.bf16.mxu0 0
        %1357 = vmatmul.mubr.bf16.gmra.mrb[0].mxu0 %v1243
        %v1358 = vpop.f32.mrb[0].mxu0
        %v1359 = vadd.f32 0.0, %v1358
        %v1360 = vpop.f32.mrb[0].mxu0
        %v1361 = vpop.f32.mrb[0].mxu0
        %v1362 = vadd.f32 0.0, %v1361
        %v1363 = vpop.f32.mrb[0].mxu0
        %1364 = vdwg.mxu0
        %vm1365 = vcmask 130048
        %1366 = vst.msk [vmem:[#allocation8] sm:$0xff] %vm1365, %v1282
        %1367 = vst.msk [vmem:[#allocation8 + $0x8] sm:$0xff] %vm1365, %v1286
        %1368 = vst.msk [vmem:[#allocation8 + $0x10] sm:$0xff] %vm1365, %v1292
        %1369 = vst.msk [vmem:[#allocation8 + $0x18] sm:$0xff] %vm1365, %v1296
        %1370 = vst.msk [vmem:[#allocation8 + $0x20] sm:$0xff] %vm1365, %v1302
        %1371 = vst.msk [vmem:[#allocation8 + $0x28] sm:$0xff] %vm1365, %v1306
        %1372 = vst.msk [vmem:[#allocation9] sm:$0xff] %vm1365, %v1343
        %1373 = vst.msk [vmem:[#allocation9 + $0x8] sm:$0xff] %vm1365, %v1346
        %1374 = vst.msk [vmem:[#allocation9 + $0x10] sm:$0xff] %vm1365, %v1351
        %1375 = vst.msk [vmem:[#allocation9 + $0x18] sm:$0xff] %vm1365, %v1354
        %1376 = vst.msk [vmem:[#allocation9 + $0x20] sm:$0xff] %vm1365, %v1359
        %1377 = vst.msk [vmem:[#allocation9 + $0x28] sm:$0xff] %vm1365, %v1362
        %v1378 = vpack.c.bf16 %v1284, %v1280
        %v1379 = vpack.c.bf16 %v1294, %v1290
        %v1380 = vpack.c.bf16 %v1304, %v1300
        %v1381 = vld [vmem:[%s657] sm:$0xf]
        %v1382 = vld [vmem:[%s657 + $0x4] sm:$0xf]
        %v1383 = vld [vmem:[%s657 + $0x8] sm:$0xf]
        %v1384 = vld [vmem:[%s657 + $0xc] sm:$0xf]
        %v1385 = vld [vmem:[%s657 + $0x10] sm:$0xf]
        %v1386 = vld [vmem:[%s657 + $0x14] sm:$0xf]
        %v1387 = vld [vmem:[%s657 + $0x18] sm:$0xf]
        %v1388 = vld [vmem:[%s657 + $0x1c] sm:$0xf]
        %v1389 = vld [vmem:[%s657 + $0x20] sm:$0xf]
        %v1390 = vld [vmem:[%s657 + $0x24] sm:$0xf]
        %v1391 = vld [vmem:[%s657 + $0x28] sm:$0xf]
        %v1392 = vld [vmem:[%s657 + $0x2c] sm:$0xf]
        %v1393 = vld [vmem:[%s657 + $0x30] sm:$0xf]
        %v1394 = vld [vmem:[%s657 + $0x34] sm:$0xf]
        %v1395 = vld [vmem:[%s657 + $0x38] sm:$0xf]
        %v1396 = vld [vmem:[%s657 + $0x3c] sm:$0xf]
        %v1397 = vld [vmem:[%s665] sm:$0x1]
        %v1399 = vlaneseq
        %v1400 = vshrl.u32 %v1399, 7
        %v1401 = vsub.s32 0, %v1400
        %v1402 = vrot.slane %v1397, %v1401
        %v1420 = vunpack.c.l.b16 %v1381
        %v1421 = vunpack.c.l.b16 %v1382
        %v1422 = vunpack.c.l.b16 %v1383
        %v1423 = vunpack.c.l.b16 %v1384
        %v1424 = vunpack.c.l.b16 %v1385
        %v1425 = vunpack.c.l.b16 %v1386
        %v1426 = vunpack.c.l.b16 %v1387
        %v1427 = vunpack.c.l.b16 %v1388
        %v1428 = vunpack.c.l.b16 %v1389
        %v1429 = vunpack.c.l.b16 %v1390
        %v1430 = vunpack.c.l.b16 %v1391
        %v1431 = vunpack.c.l.b16 %v1392
        %v1432 = vunpack.c.l.b16 %v1393
        %v1433 = vunpack.c.l.b16 %v1394
        %v1434 = vunpack.c.l.b16 %v1395
        %v1435 = vunpack.c.l.b16 %v1396
        %v1436 = vpack.c.b16 %v1421, %v1420
        %v1437 = vpack.c.b16 %v1423, %v1422
        %v1438 = vpack.c.b16 %v1425, %v1424
        %v1439 = vpack.c.b16 %v1427, %v1426
        %v1440 = vpack.c.b16 %v1429, %v1428
        %v1441 = vpack.c.b16 %v1431, %v1430
        %v1442 = vpack.c.b16 %v1433, %v1432
        %v1443 = vpack.c.b16 %v1435, %v1434
        %1452 = vmatprep.subr.bf16.mxu0 0
        %1453 = vmatpush1.bf16.msra.mxu0 %v1436
        %1454 = vmatprep.subr.bf16.mxu0 0
        %1455 = vmatpush1.bf16.msra.mxu0 %v1437
        %1456 = vmatprep.subr.bf16.mxu0 0
        %1457 = vmatpush1.bf16.msra.mxu0 %v1438
        %1458 = vmatprep.subr.bf16.mxu0 0
        %1459 = vmatpush1.bf16.msra.mxu0 %v1439
        %1460 = vmatprep.subr.bf16.mxu0 0
        %1461 = vmatpush1.bf16.msra.mxu0 %v1440
        %1462 = vmatprep.subr.bf16.mxu0 0
        %1463 = vmatpush1.bf16.msra.mxu0 %v1441
        %1464 = vmatprep.subr.bf16.mxu0 0
        %1465 = vmatpush1.bf16.msra.mxu0 %v1442
        %1466 = vmatprep.subr.bf16.mxu0 0
        %1467 = vmatpush1.bf16.msra.mxu0 %v1443
        %1468 = vmatprep.subr.bf16.mxu0 0
        %1469 = vmatpush1.bf16.msra.mxu0 0
        %1470 = vmatprep.subr.bf16.mxu0 0
        %1471 = vmatpush1.bf16.msra.mxu0 0
        %1472 = vmatprep.subr.bf16.mxu0 0
        %1473 = vmatpush1.bf16.msra.mxu0 0
        %1474 = vmatprep.subr.bf16.mxu0 0
        %1475 = vmatpush1.bf16.msra.mxu0 0
        %1476 = vmatprep.subr.bf16.mxu0 0
        %1477 = vmatpush1.bf16.msra.mxu0 0
        %1478 = vmatprep.subr.bf16.mxu0 0
        %1479 = vmatpush1.bf16.msra.mxu0 0
        %1480 = vmatprep.subr.bf16.mxu0 0
        %1481 = vmatpush1.bf16.msra.mxu0 0
        %1482 = vmatprep.subr.bf16.mxu0 0
        %1483 = vmatpush1.bf16.msra.mxu0 0
        %1484 = vmatprep.mubr.bf16.mxu0 0
        %1485 = vmatmul.mubr.bf16.gmra.mrb[0].mxu0 %v1378
        %v1486 = vpop.f32.mrb[0].mxu0
        %v1487 = vadd.f32 %v1402, %v1486
        %v1488 = vpop.f32.mrb[0].mxu0
        %v1489 = vpop.f32.mrb[0].mxu0
        %v1490 = vadd.f32 %v1402, %v1489
        %v1491 = vpop.f32.mrb[0].mxu0
        %1492 = vmatprep.mubr.bf16.mxu0 0
        %1493 = vmatmul.mubr.bf16.gmra.mrb[0].mxu0 %v1379
        %v1494 = vpop.f32.mrb[0].mxu0
        %v1495 = vadd.f32 %v1402, %v1494
        %v1496 = vpop.f32.mrb[0].mxu0
        %v1497 = vpop.f32.mrb[0].mxu0
        %v1498 = vadd.f32 %v1402, %v1497
        %v1499 = vpop.f32.mrb[0].mxu0
        %1500 = vmatprep.mubr.bf16.mxu0 0
        %1501 = vmatmul.mubr.bf16.gmra.mrb[0].mxu0 %v1380
        %v1502 = vpop.f32.mrb[0].mxu0
        %v1503 = vadd.f32 %v1402, %v1502
        %v1504 = vpop.f32.mrb[0].mxu0
        %v1505 = vpop.f32.mrb[0].mxu0
        %v1506 = vadd.f32 %v1402, %v1505
        %v1507 = vpop.f32.mrb[0].mxu0
        %1508 = vdwg.mxu0
        %vm1509 = vcmp.gt.f32.partialorder %v1487, 20.0
        %vm1510 = vcmp.gt.f32.partialorder %v1490, 20.0
        %vm1511 = vcmp.gt.f32.partialorder %v1495, 20.0
        %vm1512 = vcmp.gt.f32.partialorder %v1498, 20.0
        %vm1513 = vcmp.gt.f32.partialorder %v1503, 20.0
        %vm1514 = vcmp.gt.f32.partialorder %v1506, 20.0
        %v1515 = vmul.f32 %v1487, 1.442695
        %v1516 = vpow.pop %v1515
        %v1517 = vmul.f32 %v1490, 1.442695
        %v1518 = vpow.pop %v1517
        %v1519 = vmul.f32 %v1495, 1.442695
        %v1520 = vpow.pop %v1519
        %v1521 = vmul.f32 %v1498, 1.442695
        %v1522 = vpow.pop %v1521
        %v1523 = vmul.f32 %v1503, 1.442695
        %v1524 = vpow.pop %v1523
        %v1525 = vmul.f32 %v1506, 1.442695
        %v1526 = vpow.pop %v1525
        %v1527 = vadd.f32 %v1516, 1.0
        %v1528 = vlog2.pop %v1527
        %v1529 = vmul.f32 %v1528, 0.6931472
        %v1530 = vmul.f32 -0.5, %v1516
        %v1531 = vadd.f32 %v1530, 1.0
        %v1532 = vmul.f32 %v1531, %v1516
        %v1533 = vand.u32 2147483647, %v1516
        %vm1534 = vcmp.lt.f32.partialorder %v1533, 0.0004427343
        %v1535 = vsel %vm1534, %v1532, %v1529
        %v1536 = vadd.f32 %v1518, 1.0
        %v1537 = vlog2.pop %v1536
        %v1538 = vmul.f32 %v1537, 0.6931472
        %v1539 = vmul.f32 -0.5, %v1518
        %v1540 = vadd.f32 %v1539, 1.0
        %v1541 = vmul.f32 %v1540, %v1518
        %v1542 = vand.u32 2147483647, %v1518
        %vm1543 = vcmp.lt.f32.partialorder %v1542, 0.0004427343
        %v1544 = vsel %vm1543, %v1541, %v1538
        %v1545 = vadd.f32 %v1520, 1.0
        %v1546 = vlog2.pop %v1545
        %v1547 = vmul.f32 %v1546, 0.6931472
        %v1548 = vmul.f32 -0.5, %v1520
        %v1549 = vadd.f32 %v1548, 1.0
        %v1550 = vmul.f32 %v1549, %v1520
        %v1551 = vand.u32 2147483647, %v1520
        %vm1552 = vcmp.lt.f32.partialorder %v1551, 0.0004427343
        %v1553 = vsel %vm1552, %v1550, %v1547
        %v1554 = vadd.f32 %v1522, 1.0
        %v1555 = vlog2.pop %v1554
        %v1556 = vmul.f32 %v1555, 0.6931472
        %v1557 = vmul.f32 -0.5, %v1522
        %v1558 = vadd.f32 %v1557, 1.0
        %v1559 = vmul.f32 %v1558, %v1522
        %v1560 = vand.u32 2147483647, %v1522
        %vm1561 = vcmp.lt.f32.partialorder %v1560, 0.0004427343
        %v1562 = vsel %vm1561, %v1559, %v1556
        %v1563 = vadd.f32 %v1524, 1.0
        %v1564 = vlog2.pop %v1563
        %v1565 = vmul.f32 %v1564, 0.6931472
        %v1566 = vmul.f32 -0.5, %v1524
        %v1567 = vadd.f32 %v1566, 1.0
        %v1568 = vmul.f32 %v1567, %v1524
        %v1569 = vand.u32 2147483647, %v1524
        %vm1570 = vcmp.lt.f32.partialorder %v1569, 0.0004427343
        %v1571 = vsel %vm1570, %v1568, %v1565
        %v1572 = vadd.f32 %v1526, 1.0
        %v1573 = vlog2.pop %v1572
        %v1574 = vmul.f32 %v1573, 0.6931472
        %v1575 = vmul.f32 -0.5, %v1526
        %v1576 = vadd.f32 %v1575, 1.0
        %v1577 = vmul.f32 %v1576, %v1526
        %v1578 = vand.u32 2147483647, %v1526
        %vm1579 = vcmp.lt.f32.partialorder %v1578, 0.0004427343
        %v1580 = vsel %vm1579, %v1577, %v1574
        %v1581 = vsel %vm1509, %v1487, %v1535
        %v1582 = vsel %vm1510, %v1490, %v1544
        %v1583 = vsel %vm1511, %v1495, %v1553
        %v1584 = vsel %vm1512, %v1498, %v1562
        %v1585 = vsel %vm1513, %v1503, %v1571
        %v1586 = vsel %vm1514, %v1506, %v1580
        %1587 = vst.msk [vmem:[#allocation6] sm:$0xff] %vm999, %v1581
        %1588 = vst.msk [vmem:[#allocation6 + $0x8] sm:$0xff] %vm999, %v1582
        %1589 = vst.msk [vmem:[#allocation6 + $0x10] sm:$0xff] %vm999, %v1583
        %1590 = vst.msk [vmem:[#allocation6 + $0x18] sm:$0xff] %vm999, %v1584
        %1591 = vst.msk [vmem:[#allocation6 + $0x20] sm:$0xff] %vm999, %v1585
        %1592 = vst.msk [vmem:[#allocation6 + $0x28] sm:$0xff] %vm999, %v1586
        %v1593 = vld [vmem:[%s674] sm:$0xff]
        %v1594 = vld [vmem:[%s674 + $0x8] sm:$0xff]
        %v1595 = vmul.f32 %v1593, 1.442695
        %v1596 = vpow.pop %v1595
        %v1597 = vmul.f32 %v1594, 1.442695
        %v1598 = vpow.pop %v1597
        %v1599 = vsub.f32 0.0, %v1596
        %v1600 = vsub.f32 0.0, %v1598
        loop: start=0, step=1, limit=3
        $region113: #{aim_forward.2} parent=63 // loop_pre_header
          _
        $region114: #{aim_forward.2} parent=63 // loop_header
          %s1602 = sphi 0, %s1606
          %p1603 = scmp.ge.s32.totalorder %s1602, 3
          %v1607 = vphi 0.0, %v2001
          %v1608 = vphi 0.0, %v2002
        $region115: #{aim_forward.2} parent=63 // loop_header_branch
          %1605 = sbr.rel (%p1603) target = $region119
        $region116: #{aim_forward.2} parent=63 // loop_body
          %s1609 = smul.u32 %s1602, 8
          %s1610 = scalar_lea.vmem [#allocation6], %s1609
          %v1611 = vld [vmem:[%s1610] sm:$0xff]
          %s1612 = scalar_lea.vmem [#allocation5], %s1609
          %v1613 = vld [vmem:[%s1612] sm:$0xff]
          %v1614 = vmul.f32 %v1611, %v1613
          %s1615 = scalar_lea.vmem [#allocation8], %s1609
          %v1616 = vld [vmem:[%s1615] sm:$0xff]
          %s1617 = scalar_lea.vmem [#allocation9], %s1609
          %v1618 = vld [vmem:[%s1617] sm:$0xff]
          %v1620 = vcombine.high %v1611, %v1611
          %v1622 = vunpack.c.l.s4 1966171168
          %v1623 = vunpack.c.0.s8 %v1622
          %v1624 = vlaneseq
          %v1625 = vshrl.u32 %v1624, 7
          %v1626 = vsub.s32 %v1623, %v1625
          %v1627 = vrot.slane %v1611, %v1626
          %v1629 = vunpack.c.l.s4 1966171168
          %v1630 = vunpack.c.0.s8 %v1629
          %v1631 = vlaneseq
          %v1632 = vshrl.u32 %v1631, 7
          %v1633 = vsub.s32 %v1630, %v1632
          %v1634 = vrot.slane %v1620, %v1633
          %v1635 = vcombine.high %v1627, %v1627
          %v1636 = vcombine.high %v1634, %v1634
          %v1638 = vunpack.c.l.s4 1966171168
          %v1639 = vunpack.c.0.s8 %v1638
          %v1640 = vlaneseq
          %v1641 = vshrl.u32 %v1640, 7
          %v1642 = vsub.s32 %v1639, %v1641
          %v1643 = vrot.slane %v1627, %v1642
          %v1645 = vunpack.c.l.s4 1966171168
          %v1646 = vunpack.c.0.s8 %v1645
          %v1647 = vlaneseq
          %v1648 = vshrl.u32 %v1647, 7
          %v1649 = vsub.s32 %v1646, %v1648
          %v1650 = vrot.slane %v1634, %v1649
          %v1652 = vunpack.c.l.s4 1966171168
          %v1653 = vunpack.c.0.s8 %v1652
          %v1654 = vlaneseq
          %v1655 = vshrl.u32 %v1654, 7
          %v1656 = vsub.s32 %v1653, %v1655
          %v1657 = vrot.slane %v1635, %v1656
          %v1659 = vunpack.c.l.s4 1966171168
          %v1660 = vunpack.c.0.s8 %v1659
          %v1661 = vlaneseq
          %v1662 = vshrl.u32 %v1661, 7
          %v1663 = vsub.s32 %v1660, %v1662
          %v1664 = vrot.slane %v1636, %v1663
          %v1665 = vcombine.high %v1643, %v1643
          %v1666 = vcombine.high %v1650, %v1650
          %v1667 = vcombine.high %v1657, %v1657
          %v1668 = vcombine.high %v1664, %v1664
          %v1669 = vlaneseq
          %v1670 = vshrl.u32 %v1669, 7
          %v1671 = vsub.s32 0, %v1670
          %v1672 = vrot.slane %v1643, %v1671
          %v1673 = vlaneseq
          %v1674 = vshrl.u32 %v1673, 7
          %v1675 = vsub.s32 0, %v1674
          %v1676 = vrot.slane %v1657, %v1675
          %v1677 = vlaneseq
          %v1678 = vshrl.u32 %v1677, 7
          %v1679 = vsub.s32 0, %v1678
          %v1680 = vrot.slane %v1665, %v1679
          %v1681 = vlaneseq
          %v1682 = vshrl.u32 %v1681, 7
          %v1683 = vsub.s32 0, %v1682
          %v1684 = vrot.slane %v1667, %v1683
          %v1685 = vlaneseq
          %v1686 = vshrl.u32 %v1685, 7
          %v1687 = vsub.s32 0, %v1686
          %v1688 = vrot.slane %v1650, %v1687
          %v1689 = vlaneseq
          %v1690 = vshrl.u32 %v1689, 7
          %v1691 = vsub.s32 0, %v1690
          %v1692 = vrot.slane %v1664, %v1691
          %v1693 = vlaneseq
          %v1694 = vshrl.u32 %v1693, 7
          %v1695 = vsub.s32 0, %v1694
          %v1696 = vrot.slane %v1666, %v1695
          %v1697 = vlaneseq
          %v1698 = vshrl.u32 %v1697, 7
          %v1699 = vsub.s32 0, %v1698
          %v1700 = vrot.slane %v1668, %v1699
          %v1709 = vmul.f32 %v1672, %v1599
          %v1710 = vmul.f32 %v1672, %v1600
          %v1711 = vmul.f32 %v1676, %v1599
          %v1712 = vmul.f32 %v1676, %v1600
          %v1713 = vmul.f32 %v1680, %v1599
          %v1714 = vmul.f32 %v1680, %v1600
          %v1715 = vmul.f32 %v1684, %v1599
          %v1716 = vmul.f32 %v1684, %v1600
          %v1717 = vmul.f32 %v1688, %v1599
          %v1718 = vmul.f32 %v1688, %v1600
          %v1719 = vmul.f32 %v1692, %v1599
          %v1720 = vmul.f32 %v1692, %v1600
          %v1721 = vmul.f32 %v1696, %v1599
          %v1722 = vmul.f32 %v1696, %v1600
          %v1723 = vmul.f32 %v1700, %v1599
          %v1724 = vmul.f32 %v1700, %v1600
          %v1725 = vmul.f32 %v1709, 1.442695
          %v1726 = vpow.pop %v1725
          %v1727 = vmul.f32 %v1710, 1.442695
          %v1728 = vpow.pop %v1727
          %v1729 = vmul.f32 %v1711, 1.442695
          %v1730 = vpow.pop %v1729
          %v1731 = vmul.f32 %v1712, 1.442695
          %v1732 = vpow.pop %v1731
          %v1733 = vmul.f32 %v1713, 1.442695
          %v1734 = vpow.pop %v1733
          %v1735 = vmul.f32 %v1714, 1.442695
          %v1736 = vpow.pop %v1735
          %v1737 = vmul.f32 %v1715, 1.442695
          %v1738 = vpow.pop %v1737
          %v1739 = vmul.f32 %v1716, 1.442695
          %v1740 = vpow.pop %v1739
          %v1741 = vmul.f32 %v1717, 1.442695
          %v1742 = vpow.pop %v1741
          %v1743 = vmul.f32 %v1718, 1.442695
          %v1744 = vpow.pop %v1743
          %v1745 = vmul.f32 %v1719, 1.442695
          %v1746 = vpow.pop %v1745
          %v1747 = vmul.f32 %v1720, 1.442695
          %v1748 = vpow.pop %v1747
          %v1749 = vmul.f32 %v1721, 1.442695
          %v1750 = vpow.pop %v1749
          %v1751 = vmul.f32 %v1722, 1.442695
          %v1752 = vpow.pop %v1751
          %v1753 = vmul.f32 %v1723, 1.442695
          %v1754 = vpow.pop %v1753
          %v1755 = vmul.f32 %v1724, 1.442695
          %v1756 = vpow.pop %v1755
          %v1757 = vlaneseq
          %v1758 = vshrl.u32 %v1757, 7
          %v1759 = vsub.s32 0, %v1758
          %v1760 = vrot.slane %v1616, %v1759
          %1762 = vbcast.lane.b32.xlu0 %v1760, 256
          %v1763 = vpop.permute.xlu0 %1762
          %s1765 = sor.u32 256, 8
          %1766 = vbcast.lane.b32.xlu0 %v1760, %s1765
          %v1767 = vpop.permute.xlu0 %1766
          %v1768 = vlaneseq
          %v1769 = vshrl.u32 %v1768, 7
          %v1770 = vsub.s32 1, %v1769
          %v1771 = vrot.slane %v1616, %v1770
          %1773 = vbcast.lane.b32.xlu0 %v1771, 256
          %v1774 = vpop.permute.xlu0 %1773
          %s1776 = sor.u32 256, 8
          %1777 = vbcast.lane.b32.xlu0 %v1771, %s1776
          %v1778 = vpop.permute.xlu0 %1777
          %v1779 = vlaneseq
          %v1780 = vshrl.u32 %v1779, 7
          %v1781 = vsub.s32 2, %v1780
          %v1782 = vrot.slane %v1616, %v1781
          %1784 = vbcast.lane.b32.xlu0 %v1782, 256
          %v1785 = vpop.permute.xlu0 %1784
          %s1787 = sor.u32 256, 8
          %1788 = vbcast.lane.b32.xlu0 %v1782, %s1787
          %v1789 = vpop.permute.xlu0 %1788
          %v1790 = vlaneseq
          %v1791 = vshrl.u32 %v1790, 7
          %v1792 = vsub.s32 3, %v1791
          %v1793 = vrot.slane %v1616, %v1792
          %1795 = vbcast.lane.b32.xlu0 %v1793, 256
          %v1796 = vpop.permute.xlu0 %1795
          %s1798 = sor.u32 256, 8
          %1799 = vbcast.lane.b32.xlu0 %v1793, %s1798
          %v1800 = vpop.permute.xlu0 %1799
          %v1801 = vlaneseq
          %v1802 = vshrl.u32 %v1801, 7
          %v1803 = vsub.s32 4, %v1802
          %v1804 = vrot.slane %v1616, %v1803
          %1806 = vbcast.lane.b32.xlu0 %v1804, 256
          %v1807 = vpop.permute.xlu0 %1806
          %s1809 = sor.u32 256, 8
          %1810 = vbcast.lane.b32.xlu0 %v1804, %s1809
          %v1811 = vpop.permute.xlu0 %1810
          %v1812 = vlaneseq
          %v1813 = vshrl.u32 %v1812, 7
          %v1814 = vsub.s32 5, %v1813
          %v1815 = vrot.slane %v1616, %v1814
          %1817 = vbcast.lane.b32.xlu0 %v1815, 256
          %v1818 = vpop.permute.xlu0 %1817
          %s1820 = sor.u32 256, 8
          %1821 = vbcast.lane.b32.xlu0 %v1815, %s1820
          %v1822 = vpop.permute.xlu0 %1821
          %v1823 = vlaneseq
          %v1824 = vshrl.u32 %v1823, 7
          %v1825 = vsub.s32 6, %v1824
          %v1826 = vrot.slane %v1616, %v1825
          %1828 = vbcast.lane.b32.xlu0 %v1826, 256
          %v1829 = vpop.permute.xlu0 %1828
          %s1831 = sor.u32 256, 8
          %1832 = vbcast.lane.b32.xlu0 %v1826, %s1831
          %v1833 = vpop.permute.xlu0 %1832
          %v1834 = vlaneseq
          %v1835 = vshrl.u32 %v1834, 7
          %v1836 = vsub.s32 7, %v1835
          %v1837 = vrot.slane %v1616, %v1836
          %1839 = vbcast.lane.b32.xlu0 %v1837, 256
          %v1840 = vpop.permute.xlu0 %1839
          %s1842 = sor.u32 256, 8
          %1843 = vbcast.lane.b32.xlu0 %v1837, %s1842
          %v1844 = vpop.permute.xlu0 %1843
          %v1846 = vcombine.high %v1614, %v1614
          %v1848 = vunpack.c.l.s4 1966171168
          %v1849 = vunpack.c.0.s8 %v1848
          %v1850 = vlaneseq
          %v1851 = vshrl.u32 %v1850, 7
          %v1852 = vsub.s32 %v1849, %v1851
          %v1853 = vrot.slane %v1614, %v1852
          %v1855 = vunpack.c.l.s4 1966171168
          %v1856 = vunpack.c.0.s8 %v1855
          %v1857 = vlaneseq
          %v1858 = vshrl.u32 %v1857, 7
          %v1859 = vsub.s32 %v1856, %v1858
          %v1860 = vrot.slane %v1846, %v1859
          %v1861 = vcombine.high %v1853, %v1853
          %v1862 = vcombine.high %v1860, %v1860
          %v1864 = vunpack.c.l.s4 1966171168
          %v1865 = vunpack.c.0.s8 %v1864
          %v1866 = vlaneseq
          %v1867 = vshrl.u32 %v1866, 7
          %v1868 = vsub.s32 %v1865, %v1867
          %v1869 = vrot.slane %v1853, %v1868
          %v1871 = vunpack.c.l.s4 1966171168
          %v1872 = vunpack.c.0.s8 %v1871
          %v1873 = vlaneseq
          %v1874 = vshrl.u32 %v1873, 7
          %v1875 = vsub.s32 %v1872, %v1874
          %v1876 = vrot.slane %v1860, %v1875
          %v1878 = vunpack.c.l.s4 1966171168
          %v1879 = vunpack.c.0.s8 %v1878
          %v1880 = vlaneseq
          %v1881 = vshrl.u32 %v1880, 7
          %v1882 = vsub.s32 %v1879, %v1881
          %v1883 = vrot.slane %v1861, %v1882
          %v1885 = vunpack.c.l.s4 1966171168
          %v1886 = vunpack.c.0.s8 %v1885
          %v1887 = vlaneseq
          %v1888 = vshrl.u32 %v1887, 7
          %v1889 = vsub.s32 %v1886, %v1888
          %v1890 = vrot.slane %v1862, %v1889
          %v1891 = vcombine.high %v1869, %v1869
          %v1892 = vcombine.high %v1876, %v1876
          %v1893 = vcombine.high %v1883, %v1883
          %v1894 = vcombine.high %v1890, %v1890
          %v1895 = vlaneseq
          %v1896 = vshrl.u32 %v1895, 7
          %v1897 = vsub.s32 0, %v1896
          %v1898 = vrot.slane %v1869, %v1897
          %v1899 = vlaneseq
          %v1900 = vshrl.u32 %v1899, 7
          %v1901 = vsub.s32 0, %v1900
          %v1902 = vrot.slane %v1883, %v1901
          %v1903 = vlaneseq
          %v1904 = vshrl.u32 %v1903, 7
          %v1905 = vsub.s32 0, %v1904
          %v1906 = vrot.slane %v1891, %v1905
          %v1907 = vlaneseq
          %v1908 = vshrl.u32 %v1907, 7
          %v1909 = vsub.s32 0, %v1908
          %v1910 = vrot.slane %v1893, %v1909
          %v1911 = vlaneseq
          %v1912 = vshrl.u32 %v1911, 7
          %v1913 = vsub.s32 0, %v1912
          %v1914 = vrot.slane %v1876, %v1913
          %v1915 = vlaneseq
          %v1916 = vshrl.u32 %v1915, 7
          %v1917 = vsub.s32 0, %v1916
          %v1918 = vrot.slane %v1890, %v1917
          %v1919 = vlaneseq
          %v1920 = vshrl.u32 %v1919, 7
          %v1921 = vsub.s32 0, %v1920
          %v1922 = vrot.slane %v1892, %v1921
          %v1923 = vlaneseq
          %v1924 = vshrl.u32 %v1923, 7
          %v1925 = vsub.s32 0, %v1924
          %v1926 = vrot.slane %v1894, %v1925
          %v1935 = vmul.f32 %v1763, %v1898
          %v1936 = vmul.f32 %v1767, %v1898
          %v1937 = vmul.f32 %v1774, %v1902
          %v1938 = vmul.f32 %v1778, %v1902
          %v1939 = vmul.f32 %v1785, %v1906
          %v1940 = vmul.f32 %v1789, %v1906
          %v1941 = vmul.f32 %v1796, %v1910
          %v1942 = vmul.f32 %v1800, %v1910
          %v1943 = vmul.f32 %v1807, %v1914
          %v1944 = vmul.f32 %v1811, %v1914
          %v1945 = vmul.f32 %v1818, %v1918
          %v1946 = vmul.f32 %v1822, %v1918
          %v1947 = vmul.f32 %v1829, %v1922
          %v1948 = vmul.f32 %v1833, %v1922
          %v1949 = vmul.f32 %v1840, %v1926
          %v1950 = vmul.f32 %v1844, %v1926
          %v1951 = vmul.f32 %v1726, %v1607
          %v1952 = vmul.f32 %v1728, %v1608
          %v1953 = vadd.f32 %v1951, %v1935
          %v1954 = vadd.f32 %v1952, %v1936
          %1955 = vst.msk [vmem:[#allocation11] sm:$0xff] %vm999, %v1953
          %1956 = vst.msk [vmem:[#allocation11 + $0x8] sm:$0xff] %vm999, %v1954
          %v1957 = vmul.f32 %v1730, %v1953
          %v1958 = vmul.f32 %v1732, %v1954
          %v1959 = vadd.f32 %v1957, %v1937
          %v1960 = vadd.f32 %v1958, %v1938
          %s1961 = scalar_lea.vmem [#allocation11], 16
          %1962 = vst.msk [vmem:[%s1961] sm:$0xff] %vm999, %v1959
          %1963 = vst.msk [vmem:[%s1961 + $0x8] sm:$0xff] %vm999, %v1960
          %v1964 = vmul.f32 %v1734, %v1959
          %v1965 = vmul.f32 %v1736, %v1960
          %v1966 = vadd.f32 %v1964, %v1939
          %v1967 = vadd.f32 %v1965, %v1940
          %s1968 = scalar_lea.vmem [#allocation11], 32
          %1969 = vst.msk [vmem:[%s1968] sm:$0xff] %vm999, %v1966
          %1970 = vst.msk [vmem:[%s1968 + $0x8] sm:$0xff] %vm999, %v1967
          %v1971 = vmul.f32 %v1738, %v1966
          %v1972 = vmul.f32 %v1740, %v1967
          %v1973 = vadd.f32 %v1971, %v1941
          %v1974 = vadd.f32 %v1972, %v1942
          %s1975 = scalar_lea.vmem [#allocation11], 48
          %1976 = vst.msk [vmem:[%s1975] sm:$0xff] %vm999, %v1973
          %1977 = vst.msk [vmem:[%s1975 + $0x8] sm:$0xff] %vm999, %v1974
          %v1978 = vmul.f32 %v1742, %v1973
          %v1979 = vmul.f32 %v1744, %v1974
          %v1980 = vadd.f32 %v1978, %v1943
          %v1981 = vadd.f32 %v1979, %v1944
          %s1982 = scalar_lea.vmem [#allocation11], 64
          %1983 = vst.msk [vmem:[%s1982] sm:$0xff] %vm999, %v1980
          %1984 = vst.msk [vmem:[%s1982 + $0x8] sm:$0xff] %vm999, %v1981
          %v1985 = vmul.f32 %v1746, %v1980
          %v1986 = vmul.f32 %v1748, %v1981
          %v1987 = vadd.f32 %v1985, %v1945
          %v1988 = vadd.f32 %v1986, %v1946
          %s1989 = scalar_lea.vmem [#allocation11], 80
          %1990 = vst.msk [vmem:[%s1989] sm:$0xff] %vm999, %v1987
          %1991 = vst.msk [vmem:[%s1989 + $0x8] sm:$0xff] %vm999, %v1988
          %v1992 = vmul.f32 %v1750, %v1987
          %v1993 = vmul.f32 %v1752, %v1988
          %v1994 = vadd.f32 %v1992, %v1947
          %v1995 = vadd.f32 %v1993, %v1948
          %s1996 = scalar_lea.vmem [#allocation11], 96
          %1997 = vst.msk [vmem:[%s1996] sm:$0xff] %vm999, %v1994
          %1998 = vst.msk [vmem:[%s1996 + $0x8] sm:$0xff] %vm999, %v1995
          %v1999 = vmul.f32 %v1754, %v1994
          %v2000 = vmul.f32 %v1756, %v1995
          %v2001 = vadd.f32 %v1999, %v1949
          %v2002 = vadd.f32 %v2000, %v1950
          %s2003 = scalar_lea.vmem [#allocation11], 112
          %2004 = vst.msk [vmem:[%s2003] sm:$0xff] %vm999, %v2001
          %2005 = vst.msk [vmem:[%s2003 + $0x8] sm:$0xff] %vm999, %v2002
          %v2006 = vlaneseq
          %v2007 = vshrl.u32 %v2006, 7
          %v2008 = vsub.s32 0, %v2007
          %v2009 = vrot.slane %v1618, %v2008
          %2011 = vbcast.lane.b32.xlu0 %v2009, 256
          %v2012 = vpop.permute.xlu0 %2011
          %s2014 = sor.u32 256, 8
          %2015 = vbcast.lane.b32.xlu0 %v2009, %s2014
          %v2016 = vpop.permute.xlu0 %2015
          %v2017 = vlaneseq
          %v2018 = vshrl.u32 %v2017, 7
          %v2019 = vsub.s32 1, %v2018
          %v2020 = vrot.slane %v1618, %v2019
          %2022 = vbcast.lane.b32.xlu0 %v2020, 256
          %v2023 = vpop.permute.xlu0 %2022
          %s2025 = sor.u32 256, 8
          %2026 = vbcast.lane.b32.xlu0 %v2020, %s2025
          %v2027 = vpop.permute.xlu0 %2026
          %v2028 = vlaneseq
          %v2029 = vshrl.u32 %v2028, 7
          %v2030 = vsub.s32 2, %v2029
          %v2031 = vrot.slane %v1618, %v2030
          %2033 = vbcast.lane.b32.xlu0 %v2031, 256
          %v2034 = vpop.permute.xlu0 %2033
          %s2036 = sor.u32 256, 8
          %2037 = vbcast.lane.b32.xlu0 %v2031, %s2036
          %v2038 = vpop.permute.xlu0 %2037
          %v2039 = vlaneseq
          %v2040 = vshrl.u32 %v2039, 7
          %v2041 = vsub.s32 3, %v2040
          %v2042 = vrot.slane %v1618, %v2041
          %2044 = vbcast.lane.b32.xlu0 %v2042, 256
          %v2045 = vpop.permute.xlu0 %2044
          %s2047 = sor.u32 256, 8
          %2048 = vbcast.lane.b32.xlu0 %v2042, %s2047
          %v2049 = vpop.permute.xlu0 %2048
          %v2050 = vlaneseq
          %v2051 = vshrl.u32 %v2050, 7
          %v2052 = vsub.s32 4, %v2051
          %v2053 = vrot.slane %v1618, %v2052
          %2055 = vbcast.lane.b32.xlu0 %v2053, 256
          %v2056 = vpop.permute.xlu0 %2055
          %s2058 = sor.u32 256, 8
          %2059 = vbcast.lane.b32.xlu0 %v2053, %s2058
          %v2060 = vpop.permute.xlu0 %2059
          %v2061 = vlaneseq
          %v2062 = vshrl.u32 %v2061, 7
          %v2063 = vsub.s32 5, %v2062
          %v2064 = vrot.slane %v1618, %v2063
          %2066 = vbcast.lane.b32.xlu0 %v2064, 256
          %v2067 = vpop.permute.xlu0 %2066
          %s2069 = sor.u32 256, 8
          %2070 = vbcast.lane.b32.xlu0 %v2064, %s2069
          %v2071 = vpop.permute.xlu0 %2070
          %v2072 = vlaneseq
          %v2073 = vshrl.u32 %v2072, 7
          %v2074 = vsub.s32 6, %v2073
          %v2075 = vrot.slane %v1618, %v2074
          %2077 = vbcast.lane.b32.xlu0 %v2075, 256
          %v2078 = vpop.permute.xlu0 %2077
          %s2080 = sor.u32 256, 8
          %2081 = vbcast.lane.b32.xlu0 %v2075, %s2080
          %v2082 = vpop.permute.xlu0 %2081
          %v2083 = vlaneseq
          %v2084 = vshrl.u32 %v2083, 7
          %v2085 = vsub.s32 7, %v2084
          %v2086 = vrot.slane %v1618, %v2085
          %2088 = vbcast.lane.b32.xlu0 %v2086, 256
          %v2089 = vpop.permute.xlu0 %2088
          %s2091 = sor.u32 256, 8
          %2092 = vbcast.lane.b32.xlu0 %v2086, %s2091
          %v2093 = vpop.permute.xlu0 %2092
          %v2094 = vld [vmem:[#allocation11] sm:$0xff]
          %v2095 = vld [vmem:[#allocation11 + $0x8] sm:$0xff]
          %v2096 = vld [vmem:[#allocation11 + $0x10] sm:$0xff]
          %v2097 = vld [vmem:[#allocation11 + $0x18] sm:$0xff]
          %v2098 = vld [vmem:[#allocation11 + $0x20] sm:$0xff]
          %v2099 = vld [vmem:[#allocation11 + $0x28] sm:$0xff]
          %v2100 = vld [vmem:[#allocation11 + $0x30] sm:$0xff]
          %v2101 = vld [vmem:[#allocation11 + $0x38] sm:$0xff]
          %v2102 = vld [vmem:[#allocation11 + $0x40] sm:$0xff]
          %v2103 = vld [vmem:[#allocation11 + $0x48] sm:$0xff]
          %v2104 = vld [vmem:[#allocation11 + $0x50] sm:$0xff]
          %v2105 = vld [vmem:[#allocation11 + $0x58] sm:$0xff]
          %v2106 = vld [vmem:[#allocation11 + $0x60] sm:$0xff]
          %v2107 = vld [vmem:[#allocation11 + $0x68] sm:$0xff]
          %v2108 = vld [vmem:[#allocation11 + $0x70] sm:$0xff]
          %v2109 = vld [vmem:[#allocation11 + $0x78] sm:$0xff]
          %v2110 = vmul.f32 %v2012, %v2094
          %v2111 = vmul.f32 %v2016, %v2095
          %v2112 = vmul.f32 %v2023, %v2096
          %v2113 = vmul.f32 %v2027, %v2097
          %v2114 = vmul.f32 %v2034, %v2098
          %v2115 = vmul.f32 %v2038, %v2099
          %v2116 = vmul.f32 %v2045, %v2100
          %v2117 = vmul.f32 %v2049, %v2101
          %v2118 = vmul.f32 %v2056, %v2102
          %v2119 = vmul.f32 %v2060, %v2103
          %v2120 = vmul.f32 %v2067, %v2104
          %v2121 = vmul.f32 %v2071, %v2105
          %v2122 = vmul.f32 %v2078, %v2106
          %v2123 = vmul.f32 %v2082, %v2107
          %v2124 = vmul.f32 %v2089, %v2108
          %v2125 = vmul.f32 %v2093, %v2109
          %v2126 = vsel %vm999, %v2110, 0.0
          %v2127 = vsel %vm999, %v2111, 0.0
          %v2128 = vadd.f32 %v2126, %v2127
          %v2129 = vrot.slane %v2128, 4
          %v2130 = vadd.f32 %v2128, %v2129
          %v2131 = vrot.slane %v2130, 2
          %v2132 = vadd.f32 %v2130, %v2131
          %v2133 = vrot.slane %v2132, 1
          %v2134 = vadd.f32 %v2132, %v2133
          %v2135 = vsel %vm999, %v2112, 0.0
          %v2136 = vsel %vm999, %v2113, 0.0
          %v2137 = vadd.f32 %v2135, %v2136
          %v2138 = vrot.slane %v2137, 4
          %v2139 = vadd.f32 %v2137, %v2138
          %v2140 = vrot.slane %v2139, 2
          %v2141 = vadd.f32 %v2139, %v2140
          %v2142 = vrot.slane %v2141, 1
          %v2143 = vadd.f32 %v2141, %v2142
          %v2144 = vsel %vm999, %v2114, 0.0
          %v2145 = vsel %vm999, %v2115, 0.0
          %v2146 = vadd.f32 %v2144, %v2145
          %v2147 = vrot.slane %v2146, 4
          %v2148 = vadd.f32 %v2146, %v2147
          %v2149 = vrot.slane %v2148, 2
          %v2150 = vadd.f32 %v2148, %v2149
          %v2151 = vrot.slane %v2150, 1
          %v2152 = vadd.f32 %v2150, %v2151
          %v2153 = vsel %vm999, %v2116, 0.0
          %v2154 = vsel %vm999, %v2117, 0.0
          %v2155 = vadd.f32 %v2153, %v2154
          %v2156 = vrot.slane %v2155, 4
          %v2157 = vadd.f32 %v2155, %v2156
          %v2158 = vrot.slane %v2157, 2
          %v2159 = vadd.f32 %v2157, %v2158
          %v2160 = vrot.slane %v2159, 1
          %v2161 = vadd.f32 %v2159, %v2160
          %v2162 = vsel %vm999, %v2118, 0.0
          %v2163 = vsel %vm999, %v2119, 0.0
          %v2164 = vadd.f32 %v2162, %v2163
          %v2165 = vrot.slane %v2164, 4
          %v2166 = vadd.f32 %v2164, %v2165
          %v2167 = vrot.slane %v2166, 2
          %v2168 = vadd.f32 %v2166, %v2167
          %v2169 = vrot.slane %v2168, 1
          %v2170 = vadd.f32 %v2168, %v2169
          %v2171 = vsel %vm999, %v2120, 0.0
          %v2172 = vsel %vm999, %v2121, 0.0
          %v2173 = vadd.f32 %v2171, %v2172
          %v2174 = vrot.slane %v2173, 4
          %v2175 = vadd.f32 %v2173, %v2174
          %v2176 = vrot.slane %v2175, 2
          %v2177 = vadd.f32 %v2175, %v2176
          %v2178 = vrot.slane %v2177, 1
          %v2179 = vadd.f32 %v2177, %v2178
          %v2180 = vsel %vm999, %v2122, 0.0
          %v2181 = vsel %vm999, %v2123, 0.0
          %v2182 = vadd.f32 %v2180, %v2181
          %v2183 = vrot.slane %v2182, 4
          %v2184 = vadd.f32 %v2182, %v2183
          %v2185 = vrot.slane %v2184, 2
          %v2186 = vadd.f32 %v2184, %v2185
          %v2187 = vrot.slane %v2186, 1
          %v2188 = vadd.f32 %v2186, %v2187
          %v2189 = vsel %vm999, %v2124, 0.0
          %v2190 = vsel %vm999, %v2125, 0.0
          %v2191 = vadd.f32 %v2189, %v2190
          %v2192 = vrot.slane %v2191, 4
          %v2193 = vadd.f32 %v2191, %v2192
          %v2194 = vrot.slane %v2193, 2
          %v2195 = vadd.f32 %v2193, %v2194
          %v2196 = vrot.slane %v2195, 1
          %v2197 = vadd.f32 %v2195, %v2196
          %vm2206 = vcmask 1041409
          %v2207 = vsel %vm2206, %v2143, %v2134
          %vm2208 = vcmask 1042434
          %v2209 = vsel %vm2208, %v2152, %v2207
          %vm2210 = vcmask 1043459
          %v2211 = vsel %vm2210, %v2161, %v2209
          %vm2212 = vcmask 1044484
          %v2213 = vsel %vm2212, %v2170, %v2211
          %vm2214 = vcmask 1045509
          %v2215 = vsel %vm2214, %v2179, %v2213
          %vm2216 = vcmask 1046534
          %v2217 = vsel %vm2216, %v2188, %v2215
          %vm2218 = vcmask 1047559
          %v2219 = vsel %vm2218, %v2197, %v2217
          %s2221 = scalar_lea.vmem [#allocation10], %s1609
          %2222 = vst.msk [vmem:[%s2221] sm:$0xff] %vm999, %v2219
        $region117: #{aim_forward.2} parent=63 // loop_footer
          %s1606 = sadd.s32 1, %s1602
        $region118: #{aim_forward.2} parent=63 // loop_footer_branch
          %1601 = sbr.rel target = $region114
        $region119: #{aim_forward.2} parent=63 // loop_exit
          _
        loop: start=0, step=1, limit=3
        $region120: #{aim_forward.2} parent=63 // loop_pre_header
          _
        $region121: #{aim_forward.2} parent=63 // loop_header
          %s2224 = sphi 0, %s2228
          %p2225 = scmp.ge.s32.totalorder %s2224, 3
          %v2229 = vphi 0.0, %v2624
          %v2230 = vphi 0.0, %v2625
        $region122: #{aim_forward.2} parent=63 // loop_header_branch
          %2227 = sbr.rel (%p2225) target = $region126
        $region123: #{aim_forward.2} parent=63 // loop_body
          %s2231 = smul.u32 %s2224, 8
          %s2232 = sadd.s32 %s2231, 24
          %s2233 = scalar_lea.vmem [#allocation6], %s2232
          %v2234 = vld [vmem:[%s2233] sm:$0xff]
          %s2235 = scalar_lea.vmem [#allocation5], %s2232
          %v2236 = vld [vmem:[%s2235] sm:$0xff]
          %v2237 = vmul.f32 %v2234, %v2236
          %s2238 = scalar_lea.vmem [#allocation8], %s2232
          %v2239 = vld [vmem:[%s2238] sm:$0xff]
          %s2240 = scalar_lea.vmem [#allocation9], %s2232
          %v2241 = vld [vmem:[%s2240] sm:$0xff]
          %v2243 = vcombine.high %v2234, %v2234
          %v2245 = vunpack.c.l.s4 1966171168
          %v2246 = vunpack.c.0.s8 %v2245
          %v2247 = vlaneseq
          %v2248 = vshrl.u32 %v2247, 7
          %v2249 = vsub.s32 %v2246, %v2248
          %v2250 = vrot.slane %v2234, %v2249
          %v2252 = vunpack.c.l.s4 1966171168
          %v2253 = vunpack.c.0.s8 %v2252
          %v2254 = vlaneseq
          %v2255 = vshrl.u32 %v2254, 7
          %v2256 = vsub.s32 %v2253, %v2255
          %v2257 = vrot.slane %v2243, %v2256
          %v2258 = vcombine.high %v2250, %v2250
          %v2259 = vcombine.high %v2257, %v2257
          %v2261 = vunpack.c.l.s4 1966171168
          %v2262 = vunpack.c.0.s8 %v2261
          %v2263 = vlaneseq
          %v2264 = vshrl.u32 %v2263, 7
          %v2265 = vsub.s32 %v2262, %v2264
          %v2266 = vrot.slane %v2250, %v2265
          %v2268 = vunpack.c.l.s4 1966171168
          %v2269 = vunpack.c.0.s8 %v2268
          %v2270 = vlaneseq
          %v2271 = vshrl.u32 %v2270, 7
          %v2272 = vsub.s32 %v2269, %v2271
          %v2273 = vrot.slane %v2257, %v2272
          %v2275 = vunpack.c.l.s4 1966171168
          %v2276 = vunpack.c.0.s8 %v2275
          %v2277 = vlaneseq
          %v2278 = vshrl.u32 %v2277, 7
          %v2279 = vsub.s32 %v2276, %v2278
          %v2280 = vrot.slane %v2258, %v2279
          %v2282 = vunpack.c.l.s4 1966171168
          %v2283 = vunpack.c.0.s8 %v2282
          %v2284 = vlaneseq
          %v2285 = vshrl.u32 %v2284, 7
          %v2286 = vsub.s32 %v2283, %v2285
          %v2287 = vrot.slane %v2259, %v2286
          %v2288 = vcombine.high %v2266, %v2266
          %v2289 = vcombine.high %v2273, %v2273
          %v2290 = vcombine.high %v2280, %v2280
          %v2291 = vcombine.high %v2287, %v2287
          %v2292 = vlaneseq
          %v2293 = vshrl.u32 %v2292, 7
          %v2294 = vsub.s32 0, %v2293
          %v2295 = vrot.slane %v2266, %v2294
          %v2296 = vlaneseq
          %v2297 = vshrl.u32 %v2296, 7
          %v2298 = vsub.s32 0, %v2297
          %v2299 = vrot.slane %v2280, %v2298
          %v2300 = vlaneseq
          %v2301 = vshrl.u32 %v2300, 7
          %v2302 = vsub.s32 0, %v2301
          %v2303 = vrot.slane %v2288, %v2302
          %v2304 = vlaneseq
          %v2305 = vshrl.u32 %v2304, 7
          %v2306 = vsub.s32 0, %v2305
          %v2307 = vrot.slane %v2290, %v2306
          %v2308 = vlaneseq
          %v2309 = vshrl.u32 %v2308, 7
          %v2310 = vsub.s32 0, %v2309
          %v2311 = vrot.slane %v2273, %v2310
          %v2312 = vlaneseq
          %v2313 = vshrl.u32 %v2312, 7
          %v2314 = vsub.s32 0, %v2313
          %v2315 = vrot.slane %v2287, %v2314
          %v2316 = vlaneseq
          %v2317 = vshrl.u32 %v2316, 7
          %v2318 = vsub.s32 0, %v2317
          %v2319 = vrot.slane %v2289, %v2318
          %v2320 = vlaneseq
          %v2321 = vshrl.u32 %v2320, 7
          %v2322 = vsub.s32 0, %v2321
          %v2323 = vrot.slane %v2291, %v2322
          %v2332 = vmul.f32 %v2295, %v1599
          %v2333 = vmul.f32 %v2295, %v1600
          %v2334 = vmul.f32 %v2299, %v1599
          %v2335 = vmul.f32 %v2299, %v1600
          %v2336 = vmul.f32 %v2303, %v1599
          %v2337 = vmul.f32 %v2303, %v1600
          %v2338 = vmul.f32 %v2307, %v1599
          %v2339 = vmul.f32 %v2307, %v1600
          %v2340 = vmul.f32 %v2311, %v1599
          %v2341 = vmul.f32 %v2311, %v1600
          %v2342 = vmul.f32 %v2315, %v1599
          %v2343 = vmul.f32 %v2315, %v1600
          %v2344 = vmul.f32 %v2319, %v1599
          %v2345 = vmul.f32 %v2319, %v1600
          %v2346 = vmul.f32 %v2323, %v1599
          %v2347 = vmul.f32 %v2323, %v1600
          %v2348 = vmul.f32 %v2332, 1.442695
          %v2349 = vpow.pop %v2348
          %v2350 = vmul.f32 %v2333, 1.442695
          %v2351 = vpow.pop %v2350
          %v2352 = vmul.f32 %v2334, 1.442695
          %v2353 = vpow.pop %v2352
          %v2354 = vmul.f32 %v2335, 1.442695
          %v2355 = vpow.pop %v2354
          %v2356 = vmul.f32 %v2336, 1.442695
          %v2357 = vpow.pop %v2356
          %v2358 = vmul.f32 %v2337, 1.442695
          %v2359 = vpow.pop %v2358
          %v2360 = vmul.f32 %v2338, 1.442695
          %v2361 = vpow.pop %v2360
          %v2362 = vmul.f32 %v2339, 1.442695
          %v2363 = vpow.pop %v2362
          %v2364 = vmul.f32 %v2340, 1.442695
          %v2365 = vpow.pop %v2364
          %v2366 = vmul.f32 %v2341, 1.442695
          %v2367 = vpow.pop %v2366
          %v2368 = vmul.f32 %v2342, 1.442695
          %v2369 = vpow.pop %v2368
          %v2370 = vmul.f32 %v2343, 1.442695
          %v2371 = vpow.pop %v2370
          %v2372 = vmul.f32 %v2344, 1.442695
          %v2373 = vpow.pop %v2372
          %v2374 = vmul.f32 %v2345, 1.442695
          %v2375 = vpow.pop %v2374
          %v2376 = vmul.f32 %v2346, 1.442695
          %v2377 = vpow.pop %v2376
          %v2378 = vmul.f32 %v2347, 1.442695
          %v2379 = vpow.pop %v2378
          %v2380 = vlaneseq
          %v2381 = vshrl.u32 %v2380, 7
          %v2382 = vsub.s32 0, %v2381
          %v2383 = vrot.slane %v2239, %v2382
          %2385 = vbcast.lane.b32.xlu0 %v2383, 256
          %v2386 = vpop.permute.xlu0 %2385
          %s2388 = sor.u32 256, 8
          %2389 = vbcast.lane.b32.xlu0 %v2383, %s2388
          %v2390 = vpop.permute.xlu0 %2389
          %v2391 = vlaneseq
          %v2392 = vshrl.u32 %v2391, 7
          %v2393 = vsub.s32 1, %v2392
          %v2394 = vrot.slane %v2239, %v2393
          %2396 = vbcast.lane.b32.xlu0 %v2394, 256
          %v2397 = vpop.permute.xlu0 %2396
          %s2399 = sor.u32 256, 8
          %2400 = vbcast.lane.b32.xlu0 %v2394, %s2399
          %v2401 = vpop.permute.xlu0 %2400
          %v2402 = vlaneseq
          %v2403 = vshrl.u32 %v2402, 7
          %v2404 = vsub.s32 2, %v2403
          %v2405 = vrot.slane %v2239, %v2404
          %2407 = vbcast.lane.b32.xlu0 %v2405, 256
          %v2408 = vpop.permute.xlu0 %2407
          %s2410 = sor.u32 256, 8
          %2411 = vbcast.lane.b32.xlu0 %v2405, %s2410
          %v2412 = vpop.permute.xlu0 %2411
          %v2413 = vlaneseq
          %v2414 = vshrl.u32 %v2413, 7
          %v2415 = vsub.s32 3, %v2414
          %v2416 = vrot.slane %v2239, %v2415
          %2418 = vbcast.lane.b32.xlu0 %v2416, 256
          %v2419 = vpop.permute.xlu0 %2418
          %s2421 = sor.u32 256, 8
          %2422 = vbcast.lane.b32.xlu0 %v2416, %s2421
          %v2423 = vpop.permute.xlu0 %2422
          %v2424 = vlaneseq
          %v2425 = vshrl.u32 %v2424, 7
          %v2426 = vsub.s32 4, %v2425
          %v2427 = vrot.slane %v2239, %v2426
          %2429 = vbcast.lane.b32.xlu0 %v2427, 256
          %v2430 = vpop.permute.xlu0 %2429
          %s2432 = sor.u32 256, 8
          %2433 = vbcast.lane.b32.xlu0 %v2427, %s2432
          %v2434 = vpop.permute.xlu0 %2433
          %v2435 = vlaneseq
          %v2436 = vshrl.u32 %v2435, 7
          %v2437 = vsub.s32 5, %v2436
          %v2438 = vrot.slane %v2239, %v2437
          %2440 = vbcast.lane.b32.xlu0 %v2438, 256
          %v2441 = vpop.permute.xlu0 %2440
          %s2443 = sor.u32 256, 8
          %2444 = vbcast.lane.b32.xlu0 %v2438, %s2443
          %v2445 = vpop.permute.xlu0 %2444
          %v2446 = vlaneseq
          %v2447 = vshrl.u32 %v2446, 7
          %v2448 = vsub.s32 6, %v2447
          %v2449 = vrot.slane %v2239, %v2448
          %2451 = vbcast.lane.b32.xlu0 %v2449, 256
          %v2452 = vpop.permute.xlu0 %2451
          %s2454 = sor.u32 256, 8
          %2455 = vbcast.lane.b32.xlu0 %v2449, %s2454
          %v2456 = vpop.permute.xlu0 %2455
          %v2457 = vlaneseq
          %v2458 = vshrl.u32 %v2457, 7
          %v2459 = vsub.s32 7, %v2458
          %v2460 = vrot.slane %v2239, %v2459
          %2462 = vbcast.lane.b32.xlu0 %v2460, 256
          %v2463 = vpop.permute.xlu0 %2462
          %s2465 = sor.u32 256, 8
          %2466 = vbcast.lane.b32.xlu0 %v2460, %s2465
          %v2467 = vpop.permute.xlu0 %2466
          %v2469 = vcombine.high %v2237, %v2237
          %v2471 = vunpack.c.l.s4 1966171168
          %v2472 = vunpack.c.0.s8 %v2471
          %v2473 = vlaneseq
          %v2474 = vshrl.u32 %v2473, 7
          %v2475 = vsub.s32 %v2472, %v2474
          %v2476 = vrot.slane %v2237, %v2475
          %v2478 = vunpack.c.l.s4 1966171168
          %v2479 = vunpack.c.0.s8 %v2478
          %v2480 = vlaneseq
          %v2481 = vshrl.u32 %v2480, 7
          %v2482 = vsub.s32 %v2479, %v2481
          %v2483 = vrot.slane %v2469, %v2482
          %v2484 = vcombine.high %v2476, %v2476
          %v2485 = vcombine.high %v2483, %v2483
          %v2487 = vunpack.c.l.s4 1966171168
          %v2488 = vunpack.c.0.s8 %v2487
          %v2489 = vlaneseq
          %v2490 = vshrl.u32 %v2489, 7
          %v2491 = vsub.s32 %v2488, %v2490
          %v2492 = vrot.slane %v2476, %v2491
          %v2494 = vunpack.c.l.s4 1966171168
          %v2495 = vunpack.c.0.s8 %v2494
          %v2496 = vlaneseq
          %v2497 = vshrl.u32 %v2496, 7
          %v2498 = vsub.s32 %v2495, %v2497
          %v2499 = vrot.slane %v2483, %v2498
          %v2501 = vunpack.c.l.s4 1966171168
          %v2502 = vunpack.c.0.s8 %v2501
          %v2503 = vlaneseq
          %v2504 = vshrl.u32 %v2503, 7
          %v2505 = vsub.s32 %v2502, %v2504
          %v2506 = vrot.slane %v2484, %v2505
          %v2508 = vunpack.c.l.s4 1966171168
          %v2509 = vunpack.c.0.s8 %v2508
          %v2510 = vlaneseq
          %v2511 = vshrl.u32 %v2510, 7
          %v2512 = vsub.s32 %v2509, %v2511
          %v2513 = vrot.slane %v2485, %v2512
          %v2514 = vcombine.high %v2492, %v2492
          %v2515 = vcombine.high %v2499, %v2499
          %v2516 = vcombine.high %v2506, %v2506
          %v2517 = vcombine.high %v2513, %v2513
          %v2518 = vlaneseq
          %v2519 = vshrl.u32 %v2518, 7
          %v2520 = vsub.s32 0, %v2519
          %v2521 = vrot.slane %v2492, %v2520
          %v2522 = vlaneseq
          %v2523 = vshrl.u32 %v2522, 7
          %v2524 = vsub.s32 0, %v2523
          %v2525 = vrot.slane %v2506, %v2524
          %v2526 = vlaneseq
          %v2527 = vshrl.u32 %v2526, 7
          %v2528 = vsub.s32 0, %v2527
          %v2529 = vrot.slane %v2514, %v2528
          %v2530 = vlaneseq
          %v2531 = vshrl.u32 %v2530, 7
          %v2532 = vsub.s32 0, %v2531
          %v2533 = vrot.slane %v2516, %v2532
          %v2534 = vlaneseq
          %v2535 = vshrl.u32 %v2534, 7
          %v2536 = vsub.s32 0, %v2535
          %v2537 = vrot.slane %v2499, %v2536
          %v2538 = vlaneseq
          %v2539 = vshrl.u32 %v2538, 7
          %v2540 = vsub.s32 0, %v2539
          %v2541 = vrot.slane %v2513, %v2540
          %v2542 = vlaneseq
          %v2543 = vshrl.u32 %v2542, 7
          %v2544 = vsub.s32 0, %v2543
          %v2545 = vrot.slane %v2515, %v2544
          %v2546 = vlaneseq
          %v2547 = vshrl.u32 %v2546, 7
          %v2548 = vsub.s32 0, %v2547
          %v2549 = vrot.slane %v2517, %v2548
          %v2558 = vmul.f32 %v2386, %v2521
          %v2559 = vmul.f32 %v2390, %v2521
          %v2560 = vmul.f32 %v2397, %v2525
          %v2561 = vmul.f32 %v2401, %v2525
          %v2562 = vmul.f32 %v2408, %v2529
          %v2563 = vmul.f32 %v2412, %v2529
          %v2564 = vmul.f32 %v2419, %v2533
          %v2565 = vmul.f32 %v2423, %v2533
          %v2566 = vmul.f32 %v2430, %v2537
          %v2567 = vmul.f32 %v2434, %v2537
          %v2568 = vmul.f32 %v2441, %v2541
          %v2569 = vmul.f32 %v2445, %v2541
          %v2570 = vmul.f32 %v2452, %v2545
          %v2571 = vmul.f32 %v2456, %v2545
          %v2572 = vmul.f32 %v2463, %v2549
          %v2573 = vmul.f32 %v2467, %v2549
          %v2574 = vmul.f32 %v2349, %v2229
          %v2575 = vmul.f32 %v2351, %v2230
          %v2576 = vadd.f32 %v2574, %v2558
          %v2577 = vadd.f32 %v2575, %v2559
          %2578 = vst.msk [vmem:[#allocation11] sm:$0xff] %vm999, %v2576
          %2579 = vst.msk [vmem:[#allocation11 + $0x8] sm:$0xff] %vm999, %v2577
          %v2580 = vmul.f32 %v2353, %v2576
          %v2581 = vmul.f32 %v2355, %v2577
          %v2582 = vadd.f32 %v2580, %v2560
          %v2583 = vadd.f32 %v2581, %v2561
          %s2584 = scalar_lea.vmem [#allocation11], 16
          %2585 = vst.msk [vmem:[%s2584] sm:$0xff] %vm999, %v2582
          %2586 = vst.msk [vmem:[%s2584 + $0x8] sm:$0xff] %vm999, %v2583
          %v2587 = vmul.f32 %v2357, %v2582
          %v2588 = vmul.f32 %v2359, %v2583
          %v2589 = vadd.f32 %v2587, %v2562
          %v2590 = vadd.f32 %v2588, %v2563
          %s2591 = scalar_lea.vmem [#allocation11], 32
          %2592 = vst.msk [vmem:[%s2591] sm:$0xff] %vm999, %v2589
          %2593 = vst.msk [vmem:[%s2591 + $0x8] sm:$0xff] %vm999, %v2590
          %v2594 = vmul.f32 %v2361, %v2589
          %v2595 = vmul.f32 %v2363, %v2590
          %v2596 = vadd.f32 %v2594, %v2564
          %v2597 = vadd.f32 %v2595, %v2565
          %s2598 = scalar_lea.vmem [#allocation11], 48
          %2599 = vst.msk [vmem:[%s2598] sm:$0xff] %vm999, %v2596
          %2600 = vst.msk [vmem:[%s2598 + $0x8] sm:$0xff] %vm999, %v2597
          %v2601 = vmul.f32 %v2365, %v2596
          %v2602 = vmul.f32 %v2367, %v2597
          %v2603 = vadd.f32 %v2601, %v2566
          %v2604 = vadd.f32 %v2602, %v2567
          %s2605 = scalar_lea.vmem [#allocation11], 64
          %2606 = vst.msk [vmem:[%s2605] sm:$0xff] %vm999, %v2603
          %2607 = vst.msk [vmem:[%s2605 + $0x8] sm:$0xff] %vm999, %v2604
          %v2608 = vmul.f32 %v2369, %v2603
          %v2609 = vmul.f32 %v2371, %v2604
          %v2610 = vadd.f32 %v2608, %v2568
          %v2611 = vadd.f32 %v2609, %v2569
          %s2612 = scalar_lea.vmem [#allocation11], 80
          %2613 = vst.msk [vmem:[%s2612] sm:$0xff] %vm999, %v2610
          %2614 = vst.msk [vmem:[%s2612 + $0x8] sm:$0xff] %vm999, %v2611
          %v2615 = vmul.f32 %v2373, %v2610
          %v2616 = vmul.f32 %v2375, %v2611
          %v2617 = vadd.f32 %v2615, %v2570
          %v2618 = vadd.f32 %v2616, %v2571
          %s2619 = scalar_lea.vmem [#allocation11], 96
          %2620 = vst.msk [vmem:[%s2619] sm:$0xff] %vm999, %v2617
          %2621 = vst.msk [vmem:[%s2619 + $0x8] sm:$0xff] %vm999, %v2618
          %v2622 = vmul.f32 %v2377, %v2617
          %v2623 = vmul.f32 %v2379, %v2618
          %v2624 = vadd.f32 %v2622, %v2572
          %v2625 = vadd.f32 %v2623, %v2573
          %s2626 = scalar_lea.vmem [#allocation11], 112
          %2627 = vst.msk [vmem:[%s2626] sm:$0xff] %vm999, %v2624
          %2628 = vst.msk [vmem:[%s2626 + $0x8] sm:$0xff] %vm999, %v2625
          %v2629 = vlaneseq
          %v2630 = vshrl.u32 %v2629, 7
          %v2631 = vsub.s32 0, %v2630
          %v2632 = vrot.slane %v2241, %v2631
          %2634 = vbcast.lane.b32.xlu0 %v2632, 256
          %v2635 = vpop.permute.xlu0 %2634
          %s2637 = sor.u32 256, 8
          %2638 = vbcast.lane.b32.xlu0 %v2632, %s2637
          %v2639 = vpop.permute.xlu0 %2638
          %v2640 = vlaneseq
          %v2641 = vshrl.u32 %v2640, 7
          %v2642 = vsub.s32 1, %v2641
          %v2643 = vrot.slane %v2241, %v2642
          %2645 = vbcast.lane.b32.xlu0 %v2643, 256
          %v2646 = vpop.permute.xlu0 %2645
          %s2648 = sor.u32 256, 8
          %2649 = vbcast.lane.b32.xlu0 %v2643, %s2648
          %v2650 = vpop.permute.xlu0 %2649
          %v2651 = vlaneseq
          %v2652 = vshrl.u32 %v2651, 7
          %v2653 = vsub.s32 2, %v2652
          %v2654 = vrot.slane %v2241, %v2653
          %2656 = vbcast.lane.b32.xlu0 %v2654, 256
          %v2657 = vpop.permute.xlu0 %2656
          %s2659 = sor.u32 256, 8
          %2660 = vbcast.lane.b32.xlu0 %v2654, %s2659
          %v2661 = vpop.permute.xlu0 %2660
          %v2662 = vlaneseq
          %v2663 = vshrl.u32 %v2662, 7
          %v2664 = vsub.s32 3, %v2663
          %v2665 = vrot.slane %v2241, %v2664
          %2667 = vbcast.lane.b32.xlu0 %v2665, 256
          %v2668 = vpop.permute.xlu0 %2667
          %s2670 = sor.u32 256, 8
          %2671 = vbcast.lane.b32.xlu0 %v2665, %s2670
          %v2672 = vpop.permute.xlu0 %2671
          %v2673 = vlaneseq
          %v2674 = vshrl.u32 %v2673, 7
          %v2675 = vsub.s32 4, %v2674
          %v2676 = vrot.slane %v2241, %v2675
          %2678 = vbcast.lane.b32.xlu0 %v2676, 256
          %v2679 = vpop.permute.xlu0 %2678
          %s2681 = sor.u32 256, 8
          %2682 = vbcast.lane.b32.xlu0 %v2676, %s2681
          %v2683 = vpop.permute.xlu0 %2682
          %v2684 = vlaneseq
          %v2685 = vshrl.u32 %v2684, 7
          %v2686 = vsub.s32 5, %v2685
          %v2687 = vrot.slane %v2241, %v2686
          %2689 = vbcast.lane.b32.xlu0 %v2687, 256
          %v2690 = vpop.permute.xlu0 %2689
          %s2692 = sor.u32 256, 8
          %2693 = vbcast.lane.b32.xlu0 %v2687, %s2692
          %v2694 = vpop.permute.xlu0 %2693
          %v2695 = vlaneseq
          %v2696 = vshrl.u32 %v2695, 7
          %v2697 = vsub.s32 6, %v2696
          %v2698 = vrot.slane %v2241, %v2697
          %2700 = vbcast.lane.b32.xlu0 %v2698, 256
          %v2701 = vpop.permute.xlu0 %2700
          %s2703 = sor.u32 256, 8
          %2704 = vbcast.lane.b32.xlu0 %v2698, %s2703
          %v2705 = vpop.permute.xlu0 %2704
          %v2706 = vlaneseq
          %v2707 = vshrl.u32 %v2706, 7
          %v2708 = vsub.s32 7, %v2707
          %v2709 = vrot.slane %v2241, %v2708
          %2711 = vbcast.lane.b32.xlu0 %v2709, 256
          %v2712 = vpop.permute.xlu0 %2711
          %s2714 = sor.u32 256, 8
          %2715 = vbcast.lane.b32.xlu0 %v2709, %s2714
          %v2716 = vpop.permute.xlu0 %2715
          %v2717 = vld [vmem:[#allocation11] sm:$0xff]
          %v2718 = vld [vmem:[#allocation11 + $0x8] sm:$0xff]
          %v2719 = vld [vmem:[#allocation11 + $0x10] sm:$0xff]
          %v2720 = vld [vmem:[#allocation11 + $0x18] sm:$0xff]
          %v2721 = vld [vmem:[#allocation11 + $0x20] sm:$0xff]
          %v2722 = vld [vmem:[#allocation11 + $0x28] sm:$0xff]
          %v2723 = vld [vmem:[#allocation11 + $0x30] sm:$0xff]
          %v2724 = vld [vmem:[#allocation11 + $0x38] sm:$0xff]
          %v2725 = vld [vmem:[#allocation11 + $0x40] sm:$0xff]
          %v2726 = vld [vmem:[#allocation11 + $0x48] sm:$0xff]
          %v2727 = vld [vmem:[#allocation11 + $0x50] sm:$0xff]
          %v2728 = vld [vmem:[#allocation11 + $0x58] sm:$0xff]
          %v2729 = vld [vmem:[#allocation11 + $0x60] sm:$0xff]
          %v2730 = vld [vmem:[#allocation11 + $0x68] sm:$0xff]
          %v2731 = vld [vmem:[#allocation11 + $0x70] sm:$0xff]
          %v2732 = vld [vmem:[#allocation11 + $0x78] sm:$0xff]
          %v2733 = vmul.f32 %v2635, %v2717
          %v2734 = vmul.f32 %v2639, %v2718
          %v2735 = vmul.f32 %v2646, %v2719
          %v2736 = vmul.f32 %v2650, %v2720
          %v2737 = vmul.f32 %v2657, %v2721
          %v2738 = vmul.f32 %v2661, %v2722
          %v2739 = vmul.f32 %v2668, %v2723
          %v2740 = vmul.f32 %v2672, %v2724
          %v2741 = vmul.f32 %v2679, %v2725
          %v2742 = vmul.f32 %v2683, %v2726
          %v2743 = vmul.f32 %v2690, %v2727
          %v2744 = vmul.f32 %v2694, %v2728
          %v2745 = vmul.f32 %v2701, %v2729
          %v2746 = vmul.f32 %v2705, %v2730
          %v2747 = vmul.f32 %v2712, %v2731
          %v2748 = vmul.f32 %v2716, %v2732
          %v2749 = vsel %vm999, %v2733, 0.0
          %v2750 = vsel %vm999, %v2734, 0.0
          %v2751 = vadd.f32 %v2749, %v2750
          %v2752 = vrot.slane %v2751, 4
          %v2753 = vadd.f32 %v2751, %v2752
          %v2754 = vrot.slane %v2753, 2
          %v2755 = vadd.f32 %v2753, %v2754
          %v2756 = vrot.slane %v2755, 1
          %v2757 = vadd.f32 %v2755, %v2756
          %v2758 = vsel %vm999, %v2735, 0.0
          %v2759 = vsel %vm999, %v2736, 0.0
          %v2760 = vadd.f32 %v2758, %v2759
          %v2761 = vrot.slane %v2760, 4
          %v2762 = vadd.f32 %v2760, %v2761
          %v2763 = vrot.slane %v2762, 2
          %v2764 = vadd.f32 %v2762, %v2763
          %v2765 = vrot.slane %v2764, 1
          %v2766 = vadd.f32 %v2764, %v2765
          %v2767 = vsel %vm999, %v2737, 0.0
          %v2768 = vsel %vm999, %v2738, 0.0
          %v2769 = vadd.f32 %v2767, %v2768
          %v2770 = vrot.slane %v2769, 4
          %v2771 = vadd.f32 %v2769, %v2770
          %v2772 = vrot.slane %v2771, 2
          %v2773 = vadd.f32 %v2771, %v2772
          %v2774 = vrot.slane %v2773, 1
          %v2775 = vadd.f32 %v2773, %v2774
          %v2776 = vsel %vm999, %v2739, 0.0
          %v2777 = vsel %vm999, %v2740, 0.0
          %v2778 = vadd.f32 %v2776, %v2777
          %v2779 = vrot.slane %v2778, 4
          %v2780 = vadd.f32 %v2778, %v2779
          %v2781 = vrot.slane %v2780, 2
          %v2782 = vadd.f32 %v2780, %v2781
          %v2783 = vrot.slane %v2782, 1
          %v2784 = vadd.f32 %v2782, %v2783
          %v2785 = vsel %vm999, %v2741, 0.0
          %v2786 = vsel %vm999, %v2742, 0.0
          %v2787 = vadd.f32 %v2785, %v2786
          %v2788 = vrot.slane %v2787, 4
          %v2789 = vadd.f32 %v2787, %v2788
          %v2790 = vrot.slane %v2789, 2
          %v2791 = vadd.f32 %v2789, %v2790
          %v2792 = vrot.slane %v2791, 1
          %v2793 = vadd.f32 %v2791, %v2792
          %v2794 = vsel %vm999, %v2743, 0.0
          %v2795 = vsel %vm999, %v2744, 0.0
          %v2796 = vadd.f32 %v2794, %v2795
          %v2797 = vrot.slane %v2796, 4
          %v2798 = vadd.f32 %v2796, %v2797
          %v2799 = vrot.slane %v2798, 2
          %v2800 = vadd.f32 %v2798, %v2799
          %v2801 = vrot.slane %v2800, 1
          %v2802 = vadd.f32 %v2800, %v2801
          %v2803 = vsel %vm999, %v2745, 0.0
          %v2804 = vsel %vm999, %v2746, 0.0
          %v2805 = vadd.f32 %v2803, %v2804
          %v2806 = vrot.slane %v2805, 4
          %v2807 = vadd.f32 %v2805, %v2806
          %v2808 = vrot.slane %v2807, 2
          %v2809 = vadd.f32 %v2807, %v2808
          %v2810 = vrot.slane %v2809, 1
          %v2811 = vadd.f32 %v2809, %v2810
          %v2812 = vsel %vm999, %v2747, 0.0
          %v2813 = vsel %vm999, %v2748, 0.0
          %v2814 = vadd.f32 %v2812, %v2813
          %v2815 = vrot.slane %v2814, 4
          %v2816 = vadd.f32 %v2814, %v2815
          %v2817 = vrot.slane %v2816, 2
          %v2818 = vadd.f32 %v2816, %v2817
          %v2819 = vrot.slane %v2818, 1
          %v2820 = vadd.f32 %v2818, %v2819
          %vm2829 = vcmask 1041409
          %v2830 = vsel %vm2829, %v2766, %v2757
          %vm2831 = vcmask 1042434
          %v2832 = vsel %vm2831, %v2775, %v2830
          %vm2833 = vcmask 1043459
          %v2834 = vsel %vm2833, %v2784, %v2832
          %vm2835 = vcmask 1044484
          %v2836 = vsel %vm2835, %v2793, %v2834
          %vm2837 = vcmask 1045509
          %v2838 = vsel %vm2837, %v2802, %v2836
          %vm2839 = vcmask 1046534
          %v2840 = vsel %vm2839, %v2811, %v2838
          %vm2841 = vcmask 1047559
          %v2842 = vsel %vm2841, %v2820, %v2840
          %s2844 = scalar_lea.vmem [#allocation10], %s2232
          %2845 = vst.msk [vmem:[%s2844] sm:$0xff] %vm999, %v2842
        $region124: #{aim_forward.2} parent=63 // loop_footer
          %s2228 = sadd.s32 1, %s2224
        $region125: #{aim_forward.2} parent=63 // loop_footer_branch
          %2223 = sbr.rel target = $region121
        $region126: #{aim_forward.2} parent=63 // loop_exit
          _
        %v2846 = vld [vmem:[#allocation10] sm:$0xff]
        %v2847 = vld [vmem:[#allocation10 + $0x8] sm:$0xff]
        %v2848 = vld [vmem:[#allocation10 + $0x10] sm:$0xff]
        %v2849 = vld [vmem:[#allocation10 + $0x18] sm:$0xff]
        %v2850 = vld [vmem:[#allocation10 + $0x20] sm:$0xff]
        %v2851 = vld [vmem:[#allocation10 + $0x28] sm:$0xff]
        %v2852 = vld [vmem:[#allocation5] sm:$0xff]
        %v2853 = vld [vmem:[#allocation5 + $0x8] sm:$0xff]
        %v2854 = vld [vmem:[#allocation5 + $0x10] sm:$0xff]
        %v2855 = vld [vmem:[#allocation5 + $0x18] sm:$0xff]
        %v2856 = vld [vmem:[#allocation5 + $0x20] sm:$0xff]
        %v2857 = vld [vmem:[#allocation5 + $0x28] sm:$0xff]
        %v2858 = vld [vmem:[%s682] sm:$0x1]
        %v2860 = vlaneseq
        %v2861 = vshrl.u32 %v2860, 7
        %v2862 = vsub.s32 0, %v2861
        %v2863 = vrot.slane %v2858, %v2862
        %v2865 = vmul.f32 %v2852, %v2863
        %v2866 = vmul.f32 %v2853, %v2863
        %v2867 = vmul.f32 %v2854, %v2863
        %v2868 = vmul.f32 %v2855, %v2863
        %v2869 = vmul.f32 %v2856, %v2863
        %v2870 = vmul.f32 %v2857, %v2863
        %v2871 = vadd.f32 %v2846, %v2865
        %v2872 = vadd.f32 %v2847, %v2866
        %v2873 = vadd.f32 %v2848, %v2867
        %v2874 = vadd.f32 %v2849, %v2868
        %v2875 = vadd.f32 %v2850, %v2869
        %v2876 = vadd.f32 %v2851, %v2870
        %v2877 = vld [vmem:[#allocation7] sm:$0xff]
        %v2878 = vld [vmem:[#allocation7 + $0x8] sm:$0xff]
        %v2879 = vld [vmem:[#allocation7 + $0x10] sm:$0xff]
        %v2880 = vunpack.c.l.bf16 %v2877
        %v2881 = vunpack.c.h.bf16 %v2877
        %v2882 = vunpack.c.l.bf16 %v2878
        %v2883 = vunpack.c.h.bf16 %v2878
        %v2884 = vunpack.c.l.bf16 %v2879
        %v2885 = vunpack.c.h.bf16 %v2879
        %v2886 = vsub.f32 0.0, %v2880
        %v2887 = vsub.f32 0.0, %v2881
        %v2888 = vsub.f32 0.0, %v2882
        %v2889 = vsub.f32 0.0, %v2883
        %v2890 = vsub.f32 0.0, %v2884
        %v2891 = vsub.f32 0.0, %v2885
        %v2892 = vmul.f32 %v2886, 1.442695
        %v2893 = vpow.pop %v2892
        %v2894 = vmul.f32 %v2887, 1.442695
        %v2895 = vpow.pop %v2894
        %v2896 = vmul.f32 %v2888, 1.442695
        %v2897 = vpow.pop %v2896
        %v2898 = vmul.f32 %v2889, 1.442695
        %v2899 = vpow.pop %v2898
        %v2900 = vmul.f32 %v2890, 1.442695
        %v2901 = vpow.pop %v2900
        %v2902 = vmul.f32 %v2891, 1.442695
        %v2903 = vpow.pop %v2902
        %v2904 = vadd.f32 %v2893, 1.0
        %v2905 = vadd.f32 %v2895, 1.0
        %v2906 = vadd.f32 %v2897, 1.0
        %v2907 = vadd.f32 %v2899, 1.0
        %v2908 = vadd.f32 %v2901, 1.0
        %v2909 = vadd.f32 %v2903, 1.0
        %v2910 = vrcp.pop %v2904
        %v2911 = vrcp.pop %v2905
        %v2912 = vrcp.pop %v2906
        %v2913 = vrcp.pop %v2907
        %v2914 = vrcp.pop %v2908
        %v2915 = vrcp.pop %v2909
        %v2916 = vmul.f32 %v2880, %v2910
        %v2917 = vmul.f32 %v2881, %v2911
        %v2918 = vmul.f32 %v2882, %v2912
        %v2919 = vmul.f32 %v2883, %v2913
        %v2920 = vmul.f32 %v2884, %v2914
        %v2921 = vmul.f32 %v2885, %v2915
        %v2922 = vmul.f32 %v2871, %v2916
        %v2923 = vmul.f32 %v2872, %v2917
        %v2924 = vmul.f32 %v2873, %v2918
        %v2925 = vmul.f32 %v2874, %v2919
        %v2926 = vmul.f32 %v2875, %v2920
        %v2927 = vmul.f32 %v2876, %v2921
        %v2928 = vpack.c.bf16 %v2923, %v2922
        %v2929 = vpack.c.bf16 %v2925, %v2924
        %v2930 = vpack.c.bf16 %v2927, %v2926
        %v2931 = vld [vmem:[%s691] sm:$0xf]
        %v2932 = vld [vmem:[%s691 + $0x4] sm:$0xf]
        %v2933 = vld [vmem:[%s691 + $0x8] sm:$0xf]
        %v2934 = vld [vmem:[%s691 + $0xc] sm:$0xf]
        %v2935 = vld [vmem:[%s691 + $0x10] sm:$0xf]
        %v2936 = vld [vmem:[%s691 + $0x14] sm:$0xf]
        %v2937 = vld [vmem:[%s691 + $0x18] sm:$0xf]
        %v2938 = vld [vmem:[%s691 + $0x1c] sm:$0xf]
        %v2947 = vunpack.c.l.b16 %v2931
        %v2948 = vunpack.c.l.b16 %v2932
        %v2949 = vunpack.c.l.b16 %v2933
        %v2950 = vunpack.c.l.b16 %v2934
        %v2951 = vunpack.c.l.b16 %v2935
        %v2952 = vunpack.c.l.b16 %v2936
        %v2953 = vunpack.c.l.b16 %v2937
        %v2954 = vunpack.c.l.b16 %v2938
        %v2955 = vpack.c.b16 %v2948, %v2947
        %v2956 = vpack.c.b16 %v2950, %v2949
        %v2957 = vpack.c.b16 %v2952, %v2951
        %v2958 = vpack.c.b16 %v2954, %v2953
        %v2964 = vsel %vm999, %v2928, 0
        %v2967 = vsel %vm999, %v2929, 0
        %v2970 = vsel %vm999, %v2930, 0
        %2972 = vmatprep.subr.bf16.mxu0 0
        %2973 = vmatpush1.bf16.msra.mxu0 %v2955
        %2974 = vmatprep.subr.bf16.mxu0 0
        %2975 = vmatpush1.bf16.msra.mxu0 %v2956
        %2976 = vmatprep.subr.bf16.mxu0 0
        %2977 = vmatpush1.bf16.msra.mxu0 %v2957
        %2978 = vmatprep.subr.bf16.mxu0 0
        %2979 = vmatpush1.bf16.msra.mxu0 %v2958
        %2980 = vmatprep.subr.bf16.mxu0 0
        %2981 = vmatpush1.bf16.msra.mxu0 0
        %2982 = vmatprep.subr.bf16.mxu0 0
        %2983 = vmatpush1.bf16.msra.mxu0 0
        %2984 = vmatprep.subr.bf16.mxu0 0
        %2985 = vmatpush1.bf16.msra.mxu0 0
        %2986 = vmatprep.subr.bf16.mxu0 0
        %2987 = vmatpush1.bf16.msra.mxu0 0
        %2988 = vmatprep.subr.bf16.mxu0 0
        %2989 = vmatpush1.bf16.msra.mxu0 0
        %2990 = vmatprep.subr.bf16.mxu0 0
        %2991 = vmatpush1.bf16.msra.mxu0 0
        %2992 = vmatprep.subr.bf16.mxu0 0
        %2993 = vmatpush1.bf16.msra.mxu0 0
        %2994 = vmatprep.subr.bf16.mxu0 0
        %2995 = vmatpush1.bf16.msra.mxu0 0
        %2996 = vmatprep.subr.bf16.mxu0 0
        %2997 = vmatpush1.bf16.msra.mxu0 0
        %2998 = vmatprep.subr.bf16.mxu0 0
        %2999 = vmatpush1.bf16.msra.mxu0 0
        %3000 = vmatprep.subr.bf16.mxu0 0
        %3001 = vmatpush1.bf16.msra.mxu0 0
        %3002 = vmatprep.subr.bf16.mxu0 0
        %3003 = vmatpush1.bf16.msra.mxu0 0
        %3004 = vmatprep.mubr.bf16.mxu0 0
        %3005 = vmatmul.mubr.bf16.gmra.mrb[0].mxu0 %v2964
        %v3006 = vpop.f32.mrb[0].mxu0
        %v3007 = vadd.f32 0.0, %v3006
        %v3008 = vpop.f32.mrb[0].mxu0
        %v3009 = vpop.f32.mrb[0].mxu0
        %v3010 = vadd.f32 0.0, %v3009
        %v3011 = vpop.f32.mrb[0].mxu0
        %3012 = vmatprep.mubr.bf16.mxu0 0
        %3013 = vmatmul.mubr.bf16.gmra.mrb[0].mxu0 %v2967
        %v3014 = vpop.f32.mrb[0].mxu0
        %v3015 = vadd.f32 0.0, %v3014
        %v3016 = vpop.f32.mrb[0].mxu0
        %v3017 = vpop.f32.mrb[0].mxu0
        %v3018 = vadd.f32 0.0, %v3017
        %v3019 = vpop.f32.mrb[0].mxu0
        %3020 = vmatprep.mubr.bf16.mxu0 0
        %3021 = vmatmul.mubr.bf16.gmra.mrb[0].mxu0 %v2970
        %v3022 = vpop.f32.mrb[0].mxu0
        %v3023 = vadd.f32 0.0, %v3022
        %v3024 = vpop.f32.mrb[0].mxu0
        %v3025 = vpop.f32.mrb[0].mxu0
        %v3026 = vadd.f32 0.0, %v3025
        %v3027 = vpop.f32.mrb[0].mxu0
        %3028 = vdwg.mxu0
        %3029 = vst.msk [vmem:[#allocation2] sm:$0xff] %vm830, %v3007
        %3030 = vst.msk [vmem:[#allocation2 + $0x8] sm:$0xff] %vm830, %v3010
        %3031 = vst.msk [vmem:[#allocation2 + $0x10] sm:$0xff] %vm830, %v3015
        %3032 = vst.msk [vmem:[#allocation2 + $0x18] sm:$0xff] %vm830, %v3018
        %3033 = vst.msk [vmem:[#allocation2 + $0x20] sm:$0xff] %vm830, %v3023
        %3034 = vst.msk [vmem:[#allocation2 + $0x28] sm:$0xff] %vm830, %v3026
        %p3035 = scmp.eq.s32.totalorder %s48, 1
        // Predicated region
        $region127: #{aim_forward.2} parent=63 // pred_check
          %p3036 = pneg %p3035
        $region128: #{aim_forward.2} parent=63 // pred_check_branch
          %3038 = sbr.rel (%p3036) target = $region130
        $region129: #{aim_forward.2} parent=63 // pred_region
          %v3039 = vld [vmem:[#allocation2] sm:$0xff]
          %v3040 = vld [vmem:[#allocation2 + $0x8] sm:$0xff]
          %v3041 = vld [vmem:[#allocation2 + $0x10] sm:$0xff]
          %v3042 = vld [vmem:[#allocation2 + $0x18] sm:$0xff]
          %v3043 = vld [vmem:[#allocation2 + $0x20] sm:$0xff]
          %v3044 = vld [vmem:[#allocation2 + $0x28] sm:$0xff]
          %v3045 = vld [vmem:[#allocation3] sm:$0xff]
          %v3046 = vld [vmem:[#allocation3 + $0x8] sm:$0xff]
          %v3047 = vld [vmem:[#allocation3 + $0x10] sm:$0xff]
          %v3048 = vld [vmem:[#allocation3 + $0x18] sm:$0xff]
          %v3049 = vld [vmem:[#allocation3 + $0x20] sm:$0xff]
          %v3050 = vld [vmem:[#allocation3 + $0x28] sm:$0xff]
          %v3051 = vadd.f32 %v3039, %v3045
          %v3052 = vadd.f32 %v3040, %v3046
          %v3053 = vadd.f32 %v3041, %v3047
          %v3054 = vadd.f32 %v3042, %v3048
          %v3055 = vadd.f32 %v3043, %v3049
          %v3056 = vadd.f32 %v3044, %v3050
          %v3057 = vpack.c.bf16 %v3052, %v3051
          %v3058 = vpack.c.bf16 %v3053, %v3053
          %v3059 = vpack.c.bf16 %v3055, %v3054
          %v3060 = vpack.c.bf16 %v3056, %v3056
          %v3065 = vunpack.c.l.b16 %v3057
          %v3066 = vunpack.c.h.b16 %v3057
          %v3067 = vunpack.c.l.b16 %v3058
          %v3068 = vunpack.c.l.b16 %v3059
          %v3069 = vunpack.c.h.b16 %v3059
          %v3070 = vunpack.c.l.b16 %v3060
          %v3071 = vpack.c.b16 %v3065, %v3065
          %v3072 = vpack.c.b16 %v3066, %v3066
          %v3073 = vpack.c.b16 %v3067, %v3067
          %v3074 = vpack.c.b16 %v3068, %v3068
          %v3075 = vpack.c.b16 %v3069, %v3069
          %v3076 = vpack.c.b16 %v3070, %v3070
          %vm3083 = vcmask 257024
          %3084 = vst.msk [vmem:[%s775] sm:$0xf] %vm3083, %v3071
          %3085 = vst.msk [vmem:[%s775 + $0x4] sm:$0xf] %vm3083, %v3072
          %3086 = vst.msk [vmem:[%s775 + $0x8] sm:$0xf] %vm3083, %v3073
          %3087 = vst.msk [vmem:[%s775 + $0xc] sm:$0xf] %vm3083, %v3074
          %3088 = vst.msk [vmem:[%s775 + $0x10] sm:$0xf] %vm3083, %v3075
          %3089 = vst.msk [vmem:[%s775 + $0x14] sm:$0xf] %vm3083, %v3076
        $region130: #{aim_forward.2} parent=63 // pred_fallthru
          _
        %s3090 = sand.u32 %s349, 1
        %s3091 = scalar_lea.sflag [#allocation14], %s3090
        %s3092 = sand.u32 %s349, 1
        %s3093 = smul.addr %s3092, 24
        %s3094 = scalar_lea.vmem [#allocation30], %s3093
        // Predicated region
        $region131: #{aim_forward.2} parent=63 // pred_check
          %p3095 = pneg %p359
        $region132: #{aim_forward.2} parent=63 // pred_check_branch
          %3097 = sbr.rel (%p3095) target = $region134
        $region133: #{aim_forward.2} parent=63 // pred_region
          %s3098 = smul.u32 2, %s47
          %s3100 = ssub.s32 384, 384
          %3101 = vsyncadd %s3091, %s3100
          %s3102 = smul.addr %s3098, 3
          %s3103 = smul.addr %s3102, 64
          %s3104 = scalar_lea.hbm %s11, %s3103
          %s3105 = sshll.u32 %s3094, 4
          %s3106 = int_to_ptr.vmem [resolvable:$true] %s3105
          %3111 = dma.vmem_to_hbm [thread:$0]  %s3106, 384, %s3104, %s3091, 64, 64, 4
        $region134: #{aim_forward.2} parent=63 // pred_fallthru
          _
      $region64: #{aim_forward.2} parent=5 // pred_fallthru
        _
      %p3112 = scmp.le.s32.totalorder 2, %s38
      // Predicated region
      $region135: #{aim_forward.2} parent=5 // pred_check
        %p3113 = pneg %p3112
      $region136: #{aim_forward.2} parent=5 // pred_check_branch
        %3115 = sbr.rel (%p3113) target = $region138
      $region137: #{aim_forward.2} parent=5 // pred_region
        %s3116 = ssub.s32 %s38, 2
        // Predicated region
        $region139: #{aim_forward.2} parent=137 // pred_check
          %p3117 = pneg %p365
        $region140: #{aim_forward.2} parent=137 // pred_check_branch
          %3119 = sbr.rel (%p3117) target = $region142
        $region141: #{aim_forward.2} parent=137 // pred_region
          %s3120 = sand.u32 %s350, 1
          %s3121 = scalar_lea.sflag [#allocation14], %s3120
          %s3122 = sand.u32 %s350, 1
          %s3123 = smul.addr %s3122, 24
          %s3124 = scalar_lea.vmem [#allocation30], %s3123
          %3125 = dma.done %s3121, 384
        $region142: #{aim_forward.2} parent=137 // pred_fallthru
          _
      $region138: #{aim_forward.2} parent=5 // pred_fallthru
        _
    $region6: #{aim_forward.2} parent=1 // loop_footer
      %s42 = sadd.s32 1, %s38
    $region7: #{aim_forward.2} parent=1 // loop_footer_branch
      %37 = sbr.rel target = $region3
    $region8: #{aim_forward.2} parent=1 // loop_exit
      _
    %3126 = vsyncpa [#allocation13], 1
    %s3127 = scalar_lea.sflag [#allocation13], 1
    %3128 = vsyncpa %s3127, 1
    %3129 = vsyncpa [#allocation16], 1
    %s3130 = scalar_lea.sflag [#allocation16], 1
    %3131 = vsyncpa %s3130, 1
    %3132 = vsyncpa [#allocation19], 1
    %s3133 = scalar_lea.sflag [#allocation19], 1
    %3134 = vsyncpa %s3133, 1
    %3135 = vsyncpa [#allocation22], 1
    %s3136 = scalar_lea.sflag [#allocation22], 1
    %3137 = vsyncpa %s3136, 1
    %3138 = vsyncpa [#allocation25], 1
    %s3139 = scalar_lea.sflag [#allocation25], 1
    %3140 = vsyncpa %s3139, 1
    %3141 = vsyncpa [#allocation28], 1
    %s3142 = scalar_lea.sflag [#allocation28], 1
    %3143 = vsyncpa %s3142, 1
    %3144 = vsyncpa [#allocation14], 1
    %s3145 = scalar_lea.sflag [#allocation14], 1
    %3146 = vsyncpa %s3145, 1

</llo_original>
